<compile_context>
chip_gen: v7x
topology: tpu7x:2x2x1
jax: 0.10.0
libtpu: 0.0.40
codegen_flags: <defaults>
</compile_context>

<pallas_src>
import numpy as np
import jax
import jax.numpy as jnp
from jax import lax
from jax.experimental import pallas as pl
from jax.experimental.pallas import tpu as pltpu

TILE_M = 256      # boards (rows) per grid step
K_PAD = 384       # 320 -> 384 = 3 * 128 (lane-dense conv operator width)
H_PAD = 128       # fc1 width 32 -> 128 (lane-dense)


# ---------------------------------------------------------------------------
# Kernel: 3 chained MXU matmuls + VPU row-reduce, applied to a tile of boards
# ---------------------------------------------------------------------------
def net2_kernel(x_ref, a1_ref, b1_ref, a2_ref, b2_ref,
                fc1w_ref, fc1b_ref, fc2w_ref, fc2b_ref, out_ref):
    wdt = a1_ref.dtype
    x = x_ref[...].astype(wdt)                                         # (tm, 384)

    # conv1 (5->5, 3x3, pad=1) folded to a dense operator, + bias, relu
    h1 = jnp.dot(x, a1_ref[...], preferred_element_type=jnp.float32) + b1_ref[...]
    h1 = jnp.maximum(h1, 0.0)                                          # (tm, 384)

    # conv2 (5->2, 3x3, pad=1) folded, + bias, relu  -> per-row view(-1)
    h2 = jnp.dot(h1.astype(wdt), a2_ref[...],
                 preferred_element_type=jnp.float32) + b2_ref[...]
    h2 = jnp.maximum(h2, 0.0)                                          # (tm, 128)

    # fc1: 128 -> 32 (padded to 128), relu
    y1 = jnp.dot(h2.astype(wdt), fc1w_ref[...],
                 preferred_element_type=jnp.float32) + fc1b_ref[...]
    y1 = jnp.maximum(y1, 0.0)                                          # (tm, 128)

    # fc2: width-1 output -> VPU multiply + lane reduce (skip the MXU)
    y2 = jnp.sum(y1 * fc2w_ref[...].astype(jnp.float32),
                 axis=-1, keepdims=True) + fc2b_ref[...]               # (tm, 1)

    # overflow-free sigmoid
    z = jnp.exp(-jnp.abs(y2))
    out_ref[...] = jnp.where(y2 >= 0.0, 1.0 / (1.0 + z), z / (1.0 + z))


# ---------------------------------------------------------------------------
# One-time host-side folding of conv weights into dense, lane-padded operators
# ---------------------------------------------------------------------------
def make_shift_mats():
    """S[k, out_p, in_p] = 1 if input position in_p feeds output position out_p
    under 3x3 tap k (k = di*3 + dj) of a padding=1 conv on an 8x8 board."""
    s = np.zeros((9, 64, 64), np.float32)
    for di in range(3):
        for dj in range(3):
            k = di * 3 + dj
            for i in range(8):
                for j in range(8):
                    ii, jj = i + di - 1, j + dj - 1
                    if 0 <= ii < 8 and 0 <= jj < 8:
                        s[k, i * 8 + j, ii * 8 + jj] = 1.0
    return s


def fold_params(params, weight_dtype=jnp.float32):
    """Run ONCE.  Folds conv1/conv2 into dense operators, zero-pads everything
    to lane-dense (multiple-of-128) widths and pre-arranges FC weights.
    Biases stay f32 (dots accumulate in f32); weights optionally bf16."""
    w1, b1, w2, b2, fw1, fb1, fw2, fb2 = params
    S = jnp.asarray(make_shift_mats())                     # (9, 64out, 64in)

    w1r = w1.reshape(5, 5, 9)                              # (O, I, k), k = di*3+dj
    w2r = w2.reshape(2, 5, 9)
    # A[i*64 + q, o*64 + p] = sum_k w[o, i, k] * S[k, p, q]
    A1 = jnp.einsum('oik,kpq->iqop', w1r, S).reshape(5 * 64, 5 * 64)   # (320, 320)
    A2 = jnp.einsum('oik,kpq->iqop', w2r, S).reshape(5 * 64, 2 * 64)   # (320, 128)

    # Zero-pad to lane-dense shapes (numerically exact).
    A1p = jnp.zeros((K_PAD, K_PAD), jnp.float32).at[:320, :320].set(A1)
    A2p = jnp.zeros((K_PAD, 128), jnp.float32).at[:320, :].set(A2)
    b1p = jnp.zeros((1, K_PAD), jnp.float32).at[0, :320].set(jnp.repeat(b1, 64))
    b2p = jnp.repeat(b2, 64).reshape(1, 128)

    fc1wp = jnp.zeros((128, H_PAD), jnp.float32).at[:, :32].set(jnp.transpose(fw1))
    fc1bp = jnp.zeros((1, H_PAD), jnp.float32).at[0, :32].set(fb1)
    fc2wp = jnp.zeros((1, H_PAD), jnp.float32).at[0, :32].set(fw2.reshape(32))
    fc2bp = fb2.reshape(1, 1).astype(jnp.float32)

    wdt = weight_dtype
    return (A1p.astype(wdt), b1p, A2p.astype(wdt), b2p,
            fc1wp.astype(wdt), fc1bp, fc2wp.astype(wdt), fc2bp)


# ---------------------------------------------------------------------------
# Forward wrappers
# ---------------------------------------------------------------------------
def _round_up(n, m):
    return (n + m - 1) // m * m


@jax.jit
def net2_forward_batched(x, folded):
    """x: (N, 5, 8, 8) NCHW f32 -> (N,) sigmoid outputs (Net2.forward per board)."""
    n = x.shape[0]
    tile_m = min(TILE_M, _round_up(n, 8))
    n_pad = _round_up(n, tile_m)
    x_flat = x.reshape(n, 5 * 64).astype(jnp.float32)       # (c, h, w) order per board
    x_pad = jnp.pad(x_flat, ((0, n_pad - n), (0, K_PAD - 320)))

    def wspec(shape):  # weights/biases: constant index_map -> DMA'd once, VMEM-resident
        return pl.BlockSpec(shape, lambda i: (0, 0))

    out = pl.pallas_call(
        net2_kernel,
        out_shape=jax.ShapeDtypeStruct((n_pad, 1), jnp.float32),
        grid=(pl.cdiv(n_pad, tile_m),),
        in_specs=[
            pl.BlockSpec((tile_m, K_PAD), lambda i: (i, 0)),   # activations stream per step
            wspec((K_PAD, K_PAD)),                             # A1 (folded conv1)
            wspec((1, K_PAD)),                                 # b1
            wspec((K_PAD, 128)),                               # A2 (folded conv2)
            wspec((1, 128)),                                   # b2
            wspec((128, H_PAD)),                               # fc1 weight (in, out-padded)
            wspec((1, H_PAD)),                                 # fc1 bias
            wspec((1, H_PAD)),                                 # fc2 weight row
            wspec((1, 1)),                                     # fc2 bias
        ],
        out_specs=pl.BlockSpec((tile_m, 1), lambda i: (i, 0)),
        compiler_params=pltpu.CompilerParams(
            dimension_semantics=("parallel",)),
    )(x_pad, *folded)
    return out[:n, 0]


def net2_forward(x, folded):
    """x: (1, 5, 8, 8) -> (1,); matches Net2.forward (view(-1) implies batch 1)."""
    return net2_forward_batched(x, folded)


# ---------------------------------------------------------------------------
# Params + pure-JAX reference (identical math to the PyTorch forward, per board)
# ---------------------------------------------------------------------------
def init_params(key):
    ks = jax.random.split(key, 8)

    def u(k, shape, fan_in):
        b = 1.0 / np.sqrt(fan_in)
        return jax.random.uniform(k, shape, jnp.float32, -b, b)

    w1 = u(ks[0], (5, 5, 3, 3), 5 * 9)     # conv1 weight (O, I, kH, kW)
    b1 = u(ks[1], (5,), 5 * 9)
    w2 = u(ks[2], (2, 5, 3, 3), 5 * 9)     # conv2 weight
    b2 = u(ks[3], (2,), 5 * 9)
    fw1 = u(ks[4], (32, 128), 128)         # fc1 weight (out, in)
    fb1 = u(ks[5], (32,), 128)
    fw2 = u(ks[6], (1, 32), 32)            # fc2 weight
    fb2 = u(ks[7], (1,), 32)
    return (w1, b1, w2, b2, fw1, fb1, fw2, fb2)


def net2_reference_batched(x, params):
    """Per-board Net2.forward (convs + view(-1) + fc1 + fc2 + sigmoid), stacked."""
    w1, b1, w2, b2, fw1, fb1, fw2, fb2 = params
    dn = ('NCHW', 'OIHW', 'NCHW')
    o = lax.conv_general_dilated(x, w1, (1, 1), 'SAME', dimension_numbers=dn)
    o = jax.nn.relu(o + b1[None, :, None, None])
    o = lax.conv_general_dilated(o, w2, (1, 1), 'SAME', dimension_numbers=dn)
    o = jax.nn.relu(o + b2[None, :, None, None])
    f = o.reshape(o.shape[0], -1)                    # per-board view(-1), (N, 128)
    h = jax.nn.relu(f @ jnp.transpose(fw1) + fb1)
    return jax.nn.sigmoid(h @ jnp.transpose(fw2) + fb2).reshape(-1)


if __name__ == "__main__":
    key = jax.random.PRNGKey(0)
    pkey, xkey = jax.random.split(key)
    params = init_params(pkey)
    folded = fold_params(params)            # one-time host fold, f32 (exact path)

    # Batched throughput path: N=384 boards -> padded to 512 rows, grid of 2 tiles.
    N = 384
    xb = jax.random.normal(xkey, (N, 5, 8, 8), jnp.float32)
    yb = jax.block_until_ready(net2_forward_batched(xb, folded))
    yb_ref = jax.block_until_ready(net2_reference_batched(xb, params))
    np.testing.assert_allclose(np.asarray(yb), np.asarray(yb_ref), rtol=1e-5, atol=1e-5)
    assert yb.shape == (N,)

    # Batch-1 path (exactly the module's (1,5,8,8) -> (1,) forward semantics).
    y1 = jax.block_until_ready(net2_forward(xb[:1], folded))
    np.testing.assert_allclose(np.asarray(y1), np.asarray(yb_ref[:1]), rtol=1e-5, atol=1e-5)
    assert y1.shape == (1,)

    print("KERNEL_OK")
</pallas_src>

<mosaic_0001>
module attributes {stable_mosaic.version = 11 : i64} {
  func.func @net2_kernel(%arg0: i32, %arg1: memref<256x384xf32, #tpu.memory_space<vmem>>, %arg2: memref<384x384xf32, #tpu.memory_space<vmem>>, %arg3: memref<1x384xf32, #tpu.memory_space<vmem>>, %arg4: memref<384x128xf32, #tpu.memory_space<vmem>>, %arg5: memref<1x128xf32, #tpu.memory_space<vmem>>, %arg6: memref<128x128xf32, #tpu.memory_space<vmem>>, %arg7: memref<1x128xf32, #tpu.memory_space<vmem>>, %arg8: memref<1x128xf32, #tpu.memory_space<vmem>>, %arg9: memref<1x1xf32, #tpu.memory_space<vmem>>, %arg10: memref<256x1xf32, #tpu.memory_space<vmem>>) attributes {dimension_semantics = [#tpu.dimension_semantics<parallel>], iteration_bounds = array<i64: 2>, scalar_prefetch = 0 : i64, scratch_operands = 0 : i64, tpu.core_type = #tpu.core_type<tc>, window_params = [{transform_indices = @transform_0, window_bounds = array<i64: 256, 384>}, {pipeline_mode = #tpu.pipeline_mode<synchronous>, transform_indices = @transform_1, window_bounds = array<i64: 384, 384>}, {pipeline_mode = #tpu.pipeline_mode<synchronous>, transform_indices = @transform_2, window_bounds = array<i64: 1, 384>}, {pipeline_mode = #tpu.pipeline_mode<synchronous>, transform_indices = @transform_3, window_bounds = array<i64: 384, 128>}, {pipeline_mode = #tpu.pipeline_mode<synchronous>, transform_indices = @transform_4, window_bounds = array<i64: 1, 128>}, {pipeline_mode = #tpu.pipeline_mode<synchronous>, transform_indices = @transform_5, window_bounds = array<i64: 128, 128>}, {pipeline_mode = #tpu.pipeline_mode<synchronous>, transform_indices = @transform_6, window_bounds = array<i64: 1, 128>}, {pipeline_mode = #tpu.pipeline_mode<synchronous>, transform_indices = @transform_7, window_bounds = array<i64: 1, 128>}, {pipeline_mode = #tpu.pipeline_mode<synchronous>, transform_indices = @transform_8, window_bounds = array<i64: 1, 1>}, {transform_indices = @transform_9, window_bounds = array<i64: 256, 1>}]} {
    %c0 = arith.constant 0 : index
    %c0_0 = arith.constant 0 : index
    %0 = vector.load %arg1[%c0, %c0_0] : memref<256x384xf32, #tpu.memory_space<vmem>>, vector<256x384xf32>
    %c0_1 = arith.constant 0 : index
    %c0_2 = arith.constant 0 : index
    %1 = vector.load %arg2[%c0_1, %c0_2] : memref<384x384xf32, #tpu.memory_space<vmem>>, vector<384x384xf32>
    %cst = arith.constant dense<0.000000e+00> : vector<256x384xf32>
    %2 = tpu.matmul %0, %1, %cst {dimension_numbers = #tpu.dot_dimension_numbers<[1], [0], [0], [1], [0, 0, 1, 1], [], []>} : vector<256x384xf32>, vector<384x384xf32>, vector<256x384xf32> -> vector<256x384xf32>
    %c0_3 = arith.constant 0 : index
    %c0_4 = arith.constant 0 : index
    %3 = vector.load %arg3[%c0_3, %c0_4] : memref<1x384xf32, #tpu.memory_space<vmem>>, vector<1x384xf32>
    %4 = vector.broadcast %3 : vector<1x384xf32> to vector<256x384xf32>
    %5 = arith.addf %2, %4 : vector<256x384xf32>
    %cst_5 = arith.constant 0.000000e+00 : f32
    %6 = vector.broadcast %cst_5 : f32 to vector<256x384xf32>
    %7 = arith.maximumf %5, %6 : vector<256x384xf32>
    %c0_6 = arith.constant 0 : index
    %c0_7 = arith.constant 0 : index
    %8 = vector.load %arg4[%c0_6, %c0_7] : memref<384x128xf32, #tpu.memory_space<vmem>>, vector<384x128xf32>
    %cst_8 = arith.constant dense<0.000000e+00> : vector<256x128xf32>
    %9 = tpu.matmul %7, %8, %cst_8 {dimension_numbers = #tpu.dot_dimension_numbers<[1], [0], [0], [1], [0, 0, 1, 1], [], []>} : vector<256x384xf32>, vector<384x128xf32>, vector<256x128xf32> -> vector<256x128xf32>
    %c0_9 = arith.constant 0 : index
    %c0_10 = arith.constant 0 : index
    %10 = vector.load %arg5[%c0_9, %c0_10] : memref<1x128xf32, #tpu.memory_space<vmem>>, vector<1x128xf32>
    %11 = vector.broadcast %10 : vector<1x128xf32> to vector<256x128xf32>
    %12 = arith.addf %9, %11 : vector<256x128xf32>
    %cst_11 = arith.constant 0.000000e+00 : f32
    %13 = vector.broadcast %cst_11 : f32 to vector<256x128xf32>
    %14 = arith.maximumf %12, %13 : vector<256x128xf32>
    %c0_12 = arith.constant 0 : index
    %c0_13 = arith.constant 0 : index
    %15 = vector.load %arg6[%c0_12, %c0_13] : memref<128x128xf32, #tpu.memory_space<vmem>>, vector<128x128xf32>
    %cst_14 = arith.constant dense<0.000000e+00> : vector<256x128xf32>
    %16 = tpu.matmul %14, %15, %cst_14 {dimension_numbers = #tpu.dot_dimension_numbers<[1], [0], [0], [1], [0, 0, 1, 1], [], []>} : vector<256x128xf32>, vector<128x128xf32>, vector<256x128xf32> -> vector<256x128xf32>
    %c0_15 = arith.constant 0 : index
    %c0_16 = arith.constant 0 : index
    %17 = vector.load %arg7[%c0_15, %c0_16] : memref<1x128xf32, #tpu.memory_space<vmem>>, vector<1x128xf32>
    %18 = vector.broadcast %17 : vector<1x128xf32> to vector<256x128xf32>
    %19 = arith.addf %16, %18 : vector<256x128xf32>
    %cst_17 = arith.constant 0.000000e+00 : f32
    %20 = vector.broadcast %cst_17 : f32 to vector<256x128xf32>
    %21 = arith.maximumf %19, %20 : vector<256x128xf32>
    %c0_18 = arith.constant 0 : index
    %c0_19 = arith.constant 0 : index
    %22 = vector.load %arg8[%c0_18, %c0_19] : memref<1x128xf32, #tpu.memory_space<vmem>>, vector<1x128xf32>
    %23 = vector.broadcast %22 : vector<1x128xf32> to vector<256x128xf32>
    %24 = arith.mulf %21, %23 : vector<256x128xf32>
    %cst_20 = arith.constant dense<0.000000e+00> : vector<256xf32>
    %25 = vector.multi_reduction <add>, %24, %cst_20 [1] : vector<256x128xf32> to vector<256xf32>
    %26 = vector.shape_cast %25 : vector<256xf32> to vector<256x1xf32>
    %c0_21 = arith.constant 0 : index
    %c0_22 = arith.constant 0 : index
    %27 = vector.load %arg9[%c0_21, %c0_22] : memref<1x1xf32, #tpu.memory_space<vmem>>, vector<1x1xf32>
    %28 = vector.broadcast %27 : vector<1x1xf32> to vector<256x1xf32>
    %29 = arith.addf %26, %28 : vector<256x1xf32>
    %30 = math.absf %29 : vector<256x1xf32>
    %cst_23 = arith.constant 0.000000e+00 : f32
    %31 = vector.broadcast %cst_23 : f32 to vector<256x1xf32>
    %32 = arith.subf %31, %30 : vector<256x1xf32>
    %33 = math.exp %32 : vector<256x1xf32>
    %cst_24 = arith.constant 0.000000e+00 : f32
    %34 = vector.broadcast %cst_24 : f32 to vector<256x1xf32>
    %35 = arith.cmpf oge, %29, %34 : vector<256x1xf32>
    %cst_25 = arith.constant 1.000000e+00 : f32
    %36 = vector.broadcast %cst_25 : f32 to vector<256x1xf32>
    %37 = arith.addf %36, %33 : vector<256x1xf32>
    %cst_26 = arith.constant 1.000000e+00 : f32
    %38 = vector.broadcast %cst_26 : f32 to vector<256x1xf32>
    %39 = arith.divf %38, %37 : vector<256x1xf32>
    %cst_27 = arith.constant 1.000000e+00 : f32
    %40 = vector.broadcast %cst_27 : f32 to vector<256x1xf32>
    %41 = arith.addf %40, %33 : vector<256x1xf32>
    %42 = arith.divf %33, %41 : vector<256x1xf32>
    %43 = arith.select %35, %39, %42 : vector<256x1xi1>, vector<256x1xf32>
    %c0_28 = arith.constant 0 : index
    %c0_29 = arith.constant 0 : index
    %44 = vector.load %arg10[%c0_28, %c0_29] : memref<256x1xf32, #tpu.memory_space<vmem>>, vector<256x1xf32>
    tpu.vector_store %arg10[%c0_28, %c0_29], %43 {strides = array<i32>} : memref<256x1xf32, #tpu.memory_space<vmem>>, vector<256x1xf32>,
    return
  }
  func.func @transform_0(%arg0: i32) -> (i32, i32) {
    %c0_i32 = arith.constant 0 : i32
    %c0_i32_0 = arith.constant 0 : i32
    return %arg0, %c0_i32 : i32, i32
  }
  func.func @transform_1(%arg0: i32) -> (i32, i32) {
    %c0_i32 = arith.constant 0 : i32
    %c0_i32_0 = arith.constant 0 : i32
    %c0_i32_1 = arith.constant 0 : i32
    return %c0_i32, %c0_i32_0 : i32, i32
  }
  func.func @transform_2(%arg0: i32) -> (i32, i32) {
    %c0_i32 = arith.constant 0 : i32
    %c0_i32_0 = arith.constant 0 : i32
    %c0_i32_1 = arith.constant 0 : i32
    return %c0_i32, %c0_i32_0 : i32, i32
  }
  func.func @transform_3(%arg0: i32) -> (i32, i32) {
    %c0_i32 = arith.constant 0 : i32
    %c0_i32_0 = arith.constant 0 : i32
    %c0_i32_1 = arith.constant 0 : i32
    return %c0_i32, %c0_i32_0 : i32, i32
  }
  func.func @transform_4(%arg0: i32) -> (i32, i32) {
    %c0_i32 = arith.constant 0 : i32
    %c0_i32_0 = arith.constant 0 : i32
    %c0_i32_1 = arith.constant 0 : i32
    return %c0_i32, %c0_i32_0 : i32, i32
  }
  func.func @transform_5(%arg0: i32) -> (i32, i32) {
    %c0_i32 = arith.constant 0 : i32
    %c0_i32_0 = arith.constant 0 : i32
    %c0_i32_1 = arith.constant 0 : i32
    return %c0_i32, %c0_i32_0 : i32, i32
  }
  func.func @transform_6(%arg0: i32) -> (i32, i32) {
    %c0_i32 = arith.constant 0 : i32
    %c0_i32_0 = arith.constant 0 : i32
    %c0_i32_1 = arith.constant 0 : i32
    return %c0_i32, %c0_i32_0 : i32, i32
  }
  func.func @transform_7(%arg0: i32) -> (i32, i32) {
    %c0_i32 = arith.constant 0 : i32
    %c0_i32_0 = arith.constant 0 : i32
    %c0_i32_1 = arith.constant 0 : i32
    return %c0_i32, %c0_i32_0 : i32, i32
  }
  func.func @transform_8(%arg0: i32) -> (i32, i32) {
    %c0_i32 = arith.constant 0 : i32
    %c0_i32_0 = arith.constant 0 : i32
    %c0_i32_1 = arith.constant 0 : i32
    return %c0_i32, %c0_i32_0 : i32, i32
  }
  func.func @transform_9(%arg0: i32) -> (i32, i32) {
    %c0_i32 = arith.constant 0 : i32
    %c0_i32_0 = arith.constant 0 : i32
    return %arg0, %c0_i32 : i32, i32
  }
}

</mosaic_0001>

<llo_original>
// kernel: net2_forward_batched.1
$region0: #{net2_forward_batched.1}
  #allocation0 [shape = 'u32[]', space=smem, size = 0x4, offset = 0x4, fixed_abs, tag = 'smem constant byte address 0x4 - core index']
  #allocation1 [shape = 'u32[144,128]{1,0:T(1,128)}', space=vmem, size = 0x12000, scoped, tag = 'internal scratch']
  #allocation2 [shape = 'f32[1,1]{1,0:T(1,128)S(1)}', space=vmem, size = 0x200, scoped, tag = 'scoped memory for net2_forward_batched.1']
  %s0 = inlined_call_operand.vmem [shape: f32[512,384], index: 0, kind: input, shape index: {}]
  %s1 = inlined_call_operand.vmem [shape: f32[384,384], index: 1, kind: input, shape index: {}]
  %s2 = inlined_call_operand.vmem [shape: f32[1,384], index: 2, kind: input, shape index: {}]
  %s3 = inlined_call_operand.vmem [shape: f32[384,128], index: 3, kind: input, shape index: {}]
  %s4 = inlined_call_operand.vmem [shape: f32[1,128], index: 4, kind: input, shape index: {}]
  %s5 = inlined_call_operand.vmem [shape: f32[128,128], index: 5, kind: input, shape index: {}]
  %s6 = inlined_call_operand.vmem [shape: f32[1,128], index: 6, kind: input, shape index: {}]
  %s7 = inlined_call_operand.vmem [shape: f32[1,128], index: 7, kind: input, shape index: {}]
  %s8 = inlined_call_operand.<no memory space> [shape: f32[1,1], index: 8, kind: input, shape index: {}]
  %s9 = inlined_call_operand.vmem [shape: f32[512,1], index: 9, kind: output, shape index: {}]
  %s10 = sld [smem:[#allocation0]]
  $region69: #{net2_forward_batched.1} parent=0
    _
  %s12 = ssub.s32 1, %s10
  %s13 = scalar_select 0, %s12, %s10
  %v14 = vstv %s8
  %15 = vst [vmem:[#allocation2] sm:$0x1] %v14
  loop: start=0, step=1, limit=4
  $region2: #{net2_forward_batched.1} parent=0 // loop_pre_header
    _
  $region3: #{net2_forward_batched.1} parent=0 // loop_header
    %s17 = sphi 0, %s21
    %p18 = scmp.ge.s32.totalorder %s17, 4
    %s27 = sphi 0, %s29
    %s30 = sphi 0, %s27
    %s31 = sphi 0, %s30
    %s47 = sphi 0, %s31
    %s51 = sphi 0, %s51
    %s53 = sphi 0, %s51
    %s54 = sphi 0, %s53
    %s68 = sphi 0, %s54
    %s72 = sphi 0, %s72
    %s74 = sphi 0, %s72
    %s75 = sphi 0, %s74
    %s89 = sphi 0, %s75
    %s93 = sphi 0, %s93
    %s95 = sphi 0, %s93
    %s96 = sphi 0, %s95
    %s110 = sphi 0, %s96
    %s114 = sphi 0, %s114
    %s116 = sphi 0, %s114
    %s117 = sphi 0, %s116
    %s131 = sphi 0, %s117
    %s135 = sphi 0, %s135
    %s137 = sphi 0, %s135
    %s138 = sphi 0, %s137
    %s152 = sphi 0, %s138
    %s156 = sphi 0, %s156
    %s158 = sphi 0, %s156
    %s159 = sphi 0, %s158
    %s173 = sphi 0, %s159
    %s177 = sphi 0, %s177
    %s179 = sphi 0, %s177
    %s180 = sphi 0, %s179
    %s194 = sphi 0, %s180
    %s198 = sphi 0, %s198
    %s200 = sphi 0, %s198
    %s201 = sphi 0, %s200
    %s215 = sphi 0, %s201
    %s221 = sphi 0, %s223
    %s224 = sphi 0, %s221
    %s225 = sphi 0, %s224
    %s241 = sphi 0, %s225
  $region4: #{net2_forward_batched.1} parent=0 // loop_header_branch
    %20 = sbr.rel (%p18) target = $region8
  $region5: #{net2_forward_batched.1} parent=0 // loop_body
    %s22 = ssub.s32 %s17, 1
    %s23 = ssub.s32 %s17, 2
    %s24 = sadd.s32 %s17, 1
    %s25 = ssub.s32 %s17, %s24
    %p26 = scmp.eq.s32.totalorder %s25, 0
    %s28 = sadd.s32 %s27, 1
    %s29 = scalar_select %p26, %s27, %s28
    %p32 = pneg %p26
    %p33 = scmp.eq.s32.totalorder %s17, 1
    %p34 = por %p32, %p33
    %p35 = scmp.ne.s32.totalorder %s27, %s30
    %p36 = scmp.eq.s32.totalorder %s17, 0
    %p37 = por %p35, %p36
    %p38 = scmp.ne.s32.totalorder %s27, %s30
    %p39 = scmp.eq.s32.totalorder %s22, 1
    %p40 = por %p38, %p39
    %p41 = scmp.ne.s32.totalorder %s30, %s31
    %p42 = scmp.eq.s32.totalorder %s22, 0
    %p43 = por %p41, %p42
    %p44 = scmp.ne.s32.totalorder %s30, %s31
    %p45 = scmp.eq.s32.totalorder %s23, 1
    %p46 = por %p44, %p45
    %p48 = scmp.ne.s32.totalorder %s31, %s47
    %p49 = scmp.eq.s32.totalorder %s23, 0
    %p50 = por %p48, %p49
    %s52 = sadd.s32 %s51, 1
    %p55 = scmp.eq.s32.totalorder %s17, 1
    %p56 = scmp.ne.s32.totalorder %s51, %s53
    %p57 = scmp.eq.s32.totalorder %s17, 0
    %p58 = por %p56, %p57
    %p59 = scmp.ne.s32.totalorder %s51, %s53
    %p60 = scmp.eq.s32.totalorder %s22, 1
    %p61 = por %p59, %p60
    %p62 = scmp.ne.s32.totalorder %s53, %s54
    %p63 = scmp.eq.s32.totalorder %s22, 0
    %p64 = por %p62, %p63
    %p65 = scmp.ne.s32.totalorder %s53, %s54
    %p66 = scmp.eq.s32.totalorder %s23, 1
    %p67 = por %p65, %p66
    %p69 = scmp.ne.s32.totalorder %s54, %s68
    %p70 = scmp.eq.s32.totalorder %s23, 0
    %p71 = por %p69, %p70
    %s73 = sadd.s32 %s72, 1
    %p76 = scmp.eq.s32.totalorder %s17, 1
    %p77 = scmp.ne.s32.totalorder %s72, %s74
    %p78 = scmp.eq.s32.totalorder %s17, 0
    %p79 = por %p77, %p78
    %p80 = scmp.ne.s32.totalorder %s72, %s74
    %p81 = scmp.eq.s32.totalorder %s22, 1
    %p82 = por %p80, %p81
    %p83 = scmp.ne.s32.totalorder %s74, %s75
    %p84 = scmp.eq.s32.totalorder %s22, 0
    %p85 = por %p83, %p84
    %p86 = scmp.ne.s32.totalorder %s74, %s75
    %p87 = scmp.eq.s32.totalorder %s23, 1
    %p88 = por %p86, %p87
    %p90 = scmp.ne.s32.totalorder %s75, %s89
    %p91 = scmp.eq.s32.totalorder %s23, 0
    %p92 = por %p90, %p91
    %s94 = sadd.s32 %s93, 1
    %p97 = scmp.eq.s32.totalorder %s17, 1
    %p98 = scmp.ne.s32.totalorder %s93, %s95
    %p99 = scmp.eq.s32.totalorder %s17, 0
    %p100 = por %p98, %p99
    %p101 = scmp.ne.s32.totalorder %s93, %s95
    %p102 = scmp.eq.s32.totalorder %s22, 1
    %p103 = por %p101, %p102
    %p104 = scmp.ne.s32.totalorder %s95, %s96
    %p105 = scmp.eq.s32.totalorder %s22, 0
    %p106 = por %p104, %p105
    %p107 = scmp.ne.s32.totalorder %s95, %s96
    %p108 = scmp.eq.s32.totalorder %s23, 1
    %p109 = por %p107, %p108
    %p111 = scmp.ne.s32.totalorder %s96, %s110
    %p112 = scmp.eq.s32.totalorder %s23, 0
    %p113 = por %p111, %p112
    %s115 = sadd.s32 %s114, 1
    %p118 = scmp.eq.s32.totalorder %s17, 1
    %p119 = scmp.ne.s32.totalorder %s114, %s116
    %p120 = scmp.eq.s32.totalorder %s17, 0
    %p121 = por %p119, %p120
    %p122 = scmp.ne.s32.totalorder %s114, %s116
    %p123 = scmp.eq.s32.totalorder %s22, 1
    %p124 = por %p122, %p123
    %p125 = scmp.ne.s32.totalorder %s116, %s117
    %p126 = scmp.eq.s32.totalorder %s22, 0
    %p127 = por %p125, %p126
    %p128 = scmp.ne.s32.totalorder %s116, %s117
    %p129 = scmp.eq.s32.totalorder %s23, 1
    %p130 = por %p128, %p129
    %p132 = scmp.ne.s32.totalorder %s117, %s131
    %p133 = scmp.eq.s32.totalorder %s23, 0
    %p134 = por %p132, %p133
    %s136 = sadd.s32 %s135, 1
    %p139 = scmp.eq.s32.totalorder %s17, 1
    %p140 = scmp.ne.s32.totalorder %s135, %s137
    %p141 = scmp.eq.s32.totalorder %s17, 0
    %p142 = por %p140, %p141
    %p143 = scmp.ne.s32.totalorder %s135, %s137
    %p144 = scmp.eq.s32.totalorder %s22, 1
    %p145 = por %p143, %p144
    %p146 = scmp.ne.s32.totalorder %s137, %s138
    %p147 = scmp.eq.s32.totalorder %s22, 0
    %p148 = por %p146, %p147
    %p149 = scmp.ne.s32.totalorder %s137, %s138
    %p150 = scmp.eq.s32.totalorder %s23, 1
    %p151 = por %p149, %p150
    %p153 = scmp.ne.s32.totalorder %s138, %s152
    %p154 = scmp.eq.s32.totalorder %s23, 0
    %p155 = por %p153, %p154
    %s157 = sadd.s32 %s156, 1
    %p160 = scmp.eq.s32.totalorder %s17, 1
    %p161 = scmp.ne.s32.totalorder %s156, %s158
    %p162 = scmp.eq.s32.totalorder %s17, 0
    %p163 = por %p161, %p162
    %p164 = scmp.ne.s32.totalorder %s156, %s158
    %p165 = scmp.eq.s32.totalorder %s22, 1
    %p166 = por %p164, %p165
    %p167 = scmp.ne.s32.totalorder %s158, %s159
    %p168 = scmp.eq.s32.totalorder %s22, 0
    %p169 = por %p167, %p168
    %p170 = scmp.ne.s32.totalorder %s158, %s159
    %p171 = scmp.eq.s32.totalorder %s23, 1
    %p172 = por %p170, %p171
    %p174 = scmp.ne.s32.totalorder %s159, %s173
    %p175 = scmp.eq.s32.totalorder %s23, 0
    %p176 = por %p174, %p175
    %s178 = sadd.s32 %s177, 1
    %p181 = scmp.eq.s32.totalorder %s17, 1
    %p182 = scmp.ne.s32.totalorder %s177, %s179
    %p183 = scmp.eq.s32.totalorder %s17, 0
    %p184 = por %p182, %p183
    %p185 = scmp.ne.s32.totalorder %s177, %s179
    %p186 = scmp.eq.s32.totalorder %s22, 1
    %p187 = por %p185, %p186
    %p188 = scmp.ne.s32.totalorder %s179, %s180
    %p189 = scmp.eq.s32.totalorder %s22, 0
    %p190 = por %p188, %p189
    %p191 = scmp.ne.s32.totalorder %s179, %s180
    %p192 = scmp.eq.s32.totalorder %s23, 1
    %p193 = por %p191, %p192
    %p195 = scmp.ne.s32.totalorder %s180, %s194
    %p196 = scmp.eq.s32.totalorder %s23, 0
    %p197 = por %p195, %p196
    %s199 = sadd.s32 %s198, 1
    %p202 = scmp.eq.s32.totalorder %s17, 1
    %p203 = scmp.ne.s32.totalorder %s198, %s200
    %p204 = scmp.eq.s32.totalorder %s17, 0
    %p205 = por %p203, %p204
    %p206 = scmp.ne.s32.totalorder %s198, %s200
    %p207 = scmp.eq.s32.totalorder %s22, 1
    %p208 = por %p206, %p207
    %p209 = scmp.ne.s32.totalorder %s200, %s201
    %p210 = scmp.eq.s32.totalorder %s22, 0
    %p211 = por %p209, %p210
    %p212 = scmp.ne.s32.totalorder %s200, %s201
    %p213 = scmp.eq.s32.totalorder %s23, 1
    %p214 = por %p212, %p213
    %p216 = scmp.ne.s32.totalorder %s201, %s215
    %p217 = scmp.eq.s32.totalorder %s23, 0
    %p218 = por %p216, %p217
    %s219 = ssub.s32 %s17, %s24
    %p220 = scmp.eq.s32.totalorder %s219, 0
    %s222 = sadd.s32 %s221, 1
    %s223 = scalar_select %p220, %s221, %s222
    %p226 = pneg %p220
    %p227 = scmp.eq.s32.totalorder %s17, 1
    %p228 = por %p226, %p227
    %p229 = scmp.ne.s32.totalorder %s221, %s224
    %p230 = scmp.eq.s32.totalorder %s17, 0
    %p231 = por %p229, %p230
    %p232 = scmp.ne.s32.totalorder %s221, %s224
    %p233 = scmp.eq.s32.totalorder %s22, 1
    %p234 = por %p232, %p233
    %p235 = scmp.ne.s32.totalorder %s224, %s225
    %p236 = scmp.eq.s32.totalorder %s22, 0
    %p237 = por %p235, %p236
    %p238 = scmp.ne.s32.totalorder %s224, %s225
    %p239 = scmp.eq.s32.totalorder %s23, 1
    %p240 = por %p238, %p239
    %p242 = scmp.ne.s32.totalorder %s225, %s241
    %p243 = scmp.eq.s32.totalorder %s23, 0
    %p244 = por %p242, %p243
    %p245 = scmp.le.s32.totalorder 1, %s17
    %p246 = scmp.lt.s32.totalorder %s17, 3
    %p247 = pnand %p245, %p246
    %p248 = pneg %p247
    // Predicated region
    $region9: #{net2_forward_batched.1} parent=5 // pred_check
      _
    $region10: #{net2_forward_batched.1} parent=5 // pred_check_branch
      %250 = sbr.rel (%p247) target = $region12
    $region11: #{net2_forward_batched.1} parent=5 // pred_region
      %s251 = ssub.s32 %s17, 1
      // Predicated region
      $region13: #{net2_forward_batched.1} parent=11 // pred_check
        %p252 = pneg %p64
      $region14: #{net2_forward_batched.1} parent=11 // pred_check_branch
        %254 = sbr.rel (%p252) target = $region16
      $region15: #{net2_forward_batched.1} parent=11 // pred_region
        _
      $region16: #{net2_forward_batched.1} parent=11 // pred_fallthru
        _
      // Predicated region
      $region17: #{net2_forward_batched.1} parent=11 // pred_check
        %p255 = pneg %p85
      $region18: #{net2_forward_batched.1} parent=11 // pred_check_branch
        %257 = sbr.rel (%p255) target = $region20
      $region19: #{net2_forward_batched.1} parent=11 // pred_region
        _
      $region20: #{net2_forward_batched.1} parent=11 // pred_fallthru
        _
      // Predicated region
      $region21: #{net2_forward_batched.1} parent=11 // pred_check
        %p258 = pneg %p106
      $region22: #{net2_forward_batched.1} parent=11 // pred_check_branch
        %260 = sbr.rel (%p258) target = $region24
      $region23: #{net2_forward_batched.1} parent=11 // pred_region
        _
      $region24: #{net2_forward_batched.1} parent=11 // pred_fallthru
        _
      // Predicated region
      $region25: #{net2_forward_batched.1} parent=11 // pred_check
        %p261 = pneg %p127
      $region26: #{net2_forward_batched.1} parent=11 // pred_check_branch
        %263 = sbr.rel (%p261) target = $region28
      $region27: #{net2_forward_batched.1} parent=11 // pred_region
        _
      $region28: #{net2_forward_batched.1} parent=11 // pred_fallthru
        _
      // Predicated region
      $region29: #{net2_forward_batched.1} parent=11 // pred_check
        %p264 = pneg %p148
      $region30: #{net2_forward_batched.1} parent=11 // pred_check_branch
        %266 = sbr.rel (%p264) target = $region32
      $region31: #{net2_forward_batched.1} parent=11 // pred_region
        _
      $region32: #{net2_forward_batched.1} parent=11 // pred_fallthru
        _
      // Predicated region
      $region33: #{net2_forward_batched.1} parent=11 // pred_check
        %p267 = pneg %p169
      $region34: #{net2_forward_batched.1} parent=11 // pred_check_branch
        %269 = sbr.rel (%p267) target = $region36
      $region35: #{net2_forward_batched.1} parent=11 // pred_region
        _
      $region36: #{net2_forward_batched.1} parent=11 // pred_fallthru
        _
      // Predicated region
      $region37: #{net2_forward_batched.1} parent=11 // pred_check
        %p270 = pneg %p190
      $region38: #{net2_forward_batched.1} parent=11 // pred_check_branch
        %272 = sbr.rel (%p270) target = $region40
      $region39: #{net2_forward_batched.1} parent=11 // pred_region
        _
      $region40: #{net2_forward_batched.1} parent=11 // pred_fallthru
        _
      // Predicated region
      $region41: #{net2_forward_batched.1} parent=11 // pred_check
        %p273 = pneg %p211
      $region42: #{net2_forward_batched.1} parent=11 // pred_check_branch
        %275 = sbr.rel (%p273) target = $region44
      $region43: #{net2_forward_batched.1} parent=11 // pred_region
        _
      $region44: #{net2_forward_batched.1} parent=11 // pred_fallthru
        _
    $region12: #{net2_forward_batched.1} parent=5 // pred_fallthru
      _
    %p276 = scmp.lt.s32.totalorder %s17, 2
    // Predicated region
    $region45: #{net2_forward_batched.1} parent=5 // pred_check
      %p277 = pneg %p276
    $region46: #{net2_forward_batched.1} parent=5 // pred_check_branch
      %279 = sbr.rel (%p277) target = $region48
    $region47: #{net2_forward_batched.1} parent=5 // pred_region
      // Predicated region
      $region49: #{net2_forward_batched.1} parent=47 // pred_check
        %p280 = pneg %p37
      $region50: #{net2_forward_batched.1} parent=47 // pred_check_branch
        %282 = sbr.rel (%p280) target = $region52
      $region51: #{net2_forward_batched.1} parent=47 // pred_region
        %s283 = smul.u32 32, %s17
        %p284 = scmp.lt.s32.totalorder %s283, 63
        %s285 = scalar_select %p284, %s283, 63
        %s286 = smul.addr %s285, 3
        %s287 = smul.addr %s286, 8
        %s288 = scalar_lea.vmem %s0, %s287
        %s289 = smul.u32 32, %s17
      $region52: #{net2_forward_batched.1} parent=47 // pred_fallthru
        _
    $region48: #{net2_forward_batched.1} parent=5 // pred_fallthru
      _
    %p290 = scmp.le.s32.totalorder 1, %s17
    %p291 = scmp.lt.s32.totalorder %s17, 3
    %p292 = pnand %p290, %p291
    %p293 = pneg %p292
    // Predicated region
    $region53: #{net2_forward_batched.1} parent=5 // pred_check
      _
    $region54: #{net2_forward_batched.1} parent=5 // pred_check_branch
      %295 = sbr.rel (%p292) target = $region56
    $region55: #{net2_forward_batched.1} parent=5 // pred_region
      %s296 = ssub.s32 %s17, 1
      %s297 = smul.u32 32, %s22
      %p298 = scmp.lt.s32.totalorder %s297, 63
      %s299 = scalar_select %p298, %s297, 63
      %s300 = smul.addr %s299, 3
      %s301 = smul.addr %s300, 8
      %s302 = scalar_lea.vmem %s0, %s301
      %p303 = pneg %p43
      %p304 = pneg %p40
      %p305 = pneg %p64
      %p306 = pneg %p61
      %p307 = pneg %p85
      %p308 = pneg %p82
      %p309 = pneg %p106
      %p310 = pneg %p103
      %p311 = pneg %p127
      %p312 = pneg %p124
      %p313 = pneg %p148
      %p314 = pneg %p145
      %p315 = pneg %p169
      %p316 = pneg %p166
      %p317 = pneg %p190
      %p318 = pneg %p187
      %p319 = pneg %p211
      %p320 = pneg %p208
      %p321 = pneg %p237
      %p322 = pneg %p234
      %s323 = smul.u32 32, %s22
      %p324 = scmp.lt.s32.totalorder %s323, 63
      %s325 = scalar_select %p324, %s323, 63
      %s326 = smul.addr %s325, 8
      %s327 = scalar_lea.vmem %s9, %s326
      %s328 = smul.u32 32, %s22
      %p329 = scmp.lt.s32.totalorder %s328, 63
      %s330 = scalar_select %p329, %s328, 63
      %s331 = smul.addr %s330, 3
      %s332 = smul.addr %s331, 8
      %s333 = scalar_lea.vmem %s0, %s332
      %s334 = smul.u32 32, %s22
      %s335 = smul.u32 32, %s22
      %p336 = scmp.lt.s32.totalorder %s335, 63
      %s337 = scalar_select %p336, %s335, 63
      %s338 = smul.addr %s337, 8
      %s339 = scalar_lea.vmem %s9, %s338
      %s340 = smul.u32 32, %s22
      %v341 = vld [vmem:[%s333] sm:$0xff]
      %v342 = vld [vmem:[%s333 + $0x8] sm:$0xff]
      %v343 = vld [vmem:[%s333 + $0x10] sm:$0xff]
      %v344 = vld [vmem:[%s333 + $0x18] sm:$0xff]
      %v345 = vld [vmem:[%s333 + $0x20] sm:$0xff]
      %v346 = vld [vmem:[%s333 + $0x28] sm:$0xff]
      %v347 = vld [vmem:[%s333 + $0x30] sm:$0xff]
      %v348 = vld [vmem:[%s333 + $0x38] sm:$0xff]
      %v349 = vld [vmem:[%s333 + $0x40] sm:$0xff]
      %v350 = vld [vmem:[%s333 + $0x48] sm:$0xff]
      %v351 = vld [vmem:[%s333 + $0x50] sm:$0xff]
      %v352 = vld [vmem:[%s333 + $0x58] sm:$0xff]
      %v353 = vld [vmem:[%s333 + $0x60] sm:$0xff]
      %v354 = vld [vmem:[%s333 + $0x68] sm:$0xff]
      %v355 = vld [vmem:[%s333 + $0x70] sm:$0xff]
      %v356 = vld [vmem:[%s333 + $0x78] sm:$0xff]
      %v357 = vld [vmem:[%s333 + $0x80] sm:$0xff]
      %v358 = vld [vmem:[%s333 + $0x88] sm:$0xff]
      %v359 = vld [vmem:[%s333 + $0x90] sm:$0xff]
      %v360 = vld [vmem:[%s333 + $0x98] sm:$0xff]
      %v361 = vld [vmem:[%s333 + $0xa0] sm:$0xff]
      %v362 = vld [vmem:[%s333 + $0xa8] sm:$0xff]
      %v363 = vld [vmem:[%s333 + $0xb0] sm:$0xff]
      %v364 = vld [vmem:[%s333 + $0xb8] sm:$0xff]
      %v365 = vld [vmem:[%s333 + $0xc0] sm:$0xff]
      %v366 = vld [vmem:[%s333 + $0xc8] sm:$0xff]
      %v367 = vld [vmem:[%s333 + $0xd0] sm:$0xff]
      %v368 = vld [vmem:[%s333 + $0xd8] sm:$0xff]
      %v369 = vld [vmem:[%s333 + $0xe0] sm:$0xff]
      %v370 = vld [vmem:[%s333 + $0xe8] sm:$0xff]
      %v371 = vld [vmem:[%s333 + $0xf0] sm:$0xff]
      %v372 = vld [vmem:[%s333 + $0xf8] sm:$0xff]
      %v373 = vld [vmem:[%s333 + $0x100] sm:$0xff]
      %v374 = vld [vmem:[%s333 + $0x108] sm:$0xff]
      %v375 = vld [vmem:[%s333 + $0x110] sm:$0xff]
      %v376 = vld [vmem:[%s333 + $0x118] sm:$0xff]
      %v377 = vld [vmem:[%s333 + $0x120] sm:$0xff]
      %v378 = vld [vmem:[%s333 + $0x128] sm:$0xff]
      %v379 = vld [vmem:[%s333 + $0x130] sm:$0xff]
      %v380 = vld [vmem:[%s333 + $0x138] sm:$0xff]
      %v381 = vld [vmem:[%s333 + $0x140] sm:$0xff]
      %v382 = vld [vmem:[%s333 + $0x148] sm:$0xff]
      %v383 = vld [vmem:[%s333 + $0x150] sm:$0xff]
      %v384 = vld [vmem:[%s333 + $0x158] sm:$0xff]
      %v385 = vld [vmem:[%s333 + $0x160] sm:$0xff]
      %v386 = vld [vmem:[%s333 + $0x168] sm:$0xff]
      %v387 = vld [vmem:[%s333 + $0x170] sm:$0xff]
      %v388 = vld [vmem:[%s333 + $0x178] sm:$0xff]
      %v389 = vld [vmem:[%s333 + $0x180] sm:$0xff]
      %v390 = vld [vmem:[%s333 + $0x188] sm:$0xff]
      %v391 = vld [vmem:[%s333 + $0x190] sm:$0xff]
      %v392 = vld [vmem:[%s333 + $0x198] sm:$0xff]
      %v393 = vld [vmem:[%s333 + $0x1a0] sm:$0xff]
      %v394 = vld [vmem:[%s333 + $0x1a8] sm:$0xff]
      %v395 = vld [vmem:[%s333 + $0x1b0] sm:$0xff]
      %v396 = vld [vmem:[%s333 + $0x1b8] sm:$0xff]
      %v397 = vld [vmem:[%s333 + $0x1c0] sm:$0xff]
      %v398 = vld [vmem:[%s333 + $0x1c8] sm:$0xff]
      %v399 = vld [vmem:[%s333 + $0x1d0] sm:$0xff]
      %v400 = vld [vmem:[%s333 + $0x1d8] sm:$0xff]
      %v401 = vld [vmem:[%s333 + $0x1e0] sm:$0xff]
      %v402 = vld [vmem:[%s333 + $0x1e8] sm:$0xff]
      %v403 = vld [vmem:[%s333 + $0x1f0] sm:$0xff]
      %v404 = vld [vmem:[%s333 + $0x1f8] sm:$0xff]
      %v405 = vld [vmem:[%s333 + $0x200] sm:$0xff]
      %v406 = vld [vmem:[%s333 + $0x208] sm:$0xff]
      %v407 = vld [vmem:[%s333 + $0x210] sm:$0xff]
      %v408 = vld [vmem:[%s333 + $0x218] sm:$0xff]
      %v409 = vld [vmem:[%s333 + $0x220] sm:$0xff]
      %v410 = vld [vmem:[%s333 + $0x228] sm:$0xff]
      %v411 = vld [vmem:[%s333 + $0x230] sm:$0xff]
      %v412 = vld [vmem:[%s333 + $0x238] sm:$0xff]
      %v413 = vld [vmem:[%s333 + $0x240] sm:$0xff]
      %v414 = vld [vmem:[%s333 + $0x248] sm:$0xff]
      %v415 = vld [vmem:[%s333 + $0x250] sm:$0xff]
      %v416 = vld [vmem:[%s333 + $0x258] sm:$0xff]
      %v417 = vld [vmem:[%s333 + $0x260] sm:$0xff]
      %v418 = vld [vmem:[%s333 + $0x268] sm:$0xff]
      %v419 = vld [vmem:[%s333 + $0x270] sm:$0xff]
      %v420 = vld [vmem:[%s333 + $0x278] sm:$0xff]
      %v421 = vld [vmem:[%s333 + $0x280] sm:$0xff]
      %v422 = vld [vmem:[%s333 + $0x288] sm:$0xff]
      %v423 = vld [vmem:[%s333 + $0x290] sm:$0xff]
      %v424 = vld [vmem:[%s333 + $0x298] sm:$0xff]
      %v425 = vld [vmem:[%s333 + $0x2a0] sm:$0xff]
      %v426 = vld [vmem:[%s333 + $0x2a8] sm:$0xff]
      %v427 = vld [vmem:[%s333 + $0x2b0] sm:$0xff]
      %v428 = vld [vmem:[%s333 + $0x2b8] sm:$0xff]
      %v429 = vld [vmem:[%s333 + $0x2c0] sm:$0xff]
      %v430 = vld [vmem:[%s333 + $0x2c8] sm:$0xff]
      %v431 = vld [vmem:[%s333 + $0x2d0] sm:$0xff]
      %v432 = vld [vmem:[%s333 + $0x2d8] sm:$0xff]
      %v433 = vld [vmem:[%s333 + $0x2e0] sm:$0xff]
      %v434 = vld [vmem:[%s333 + $0x2e8] sm:$0xff]
      %v435 = vld [vmem:[%s333 + $0x2f0] sm:$0xff]
      %v436 = vld [vmem:[%s333 + $0x2f8] sm:$0xff]
      %v437 = vld [vmem:[%s1] sm:$0xff]
      %v438 = vld [vmem:[%s1 + $0x8] sm:$0xff]
      %v439 = vld [vmem:[%s1 + $0x10] sm:$0xff]
      %v440 = vld [vmem:[%s1 + $0x18] sm:$0xff]
      %v441 = vld [vmem:[%s1 + $0x20] sm:$0xff]
      %v442 = vld [vmem:[%s1 + $0x28] sm:$0xff]
      %v443 = vld [vmem:[%s1 + $0x30] sm:$0xff]
      %v444 = vld [vmem:[%s1 + $0x38] sm:$0xff]
      %v445 = vld [vmem:[%s1 + $0x40] sm:$0xff]
      %v446 = vld [vmem:[%s1 + $0x48] sm:$0xff]
      %v447 = vld [vmem:[%s1 + $0x50] sm:$0xff]
      %v448 = vld [vmem:[%s1 + $0x58] sm:$0xff]
      %v449 = vld [vmem:[%s1 + $0x60] sm:$0xff]
      %v450 = vld [vmem:[%s1 + $0x68] sm:$0xff]
      %v451 = vld [vmem:[%s1 + $0x70] sm:$0xff]
      %v452 = vld [vmem:[%s1 + $0x78] sm:$0xff]
      %v453 = vld [vmem:[%s1 + $0x80] sm:$0xff]
      %v454 = vld [vmem:[%s1 + $0x88] sm:$0xff]
      %v455 = vld [vmem:[%s1 + $0x90] sm:$0xff]
      %v456 = vld [vmem:[%s1 + $0x98] sm:$0xff]
      %v457 = vld [vmem:[%s1 + $0xa0] sm:$0xff]
      %v458 = vld [vmem:[%s1 + $0xa8] sm:$0xff]
      %v459 = vld [vmem:[%s1 + $0xb0] sm:$0xff]
      %v460 = vld [vmem:[%s1 + $0xb8] sm:$0xff]
      %v461 = vld [vmem:[%s1 + $0xc0] sm:$0xff]
      %v462 = vld [vmem:[%s1 + $0xc8] sm:$0xff]
      %v463 = vld [vmem:[%s1 + $0xd0] sm:$0xff]
      %v464 = vld [vmem:[%s1 + $0xd8] sm:$0xff]
      %v465 = vld [vmem:[%s1 + $0xe0] sm:$0xff]
      %v466 = vld [vmem:[%s1 + $0xe8] sm:$0xff]
      %v467 = vld [vmem:[%s1 + $0xf0] sm:$0xff]
      %v468 = vld [vmem:[%s1 + $0xf8] sm:$0xff]
      %v469 = vld [vmem:[%s1 + $0x100] sm:$0xff]
      %v470 = vld [vmem:[%s1 + $0x108] sm:$0xff]
      %v471 = vld [vmem:[%s1 + $0x110] sm:$0xff]
      %v472 = vld [vmem:[%s1 + $0x118] sm:$0xff]
      %v473 = vld [vmem:[%s1 + $0x120] sm:$0xff]
      %v474 = vld [vmem:[%s1 + $0x128] sm:$0xff]
      %v475 = vld [vmem:[%s1 + $0x130] sm:$0xff]
      %v476 = vld [vmem:[%s1 + $0x138] sm:$0xff]
      %v477 = vld [vmem:[%s1 + $0x140] sm:$0xff]
      %v478 = vld [vmem:[%s1 + $0x148] sm:$0xff]
      %v479 = vld [vmem:[%s1 + $0x150] sm:$0xff]
      %v480 = vld [vmem:[%s1 + $0x158] sm:$0xff]
      %v481 = vld [vmem:[%s1 + $0x160] sm:$0xff]
      %v482 = vld [vmem:[%s1 + $0x168] sm:$0xff]
      %v483 = vld [vmem:[%s1 + $0x170] sm:$0xff]
      %v484 = vld [vmem:[%s1 + $0x178] sm:$0xff]
      %v485 = vld [vmem:[%s1 + $0x180] sm:$0xff]
      %v486 = vld [vmem:[%s1 + $0x188] sm:$0xff]
      %v487 = vld [vmem:[%s1 + $0x190] sm:$0xff]
      %v488 = vld [vmem:[%s1 + $0x198] sm:$0xff]
      %v489 = vld [vmem:[%s1 + $0x1a0] sm:$0xff]
      %v490 = vld [vmem:[%s1 + $0x1a8] sm:$0xff]
      %v491 = vld [vmem:[%s1 + $0x1b0] sm:$0xff]
      %v492 = vld [vmem:[%s1 + $0x1b8] sm:$0xff]
      %v493 = vld [vmem:[%s1 + $0x1c0] sm:$0xff]
      %v494 = vld [vmem:[%s1 + $0x1c8] sm:$0xff]
      %v495 = vld [vmem:[%s1 + $0x1d0] sm:$0xff]
      %v496 = vld [vmem:[%s1 + $0x1d8] sm:$0xff]
      %v497 = vld [vmem:[%s1 + $0x1e0] sm:$0xff]
      %v498 = vld [vmem:[%s1 + $0x1e8] sm:$0xff]
      %v499 = vld [vmem:[%s1 + $0x1f0] sm:$0xff]
      %v500 = vld [vmem:[%s1 + $0x1f8] sm:$0xff]
      %v501 = vld [vmem:[%s1 + $0x200] sm:$0xff]
      %v502 = vld [vmem:[%s1 + $0x208] sm:$0xff]
      %v503 = vld [vmem:[%s1 + $0x210] sm:$0xff]
      %v504 = vld [vmem:[%s1 + $0x218] sm:$0xff]
      %v505 = vld [vmem:[%s1 + $0x220] sm:$0xff]
      %v506 = vld [vmem:[%s1 + $0x228] sm:$0xff]
      %v507 = vld [vmem:[%s1 + $0x230] sm:$0xff]
      %v508 = vld [vmem:[%s1 + $0x238] sm:$0xff]
      %v509 = vld [vmem:[%s1 + $0x240] sm:$0xff]
      %v510 = vld [vmem:[%s1 + $0x248] sm:$0xff]
      %v511 = vld [vmem:[%s1 + $0x250] sm:$0xff]
      %v512 = vld [vmem:[%s1 + $0x258] sm:$0xff]
      %v513 = vld [vmem:[%s1 + $0x260] sm:$0xff]
      %v514 = vld [vmem:[%s1 + $0x268] sm:$0xff]
      %v515 = vld [vmem:[%s1 + $0x270] sm:$0xff]
      %v516 = vld [vmem:[%s1 + $0x278] sm:$0xff]
      %v517 = vld [vmem:[%s1 + $0x280] sm:$0xff]
      %v518 = vld [vmem:[%s1 + $0x288] sm:$0xff]
      %v519 = vld [vmem:[%s1 + $0x290] sm:$0xff]
      %v520 = vld [vmem:[%s1 + $0x298] sm:$0xff]
      %v521 = vld [vmem:[%s1 + $0x2a0] sm:$0xff]
      %v522 = vld [vmem:[%s1 + $0x2a8] sm:$0xff]
      %v523 = vld [vmem:[%s1 + $0x2b0] sm:$0xff]
      %v524 = vld [vmem:[%s1 + $0x2b8] sm:$0xff]
      %v525 = vld [vmem:[%s1 + $0x2c0] sm:$0xff]
      %v526 = vld [vmem:[%s1 + $0x2c8] sm:$0xff]
      %v527 = vld [vmem:[%s1 + $0x2d0] sm:$0xff]
      %v528 = vld [vmem:[%s1 + $0x2d8] sm:$0xff]
      %v529 = vld [vmem:[%s1 + $0x2e0] sm:$0xff]
      %v530 = vld [vmem:[%s1 + $0x2e8] sm:$0xff]
      %v531 = vld [vmem:[%s1 + $0x2f0] sm:$0xff]
      %v532 = vld [vmem:[%s1 + $0x2f8] sm:$0xff]
      %v533 = vld [vmem:[%s1 + $0x300] sm:$0xff]
      %v534 = vld [vmem:[%s1 + $0x308] sm:$0xff]
      %v535 = vld [vmem:[%s1 + $0x310] sm:$0xff]
      %v536 = vld [vmem:[%s1 + $0x318] sm:$0xff]
      %v537 = vld [vmem:[%s1 + $0x320] sm:$0xff]
      %v538 = vld [vmem:[%s1 + $0x328] sm:$0xff]
      %v539 = vld [vmem:[%s1 + $0x330] sm:$0xff]
      %v540 = vld [vmem:[%s1 + $0x338] sm:$0xff]
      %v541 = vld [vmem:[%s1 + $0x340] sm:$0xff]
      %v542 = vld [vmem:[%s1 + $0x348] sm:$0xff]
      %v543 = vld [vmem:[%s1 + $0x350] sm:$0xff]
      %v544 = vld [vmem:[%s1 + $0x358] sm:$0xff]
      %v545 = vld [vmem:[%s1 + $0x360] sm:$0xff]
      %v546 = vld [vmem:[%s1 + $0x368] sm:$0xff]
      %v547 = vld [vmem:[%s1 + $0x370] sm:$0xff]
      %v548 = vld [vmem:[%s1 + $0x378] sm:$0xff]
      %v549 = vld [vmem:[%s1 + $0x380] sm:$0xff]
      %v550 = vld [vmem:[%s1 + $0x388] sm:$0xff]
      %v551 = vld [vmem:[%s1 + $0x390] sm:$0xff]
      %v552 = vld [vmem:[%s1 + $0x398] sm:$0xff]
      %v553 = vld [vmem:[%s1 + $0x3a0] sm:$0xff]
      %v554 = vld [vmem:[%s1 + $0x3a8] sm:$0xff]
      %v555 = vld [vmem:[%s1 + $0x3b0] sm:$0xff]
      %v556 = vld [vmem:[%s1 + $0x3b8] sm:$0xff]
      %v557 = vld [vmem:[%s1 + $0x3c0] sm:$0xff]
      %v558 = vld [vmem:[%s1 + $0x3c8] sm:$0xff]
      %v559 = vld [vmem:[%s1 + $0x3d0] sm:$0xff]
      %v560 = vld [vmem:[%s1 + $0x3d8] sm:$0xff]
      %v561 = vld [vmem:[%s1 + $0x3e0] sm:$0xff]
      %v562 = vld [vmem:[%s1 + $0x3e8] sm:$0xff]
      %v563 = vld [vmem:[%s1 + $0x3f0] sm:$0xff]
      %v564 = vld [vmem:[%s1 + $0x3f8] sm:$0xff]
      %v565 = vld [vmem:[%s1 + $0x400] sm:$0xff]
      %v566 = vld [vmem:[%s1 + $0x408] sm:$0xff]
      %v567 = vld [vmem:[%s1 + $0x410] sm:$0xff]
      %v568 = vld [vmem:[%s1 + $0x418] sm:$0xff]
      %v569 = vld [vmem:[%s1 + $0x420] sm:$0xff]
      %v570 = vld [vmem:[%s1 + $0x428] sm:$0xff]
      %v571 = vld [vmem:[%s1 + $0x430] sm:$0xff]
      %v572 = vld [vmem:[%s1 + $0x438] sm:$0xff]
      %v573 = vld [vmem:[%s1 + $0x440] sm:$0xff]
      %v574 = vld [vmem:[%s1 + $0x448] sm:$0xff]
      %v575 = vld [vmem:[%s1 + $0x450] sm:$0xff]
      %v576 = vld [vmem:[%s1 + $0x458] sm:$0xff]
      %v577 = vld [vmem:[%s1 + $0x460] sm:$0xff]
      %v578 = vld [vmem:[%s1 + $0x468] sm:$0xff]
      %v579 = vld [vmem:[%s1 + $0x470] sm:$0xff]
      %v580 = vld [vmem:[%s1 + $0x478] sm:$0xff]
      %v581 = vld [vmem:[%s2] sm:$0x7]
      %v583 = vlaneseq
      %v584 = vshrl.u32 %v583, 7
      %v585 = vsub.s32 0, %v584
      %v586 = vrot.slane %v581, %v585
      %v587 = vlaneseq
      %v588 = vshrl.u32 %v587, 7
      %v589 = vsub.s32 1, %v588
      %v590 = vrot.slane %v581, %v589
      %v591 = vlaneseq
      %v592 = vshrl.u32 %v591, 7
      %v593 = vsub.s32 2, %v592
      %v594 = vrot.slane %v581, %v593
      %598 = vmatprep.subr.mxu0 %v438
      %599 = vmatpush1.msra.mxu0 %v437
      %600 = vmatprep.subr.mxu0 %v441
      %601 = vmatpush1.msra.mxu0 %v440
      %602 = vmatprep.subr.mxu0 %v444
      %603 = vmatpush1.msra.mxu0 %v443
      %604 = vmatprep.subr.mxu0 %v447
      %605 = vmatpush1.msra.mxu0 %v446
      %606 = vmatprep.subr.mxu0 %v450
      %607 = vmatpush1.msra.mxu0 %v449
      %608 = vmatprep.subr.mxu0 %v453
      %609 = vmatpush1.msra.mxu0 %v452
      %610 = vmatprep.subr.mxu0 %v456
      %611 = vmatpush1.msra.mxu0 %v455
      %612 = vmatprep.subr.mxu0 %v459
      %613 = vmatpush1.msra.mxu0 %v458
      %614 = vmatprep.subr.mxu0 %v462
      %615 = vmatpush1.msra.mxu0 %v461
      %616 = vmatprep.subr.mxu0 %v465
      %617 = vmatpush1.msra.mxu0 %v464
      %618 = vmatprep.subr.mxu0 %v468
      %619 = vmatpush1.msra.mxu0 %v467
      %620 = vmatprep.subr.mxu0 %v471
      %621 = vmatpush1.msra.mxu0 %v470
      %622 = vmatprep.subr.mxu0 %v474
      %623 = vmatpush1.msra.mxu0 %v473
      %624 = vmatprep.subr.mxu0 %v477
      %625 = vmatpush1.msra.mxu0 %v476
      %626 = vmatprep.subr.mxu0 %v480
      %627 = vmatpush1.msra.mxu0 %v479
      %628 = vmatprep.subr.mxu0 %v483
      %629 = vmatpush1.msra.mxu0 %v482
      %630 = vmatprep.subr.mxu0 %v486
      %631 = vmatpush1.msra.mxu0 %v485
      %632 = vmatprep.subr.mxu0 %v489
      %633 = vmatpush1.msra.mxu0 %v488
      %634 = vmatprep.subr.mxu0 %v492
      %635 = vmatpush1.msra.mxu0 %v491
      %636 = vmatprep.subr.mxu0 %v495
      %637 = vmatpush1.msra.mxu0 %v494
      %638 = vmatprep.subr.mxu0 %v498
      %639 = vmatpush1.msra.mxu0 %v497
      %640 = vmatprep.subr.mxu0 %v501
      %641 = vmatpush1.msra.mxu0 %v500
      %642 = vmatprep.subr.mxu0 %v504
      %643 = vmatpush1.msra.mxu0 %v503
      %644 = vmatprep.subr.mxu0 %v507
      %645 = vmatpush1.msra.mxu0 %v506
      %646 = vmatprep.subr.mxu0 %v510
      %647 = vmatpush1.msra.mxu0 %v509
      %648 = vmatprep.subr.mxu0 %v513
      %649 = vmatpush1.msra.mxu0 %v512
      %650 = vmatprep.subr.mxu0 %v516
      %651 = vmatpush1.msra.mxu0 %v515
      %652 = vmatprep.subr.mxu0 %v519
      %653 = vmatpush1.msra.mxu0 %v518
      %654 = vmatprep.subr.mxu0 %v522
      %655 = vmatpush1.msra.mxu0 %v521
      %656 = vmatprep.subr.mxu0 %v525
      %657 = vmatpush1.msra.mxu0 %v524
      %658 = vmatprep.subr.mxu0 %v528
      %659 = vmatpush1.msra.mxu0 %v527
      %660 = vmatprep.subr.mxu0 %v531
      %661 = vmatpush1.msra.mxu0 %v530
      %662 = vmatprep.mubr.f32.mxu0 %v342
      %663 = vmatmul.mubr.f32.gmra.mrb[0].mxu0 %v341
      %v664 = vpop.f32.mrb[0].mxu0
      %v665 = vadd.f32 %v586, %v664
      %v666 = vpop.f32.mrb[0].mxu0
      %v667 = vadd.f32 %v590, %v666
      %668 = vmatprep.mubr.f32.mxu0 %v345
      %669 = vmatmul.mubr.f32.gmra.mrb[0].mxu0 %v344
      %v670 = vpop.f32.mrb[0].mxu0
      %v671 = vadd.f32 %v586, %v670
      %v672 = vpop.f32.mrb[0].mxu0
      %v673 = vadd.f32 %v590, %v672
      %674 = vmatprep.mubr.f32.mxu0 %v348
      %675 = vmatmul.mubr.f32.gmra.mrb[0].mxu0 %v347
      %v676 = vpop.f32.mrb[0].mxu0
      %v677 = vadd.f32 %v586, %v676
      %v678 = vpop.f32.mrb[0].mxu0
      %v679 = vadd.f32 %v590, %v678
      %680 = vmatprep.mubr.f32.mxu0 %v351
      %681 = vmatmul.mubr.f32.gmra.mrb[0].mxu0 %v350
      %v682 = vpop.f32.mrb[0].mxu0
      %v683 = vadd.f32 %v586, %v682
      %v684 = vpop.f32.mrb[0].mxu0
      %v685 = vadd.f32 %v590, %v684
      %686 = vmatprep.mubr.f32.mxu0 %v354
      %687 = vmatmul.mubr.f32.gmra.mrb[0].mxu0 %v353
      %v688 = vpop.f32.mrb[0].mxu0
      %v689 = vadd.f32 %v586, %v688
      %v690 = vpop.f32.mrb[0].mxu0
      %v691 = vadd.f32 %v590, %v690
      %692 = vmatprep.mubr.f32.mxu0 %v357
      %693 = vmatmul.mubr.f32.gmra.mrb[0].mxu0 %v356
      %v694 = vpop.f32.mrb[0].mxu0
      %v695 = vadd.f32 %v586, %v694
      %v696 = vpop.f32.mrb[0].mxu0
      %v697 = vadd.f32 %v590, %v696
      %698 = vmatprep.mubr.f32.mxu0 %v360
      %699 = vmatmul.mubr.f32.gmra.mrb[0].mxu0 %v359
      %v700 = vpop.f32.mrb[0].mxu0
      %v701 = vadd.f32 %v586, %v700
      %v702 = vpop.f32.mrb[0].mxu0
      %v703 = vadd.f32 %v590, %v702
      %704 = vmatprep.mubr.f32.mxu0 %v363
      %705 = vmatmul.mubr.f32.gmra.mrb[0].mxu0 %v362
      %v706 = vpop.f32.mrb[0].mxu0
      %v707 = vadd.f32 %v586, %v706
      %v708 = vpop.f32.mrb[0].mxu0
      %v709 = vadd.f32 %v590, %v708
      %710 = vmatprep.mubr.f32.mxu0 %v366
      %711 = vmatmul.mubr.f32.gmra.mrb[0].mxu0 %v365
      %v712 = vpop.f32.mrb[0].mxu0
      %v713 = vadd.f32 %v586, %v712
      %v714 = vpop.f32.mrb[0].mxu0
      %v715 = vadd.f32 %v590, %v714
      %716 = vmatprep.mubr.f32.mxu0 %v369
      %717 = vmatmul.mubr.f32.gmra.mrb[0].mxu0 %v368
      %v718 = vpop.f32.mrb[0].mxu0
      %v719 = vadd.f32 %v586, %v718
      %v720 = vpop.f32.mrb[0].mxu0
      %v721 = vadd.f32 %v590, %v720
      %722 = vmatprep.mubr.f32.mxu0 %v372
      %723 = vmatmul.mubr.f32.gmra.mrb[0].mxu0 %v371
      %v724 = vpop.f32.mrb[0].mxu0
      %v725 = vadd.f32 %v586, %v724
      %v726 = vpop.f32.mrb[0].mxu0
      %v727 = vadd.f32 %v590, %v726
      %728 = vmatprep.mubr.f32.mxu0 %v375
      %729 = vmatmul.mubr.f32.gmra.mrb[0].mxu0 %v374
      %v730 = vpop.f32.mrb[0].mxu0
      %v731 = vadd.f32 %v586, %v730
      %v732 = vpop.f32.mrb[0].mxu0
      %v733 = vadd.f32 %v590, %v732
      %734 = vmatprep.mubr.f32.mxu0 %v378
      %735 = vmatmul.mubr.f32.gmra.mrb[0].mxu0 %v377
      %v736 = vpop.f32.mrb[0].mxu0
      %v737 = vadd.f32 %v586, %v736
      %v738 = vpop.f32.mrb[0].mxu0
      %v739 = vadd.f32 %v590, %v738
      %740 = vmatprep.mubr.f32.mxu0 %v381
      %741 = vmatmul.mubr.f32.gmra.mrb[0].mxu0 %v380
      %v742 = vpop.f32.mrb[0].mxu0
      %v743 = vadd.f32 %v586, %v742
      %v744 = vpop.f32.mrb[0].mxu0
      %v745 = vadd.f32 %v590, %v744
      %746 = vmatprep.mubr.f32.mxu0 %v384
      %747 = vmatmul.mubr.f32.gmra.mrb[0].mxu0 %v383
      %v748 = vpop.f32.mrb[0].mxu0
      %v749 = vadd.f32 %v586, %v748
      %v750 = vpop.f32.mrb[0].mxu0
      %v751 = vadd.f32 %v590, %v750
      %752 = vmatprep.mubr.f32.mxu0 %v387
      %753 = vmatmul.mubr.f32.gmra.mrb[0].mxu0 %v386
      %v754 = vpop.f32.mrb[0].mxu0
      %v755 = vadd.f32 %v586, %v754
      %v756 = vpop.f32.mrb[0].mxu0
      %v757 = vadd.f32 %v590, %v756
      %758 = vmatprep.mubr.f32.mxu0 %v390
      %759 = vmatmul.mubr.f32.gmra.mrb[0].mxu0 %v389
      %v760 = vpop.f32.mrb[0].mxu0
      %v761 = vadd.f32 %v586, %v760
      %v762 = vpop.f32.mrb[0].mxu0
      %v763 = vadd.f32 %v590, %v762
      %764 = vmatprep.mubr.f32.mxu0 %v393
      %765 = vmatmul.mubr.f32.gmra.mrb[0].mxu0 %v392
      %v766 = vpop.f32.mrb[0].mxu0
      %v767 = vadd.f32 %v586, %v766
      %v768 = vpop.f32.mrb[0].mxu0
      %v769 = vadd.f32 %v590, %v768
      %770 = vmatprep.mubr.f32.mxu0 %v396
      %771 = vmatmul.mubr.f32.gmra.mrb[0].mxu0 %v395
      %v772 = vpop.f32.mrb[0].mxu0
      %v773 = vadd.f32 %v586, %v772
      %v774 = vpop.f32.mrb[0].mxu0
      %v775 = vadd.f32 %v590, %v774
      %776 = vmatprep.mubr.f32.mxu0 %v399
      %777 = vmatmul.mubr.f32.gmra.mrb[0].mxu0 %v398
      %v778 = vpop.f32.mrb[0].mxu0
      %v779 = vadd.f32 %v586, %v778
      %v780 = vpop.f32.mrb[0].mxu0
      %v781 = vadd.f32 %v590, %v780
      %782 = vmatprep.mubr.f32.mxu0 %v402
      %783 = vmatmul.mubr.f32.gmra.mrb[0].mxu0 %v401
      %v784 = vpop.f32.mrb[0].mxu0
      %v785 = vadd.f32 %v586, %v784
      %v786 = vpop.f32.mrb[0].mxu0
      %v787 = vadd.f32 %v590, %v786
      %788 = vmatprep.mubr.f32.mxu0 %v405
      %789 = vmatmul.mubr.f32.gmra.mrb[0].mxu0 %v404
      %v790 = vpop.f32.mrb[0].mxu0
      %v791 = vadd.f32 %v586, %v790
      %v792 = vpop.f32.mrb[0].mxu0
      %v793 = vadd.f32 %v590, %v792
      %794 = vmatprep.mubr.f32.mxu0 %v408
      %795 = vmatmul.mubr.f32.gmra.mrb[0].mxu0 %v407
      %v796 = vpop.f32.mrb[0].mxu0
      %v797 = vadd.f32 %v586, %v796
      %v798 = vpop.f32.mrb[0].mxu0
      %v799 = vadd.f32 %v590, %v798
      %800 = vmatprep.mubr.f32.mxu0 %v411
      %801 = vmatmul.mubr.f32.gmra.mrb[0].mxu0 %v410
      %v802 = vpop.f32.mrb[0].mxu0
      %v803 = vadd.f32 %v586, %v802
      %v804 = vpop.f32.mrb[0].mxu0
      %v805 = vadd.f32 %v590, %v804
      %806 = vmatprep.mubr.f32.mxu0 %v414
      %807 = vmatmul.mubr.f32.gmra.mrb[0].mxu0 %v413
      %v808 = vpop.f32.mrb[0].mxu0
      %v809 = vadd.f32 %v586, %v808
      %v810 = vpop.f32.mrb[0].mxu0
      %v811 = vadd.f32 %v590, %v810
      %812 = vmatprep.mubr.f32.mxu0 %v417
      %813 = vmatmul.mubr.f32.gmra.mrb[0].mxu0 %v416
      %v814 = vpop.f32.mrb[0].mxu0
      %v815 = vadd.f32 %v586, %v814
      %v816 = vpop.f32.mrb[0].mxu0
      %v817 = vadd.f32 %v590, %v816
      %818 = vmatprep.mubr.f32.mxu0 %v420
      %819 = vmatmul.mubr.f32.gmra.mrb[0].mxu0 %v419
      %v820 = vpop.f32.mrb[0].mxu0
      %v821 = vadd.f32 %v586, %v820
      %v822 = vpop.f32.mrb[0].mxu0
      %v823 = vadd.f32 %v590, %v822
      %824 = vmatprep.mubr.f32.mxu0 %v423
      %825 = vmatmul.mubr.f32.gmra.mrb[0].mxu0 %v422
      %v826 = vpop.f32.mrb[0].mxu0
      %v827 = vadd.f32 %v586, %v826
      %v828 = vpop.f32.mrb[0].mxu0
      %v829 = vadd.f32 %v590, %v828
      %830 = vmatprep.mubr.f32.mxu0 %v426
      %831 = vmatmul.mubr.f32.gmra.mrb[0].mxu0 %v425
      %v832 = vpop.f32.mrb[0].mxu0
      %v833 = vadd.f32 %v586, %v832
      %v834 = vpop.f32.mrb[0].mxu0
      %v835 = vadd.f32 %v590, %v834
      %836 = vmatprep.mubr.f32.mxu0 %v429
      %837 = vmatmul.mubr.f32.gmra.mrb[0].mxu0 %v428
      %v838 = vpop.f32.mrb[0].mxu0
      %v839 = vadd.f32 %v586, %v838
      %v840 = vpop.f32.mrb[0].mxu0
      %v841 = vadd.f32 %v590, %v840
      %842 = vmatprep.mubr.f32.mxu0 %v432
      %843 = vmatmul.mubr.f32.gmra.mrb[0].mxu0 %v431
      %v844 = vpop.f32.mrb[0].mxu0
      %v845 = vadd.f32 %v586, %v844
      %v846 = vpop.f32.mrb[0].mxu0
      %v847 = vadd.f32 %v590, %v846
      %848 = vmatprep.mubr.f32.mxu0 %v435
      %849 = vmatmul.mubr.f32.gmra.mrb[0].mxu0 %v434
      %v850 = vpop.f32.mrb[0].mxu0
      %v851 = vadd.f32 %v586, %v850
      %v852 = vpop.f32.mrb[0].mxu0
      %v853 = vadd.f32 %v590, %v852
      %854 = vdwg.mxu0
      %855 = vmatprep.subr.mxu0 %v534
      %856 = vmatpush1.msra.mxu0 %v533
      %857 = vmatprep.subr.mxu0 %v537
      %858 = vmatpush1.msra.mxu0 %v536
      %859 = vmatprep.subr.mxu0 %v540
      %860 = vmatpush1.msra.mxu0 %v539
      %861 = vmatprep.subr.mxu0 %v543
      %862 = vmatpush1.msra.mxu0 %v542
      %863 = vmatprep.subr.mxu0 %v546
      %864 = vmatpush1.msra.mxu0 %v545
      %865 = vmatprep.subr.mxu0 %v549
      %866 = vmatpush1.msra.mxu0 %v548
      %867 = vmatprep.subr.mxu0 %v552
      %868 = vmatpush1.msra.mxu0 %v551
      %869 = vmatprep.subr.mxu0 %v555
      %870 = vmatpush1.msra.mxu0 %v554
      %871 = vmatprep.subr.mxu0 %v558
      %872 = vmatpush1.msra.mxu0 %v557
      %873 = vmatprep.subr.mxu0 %v561
      %874 = vmatpush1.msra.mxu0 %v560
      %875 = vmatprep.subr.mxu0 %v564
      %876 = vmatpush1.msra.mxu0 %v563
      %877 = vmatprep.subr.mxu0 %v567
      %878 = vmatpush1.msra.mxu0 %v566
      %879 = vmatprep.subr.mxu0 %v570
      %880 = vmatpush1.msra.mxu0 %v569
      %881 = vmatprep.subr.mxu0 %v573
      %882 = vmatpush1.msra.mxu0 %v572
      %883 = vmatprep.subr.mxu0 %v576
      %884 = vmatpush1.msra.mxu0 %v575
      %885 = vmatprep.subr.mxu0 %v579
      %886 = vmatpush1.msra.mxu0 %v578
      %887 = vmatprep.subr.mxu0 0.0
      %888 = vmatpush1.msra.mxu0 0.0
      %889 = vmatprep.subr.mxu0 0.0
      %890 = vmatpush1.msra.mxu0 0.0
      %891 = vmatprep.subr.mxu0 0.0
      %892 = vmatpush1.msra.mxu0 0.0
      %893 = vmatprep.subr.mxu0 0.0
      %894 = vmatpush1.msra.mxu0 0.0
      %895 = vmatprep.subr.mxu0 0.0
      %896 = vmatpush1.msra.mxu0 0.0
      %897 = vmatprep.subr.mxu0 0.0
      %898 = vmatpush1.msra.mxu0 0.0
      %899 = vmatprep.subr.mxu0 0.0
      %900 = vmatpush1.msra.mxu0 0.0
      %901 = vmatprep.subr.mxu0 0.0
      %902 = vmatpush1.msra.mxu0 0.0
      %903 = vmatprep.subr.mxu0 0.0
      %904 = vmatpush1.msra.mxu0 0.0
      %905 = vmatprep.subr.mxu0 0.0
      %906 = vmatpush1.msra.mxu0 0.0
      %907 = vmatprep.subr.mxu0 0.0
      %908 = vmatpush1.msra.mxu0 0.0
      %909 = vmatprep.subr.mxu0 0.0
      %910 = vmatpush1.msra.mxu0 0.0
      %911 = vmatprep.subr.mxu0 0.0
      %912 = vmatpush1.msra.mxu0 0.0
      %913 = vmatprep.subr.mxu0 0.0
      %914 = vmatpush1.msra.mxu0 0.0
      %915 = vmatprep.subr.mxu0 0.0
      %916 = vmatpush1.msra.mxu0 0.0
      %917 = vmatprep.subr.mxu0 0.0
      %918 = vmatpush1.msra.mxu0 0.0
      %919 = vmatprep.mubr.f32.mxu0 0.0
      %920 = vmatmul.mubr.f32.gmra.mrb[0].mxu0 %v343
      %v921 = vpop.f32.mrb[0].mxu0
      %v922 = vadd.f32 %v665, %v921
      %v923 = vpop.f32.mrb[0].mxu0
      %v924 = vadd.f32 %v667, %v923
      %925 = vmatprep.mubr.f32.mxu0 0.0
      %926 = vmatmul.mubr.f32.gmra.mrb[0].mxu0 %v346
      %v927 = vpop.f32.mrb[0].mxu0
      %v928 = vadd.f32 %v671, %v927
      %v929 = vpop.f32.mrb[0].mxu0
      %v930 = vadd.f32 %v673, %v929
      %931 = vmatprep.mubr.f32.mxu0 0.0
      %932 = vmatmul.mubr.f32.gmra.mrb[0].mxu0 %v349
      %v933 = vpop.f32.mrb[0].mxu0
      %v934 = vadd.f32 %v677, %v933
      %v935 = vpop.f32.mrb[0].mxu0
      %v936 = vadd.f32 %v679, %v935
      %937 = vmatprep.mubr.f32.mxu0 0.0
      %938 = vmatmul.mubr.f32.gmra.mrb[0].mxu0 %v352
      %v939 = vpop.f32.mrb[0].mxu0
      %v940 = vadd.f32 %v683, %v939
      %v941 = vpop.f32.mrb[0].mxu0
      %v942 = vadd.f32 %v685, %v941
      %943 = vmatprep.mubr.f32.mxu0 0.0
      %944 = vmatmul.mubr.f32.gmra.mrb[0].mxu0 %v355
      %v945 = vpop.f32.mrb[0].mxu0
      %v946 = vadd.f32 %v689, %v945
      %v947 = vpop.f32.mrb[0].mxu0
      %v948 = vadd.f32 %v691, %v947
      %949 = vmatprep.mubr.f32.mxu0 0.0
      %950 = vmatmul.mubr.f32.gmra.mrb[0].mxu0 %v358
      %v951 = vpop.f32.mrb[0].mxu0
      %v952 = vadd.f32 %v695, %v951
      %v953 = vpop.f32.mrb[0].mxu0
      %v954 = vadd.f32 %v697, %v953
      %955 = vmatprep.mubr.f32.mxu0 0.0
      %956 = vmatmul.mubr.f32.gmra.mrb[0].mxu0 %v361
      %v957 = vpop.f32.mrb[0].mxu0
      %v958 = vadd.f32 %v701, %v957
      %v959 = vpop.f32.mrb[0].mxu0
      %v960 = vadd.f32 %v703, %v959
      %961 = vmatprep.mubr.f32.mxu0 0.0
      %962 = vmatmul.mubr.f32.gmra.mrb[0].mxu0 %v364
      %v963 = vpop.f32.mrb[0].mxu0
      %v964 = vadd.f32 %v707, %v963
      %v965 = vpop.f32.mrb[0].mxu0
      %v966 = vadd.f32 %v709, %v965
      %967 = vmatprep.mubr.f32.mxu0 0.0
      %968 = vmatmul.mubr.f32.gmra.mrb[0].mxu0 %v367
      %v969 = vpop.f32.mrb[0].mxu0
      %v970 = vadd.f32 %v713, %v969
      %v971 = vpop.f32.mrb[0].mxu0
      %v972 = vadd.f32 %v715, %v971
      %973 = vmatprep.mubr.f32.mxu0 0.0
      %974 = vmatmul.mubr.f32.gmra.mrb[0].mxu0 %v370
      %v975 = vpop.f32.mrb[0].mxu0
      %v976 = vadd.f32 %v719, %v975
      %v977 = vpop.f32.mrb[0].mxu0
      %v978 = vadd.f32 %v721, %v977
      %979 = vmatprep.mubr.f32.mxu0 0.0
      %980 = vmatmul.mubr.f32.gmra.mrb[0].mxu0 %v373
      %v981 = vpop.f32.mrb[0].mxu0
      %v982 = vadd.f32 %v725, %v981
      %v983 = vpop.f32.mrb[0].mxu0
      %v984 = vadd.f32 %v727, %v983
      %985 = vmatprep.mubr.f32.mxu0 0.0
      %986 = vmatmul.mubr.f32.gmra.mrb[0].mxu0 %v376
      %v987 = vpop.f32.mrb[0].mxu0
      %v988 = vadd.f32 %v731, %v987
      %v989 = vpop.f32.mrb[0].mxu0
      %v990 = vadd.f32 %v733, %v989
      %991 = vmatprep.mubr.f32.mxu0 0.0
      %992 = vmatmul.mubr.f32.gmra.mrb[0].mxu0 %v379
      %v993 = vpop.f32.mrb[0].mxu0
      %v994 = vadd.f32 %v737, %v993
      %v995 = vpop.f32.mrb[0].mxu0
      %v996 = vadd.f32 %v739, %v995
      %997 = vmatprep.mubr.f32.mxu0 0.0
      %998 = vmatmul.mubr.f32.gmra.mrb[0].mxu0 %v382
      %v999 = vpop.f32.mrb[0].mxu0
      %v1000 = vadd.f32 %v743, %v999
      %v1001 = vpop.f32.mrb[0].mxu0
      %v1002 = vadd.f32 %v745, %v1001
      %1003 = vmatprep.mubr.f32.mxu0 0.0
      %1004 = vmatmul.mubr.f32.gmra.mrb[0].mxu0 %v385
      %v1005 = vpop.f32.mrb[0].mxu0
      %v1006 = vadd.f32 %v749, %v1005
      %v1007 = vpop.f32.mrb[0].mxu0
      %v1008 = vadd.f32 %v751, %v1007
      %1009 = vmatprep.mubr.f32.mxu0 0.0
      %1010 = vmatmul.mubr.f32.gmra.mrb[0].mxu0 %v388
      %v1011 = vpop.f32.mrb[0].mxu0
      %v1012 = vadd.f32 %v755, %v1011
      %v1013 = vpop.f32.mrb[0].mxu0
      %v1014 = vadd.f32 %v757, %v1013
      %1015 = vmatprep.mubr.f32.mxu0 0.0
      %1016 = vmatmul.mubr.f32.gmra.mrb[0].mxu0 %v391
      %v1017 = vpop.f32.mrb[0].mxu0
      %v1018 = vadd.f32 %v761, %v1017
      %v1019 = vpop.f32.mrb[0].mxu0
      %v1020 = vadd.f32 %v763, %v1019
      %1021 = vmatprep.mubr.f32.mxu0 0.0
      %1022 = vmatmul.mubr.f32.gmra.mrb[0].mxu0 %v394
      %v1023 = vpop.f32.mrb[0].mxu0
      %v1024 = vadd.f32 %v767, %v1023
      %v1025 = vpop.f32.mrb[0].mxu0
      %v1026 = vadd.f32 %v769, %v1025
      %1027 = vmatprep.mubr.f32.mxu0 0.0
      %1028 = vmatmul.mubr.f32.gmra.mrb[0].mxu0 %v397
      %v1029 = vpop.f32.mrb[0].mxu0
      %v1030 = vadd.f32 %v773, %v1029
      %v1031 = vpop.f32.mrb[0].mxu0
      %v1032 = vadd.f32 %v775, %v1031
      %1033 = vmatprep.mubr.f32.mxu0 0.0
      %1034 = vmatmul.mubr.f32.gmra.mrb[0].mxu0 %v400
      %v1035 = vpop.f32.mrb[0].mxu0
      %v1036 = vadd.f32 %v779, %v1035
      %v1037 = vpop.f32.mrb[0].mxu0
      %v1038 = vadd.f32 %v781, %v1037
      %1039 = vmatprep.mubr.f32.mxu0 0.0
      %1040 = vmatmul.mubr.f32.gmra.mrb[0].mxu0 %v403
      %v1041 = vpop.f32.mrb[0].mxu0
      %v1042 = vadd.f32 %v785, %v1041
      %v1043 = vpop.f32.mrb[0].mxu0
      %v1044 = vadd.f32 %v787, %v1043
      %1045 = vmatprep.mubr.f32.mxu0 0.0
      %1046 = vmatmul.mubr.f32.gmra.mrb[0].mxu0 %v406
      %v1047 = vpop.f32.mrb[0].mxu0
      %v1048 = vadd.f32 %v791, %v1047
      %v1049 = vpop.f32.mrb[0].mxu0
      %v1050 = vadd.f32 %v793, %v1049
      %1051 = vmatprep.mubr.f32.mxu0 0.0
      %1052 = vmatmul.mubr.f32.gmra.mrb[0].mxu0 %v409
      %v1053 = vpop.f32.mrb[0].mxu0
      %v1054 = vadd.f32 %v797, %v1053
      %v1055 = vpop.f32.mrb[0].mxu0
      %v1056 = vadd.f32 %v799, %v1055
      %1057 = vmatprep.mubr.f32.mxu0 0.0
      %1058 = vmatmul.mubr.f32.gmra.mrb[0].mxu0 %v412
      %v1059 = vpop.f32.mrb[0].mxu0
      %v1060 = vadd.f32 %v803, %v1059
      %v1061 = vpop.f32.mrb[0].mxu0
      %v1062 = vadd.f32 %v805, %v1061
      %1063 = vmatprep.mubr.f32.mxu0 0.0
      %1064 = vmatmul.mubr.f32.gmra.mrb[0].mxu0 %v415
      %v1065 = vpop.f32.mrb[0].mxu0
      %v1066 = vadd.f32 %v809, %v1065
      %v1067 = vpop.f32.mrb[0].mxu0
      %v1068 = vadd.f32 %v811, %v1067
      %1069 = vmatprep.mubr.f32.mxu0 0.0
      %1070 = vmatmul.mubr.f32.gmra.mrb[0].mxu0 %v418
      %v1071 = vpop.f32.mrb[0].mxu0
      %v1072 = vadd.f32 %v815, %v1071
      %v1073 = vpop.f32.mrb[0].mxu0
      %v1074 = vadd.f32 %v817, %v1073
      %1075 = vmatprep.mubr.f32.mxu0 0.0
      %1076 = vmatmul.mubr.f32.gmra.mrb[0].mxu0 %v421
      %v1077 = vpop.f32.mrb[0].mxu0
      %v1078 = vadd.f32 %v821, %v1077
      %v1079 = vpop.f32.mrb[0].mxu0
      %v1080 = vadd.f32 %v823, %v1079
      %1081 = vmatprep.mubr.f32.mxu0 0.0
      %1082 = vmatmul.mubr.f32.gmra.mrb[0].mxu0 %v424
      %v1083 = vpop.f32.mrb[0].mxu0
      %v1084 = vadd.f32 %v827, %v1083
      %v1085 = vpop.f32.mrb[0].mxu0
      %v1086 = vadd.f32 %v829, %v1085
      %1087 = vmatprep.mubr.f32.mxu0 0.0
      %1088 = vmatmul.mubr.f32.gmra.mrb[0].mxu0 %v427
      %v1089 = vpop.f32.mrb[0].mxu0
      %v1090 = vadd.f32 %v833, %v1089
      %v1091 = vpop.f32.mrb[0].mxu0
      %v1092 = vadd.f32 %v835, %v1091
      %1093 = vmatprep.mubr.f32.mxu0 0.0
      %1094 = vmatmul.mubr.f32.gmra.mrb[0].mxu0 %v430
      %v1095 = vpop.f32.mrb[0].mxu0
      %v1096 = vadd.f32 %v839, %v1095
      %v1097 = vpop.f32.mrb[0].mxu0
      %v1098 = vadd.f32 %v841, %v1097
      %1099 = vmatprep.mubr.f32.mxu0 0.0
      %1100 = vmatmul.mubr.f32.gmra.mrb[0].mxu0 %v433
      %v1101 = vpop.f32.mrb[0].mxu0
      %v1102 = vadd.f32 %v845, %v1101
      %v1103 = vpop.f32.mrb[0].mxu0
      %v1104 = vadd.f32 %v847, %v1103
      %1105 = vmatprep.mubr.f32.mxu0 0.0
      %1106 = vmatmul.mubr.f32.gmra.mrb[0].mxu0 %v436
      %v1107 = vpop.f32.mrb[0].mxu0
      %v1108 = vadd.f32 %v851, %v1107
      %v1109 = vpop.f32.mrb[0].mxu0
      %v1110 = vadd.f32 %v853, %v1109
      %1111 = vdwg.mxu0
      %1112 = vmatprep.subr.mxu0 0.0
      %1113 = vmatpush1.msra.mxu0 %v439
      %1114 = vmatprep.subr.mxu0 0.0
      %1115 = vmatpush1.msra.mxu0 %v442
      %1116 = vmatprep.subr.mxu0 0.0
      %1117 = vmatpush1.msra.mxu0 %v445
      %1118 = vmatprep.subr.mxu0 0.0
      %1119 = vmatpush1.msra.mxu0 %v448
      %1120 = vmatprep.subr.mxu0 0.0
      %1121 = vmatpush1.msra.mxu0 %v451
      %1122 = vmatprep.subr.mxu0 0.0
      %1123 = vmatpush1.msra.mxu0 %v454
      %1124 = vmatprep.subr.mxu0 0.0
      %1125 = vmatpush1.msra.mxu0 %v457
      %1126 = vmatprep.subr.mxu0 0.0
      %1127 = vmatpush1.msra.mxu0 %v460
      %1128 = vmatprep.subr.mxu0 0.0
      %1129 = vmatpush1.msra.mxu0 %v463
      %1130 = vmatprep.subr.mxu0 0.0
      %1131 = vmatpush1.msra.mxu0 %v466
      %1132 = vmatprep.subr.mxu0 0.0
      %1133 = vmatpush1.msra.mxu0 %v469
      %1134 = vmatprep.subr.mxu0 0.0
      %1135 = vmatpush1.msra.mxu0 %v472
      %1136 = vmatprep.subr.mxu0 0.0
      %1137 = vmatpush1.msra.mxu0 %v475
      %1138 = vmatprep.subr.mxu0 0.0
      %1139 = vmatpush1.msra.mxu0 %v478
      %1140 = vmatprep.subr.mxu0 0.0
      %1141 = vmatpush1.msra.mxu0 %v481
      %1142 = vmatprep.subr.mxu0 0.0
      %1143 = vmatpush1.msra.mxu0 %v484
      %1144 = vmatprep.subr.mxu0 0.0
      %1145 = vmatpush1.msra.mxu0 %v487
      %1146 = vmatprep.subr.mxu0 0.0
      %1147 = vmatpush1.msra.mxu0 %v490
      %1148 = vmatprep.subr.mxu0 0.0
      %1149 = vmatpush1.msra.mxu0 %v493
      %1150 = vmatprep.subr.mxu0 0.0
      %1151 = vmatpush1.msra.mxu0 %v496
      %1152 = vmatprep.subr.mxu0 0.0
      %1153 = vmatpush1.msra.mxu0 %v499
      %1154 = vmatprep.subr.mxu0 0.0
      %1155 = vmatpush1.msra.mxu0 %v502
      %1156 = vmatprep.subr.mxu0 0.0
      %1157 = vmatpush1.msra.mxu0 %v505
      %1158 = vmatprep.subr.mxu0 0.0
      %1159 = vmatpush1.msra.mxu0 %v508
      %1160 = vmatprep.subr.mxu0 0.0
      %1161 = vmatpush1.msra.mxu0 %v511
      %1162 = vmatprep.subr.mxu0 0.0
      %1163 = vmatpush1.msra.mxu0 %v514
      %1164 = vmatprep.subr.mxu0 0.0
      %1165 = vmatpush1.msra.mxu0 %v517
      %1166 = vmatprep.subr.mxu0 0.0
      %1167 = vmatpush1.msra.mxu0 %v520
      %1168 = vmatprep.subr.mxu0 0.0
      %1169 = vmatpush1.msra.mxu0 %v523
      %1170 = vmatprep.subr.mxu0 0.0
      %1171 = vmatpush1.msra.mxu0 %v526
      %1172 = vmatprep.subr.mxu0 0.0
      %1173 = vmatpush1.msra.mxu0 %v529
      %1174 = vmatprep.subr.mxu0 0.0
      %1175 = vmatpush1.msra.mxu0 %v532
      %1176 = vmatprep.mubr.f32.mxu0 %v342
      %1177 = vmatmul.mubr.f32.gmra.mrb[0].mxu0 %v341
      %v1178 = vpop.f32.mrb[0].mxu0
      %v1179 = vadd.f32 %v594, %v1178
      %v1180 = vpop.f32.mrb[0].mxu0
      %1181 = vmatprep.mubr.f32.mxu0 %v345
      %1182 = vmatmul.mubr.f32.gmra.mrb[0].mxu0 %v344
      %v1183 = vpop.f32.mrb[0].mxu0
      %v1184 = vadd.f32 %v594, %v1183
      %v1185 = vpop.f32.mrb[0].mxu0
      %1186 = vmatprep.mubr.f32.mxu0 %v348
      %1187 = vmatmul.mubr.f32.gmra.mrb[0].mxu0 %v347
      %v1188 = vpop.f32.mrb[0].mxu0
      %v1189 = vadd.f32 %v594, %v1188
      %v1190 = vpop.f32.mrb[0].mxu0
      %1191 = vmatprep.mubr.f32.mxu0 %v351
      %1192 = vmatmul.mubr.f32.gmra.mrb[0].mxu0 %v350
      %v1193 = vpop.f32.mrb[0].mxu0
      %v1194 = vadd.f32 %v594, %v1193
      %v1195 = vpop.f32.mrb[0].mxu0
      %1196 = vmatprep.mubr.f32.mxu0 %v354
      %1197 = vmatmul.mubr.f32.gmra.mrb[0].mxu0 %v353
      %v1198 = vpop.f32.mrb[0].mxu0
      %v1199 = vadd.f32 %v594, %v1198
      %v1200 = vpop.f32.mrb[0].mxu0
      %1201 = vmatprep.mubr.f32.mxu0 %v357
      %1202 = vmatmul.mubr.f32.gmra.mrb[0].mxu0 %v356
      %v1203 = vpop.f32.mrb[0].mxu0
      %v1204 = vadd.f32 %v594, %v1203
      %v1205 = vpop.f32.mrb[0].mxu0
      %1206 = vmatprep.mubr.f32.mxu0 %v360
      %1207 = vmatmul.mubr.f32.gmra.mrb[0].mxu0 %v359
      %v1208 = vpop.f32.mrb[0].mxu0
      %v1209 = vadd.f32 %v594, %v1208
      %v1210 = vpop.f32.mrb[0].mxu0
      %1211 = vmatprep.mubr.f32.mxu0 %v363
      %1212 = vmatmul.mubr.f32.gmra.mrb[0].mxu0 %v362
      %v1213 = vpop.f32.mrb[0].mxu0
      %v1214 = vadd.f32 %v594, %v1213
      %v1215 = vpop.f32.mrb[0].mxu0
      %1216 = vmatprep.mubr.f32.mxu0 %v366
      %1217 = vmatmul.mubr.f32.gmra.mrb[0].mxu0 %v365
      %v1218 = vpop.f32.mrb[0].mxu0
      %v1219 = vadd.f32 %v594, %v1218
      %v1220 = vpop.f32.mrb[0].mxu0
      %1221 = vmatprep.mubr.f32.mxu0 %v369
      %1222 = vmatmul.mubr.f32.gmra.mrb[0].mxu0 %v368
      %v1223 = vpop.f32.mrb[0].mxu0
      %v1224 = vadd.f32 %v594, %v1223
      %v1225 = vpop.f32.mrb[0].mxu0
      %1226 = vmatprep.mubr.f32.mxu0 %v372
      %1227 = vmatmul.mubr.f32.gmra.mrb[0].mxu0 %v371
      %v1228 = vpop.f32.mrb[0].mxu0
      %v1229 = vadd.f32 %v594, %v1228
      %v1230 = vpop.f32.mrb[0].mxu0
      %1231 = vmatprep.mubr.f32.mxu0 %v375
      %1232 = vmatmul.mubr.f32.gmra.mrb[0].mxu0 %v374
      %v1233 = vpop.f32.mrb[0].mxu0
      %v1234 = vadd.f32 %v594, %v1233
      %v1235 = vpop.f32.mrb[0].mxu0
      %1236 = vmatprep.mubr.f32.mxu0 %v378
      %1237 = vmatmul.mubr.f32.gmra.mrb[0].mxu0 %v377
      %v1238 = vpop.f32.mrb[0].mxu0
      %v1239 = vadd.f32 %v594, %v1238
      %v1240 = vpop.f32.mrb[0].mxu0
      %1241 = vmatprep.mubr.f32.mxu0 %v381
      %1242 = vmatmul.mubr.f32.gmra.mrb[0].mxu0 %v380
      %v1243 = vpop.f32.mrb[0].mxu0
      %v1244 = vadd.f32 %v594, %v1243
      %v1245 = vpop.f32.mrb[0].mxu0
      %1246 = vmatprep.mubr.f32.mxu0 %v384
      %1247 = vmatmul.mubr.f32.gmra.mrb[0].mxu0 %v383
      %v1248 = vpop.f32.mrb[0].mxu0
      %v1249 = vadd.f32 %v594, %v1248
      %v1250 = vpop.f32.mrb[0].mxu0
      %1251 = vmatprep.mubr.f32.mxu0 %v387
      %1252 = vmatmul.mubr.f32.gmra.mrb[0].mxu0 %v386
      %v1253 = vpop.f32.mrb[0].mxu0
      %v1254 = vadd.f32 %v594, %v1253
      %v1255 = vpop.f32.mrb[0].mxu0
      %1256 = vmatprep.mubr.f32.mxu0 %v390
      %1257 = vmatmul.mubr.f32.gmra.mrb[0].mxu0 %v389
      %v1258 = vpop.f32.mrb[0].mxu0
      %v1259 = vadd.f32 %v594, %v1258
      %v1260 = vpop.f32.mrb[0].mxu0
      %1261 = vmatprep.mubr.f32.mxu0 %v393
      %1262 = vmatmul.mubr.f32.gmra.mrb[0].mxu0 %v392
      %v1263 = vpop.f32.mrb[0].mxu0
      %v1264 = vadd.f32 %v594, %v1263
      %v1265 = vpop.f32.mrb[0].mxu0
      %1266 = vmatprep.mubr.f32.mxu0 %v396
      %1267 = vmatmul.mubr.f32.gmra.mrb[0].mxu0 %v395
      %v1268 = vpop.f32.mrb[0].mxu0
      %v1269 = vadd.f32 %v594, %v1268
      %v1270 = vpop.f32.mrb[0].mxu0
      %1271 = vmatprep.mubr.f32.mxu0 %v399
      %1272 = vmatmul.mubr.f32.gmra.mrb[0].mxu0 %v398
      %v1273 = vpop.f32.mrb[0].mxu0
      %v1274 = vadd.f32 %v594, %v1273
      %v1275 = vpop.f32.mrb[0].mxu0
      %1276 = vmatprep.mubr.f32.mxu0 %v402
      %1277 = vmatmul.mubr.f32.gmra.mrb[0].mxu0 %v401
      %v1278 = vpop.f32.mrb[0].mxu0
      %v1279 = vadd.f32 %v594, %v1278
      %v1280 = vpop.f32.mrb[0].mxu0
      %1281 = vmatprep.mubr.f32.mxu0 %v405
      %1282 = vmatmul.mubr.f32.gmra.mrb[0].mxu0 %v404
      %v1283 = vpop.f32.mrb[0].mxu0
      %v1284 = vadd.f32 %v594, %v1283
      %v1285 = vpop.f32.mrb[0].mxu0
      %1286 = vmatprep.mubr.f32.mxu0 %v408
      %1287 = vmatmul.mubr.f32.gmra.mrb[0].mxu0 %v407
      %v1288 = vpop.f32.mrb[0].mxu0
      %v1289 = vadd.f32 %v594, %v1288
      %v1290 = vpop.f32.mrb[0].mxu0
      %1291 = vmatprep.mubr.f32.mxu0 %v411
      %1292 = vmatmul.mubr.f32.gmra.mrb[0].mxu0 %v410
      %v1293 = vpop.f32.mrb[0].mxu0
      %v1294 = vadd.f32 %v594, %v1293
      %v1295 = vpop.f32.mrb[0].mxu0
      %1296 = vmatprep.mubr.f32.mxu0 %v414
      %1297 = vmatmul.mubr.f32.gmra.mrb[0].mxu0 %v413
      %v1298 = vpop.f32.mrb[0].mxu0
      %v1299 = vadd.f32 %v594, %v1298
      %v1300 = vpop.f32.mrb[0].mxu0
      %1301 = vmatprep.mubr.f32.mxu0 %v417
      %1302 = vmatmul.mubr.f32.gmra.mrb[0].mxu0 %v416
      %v1303 = vpop.f32.mrb[0].mxu0
      %v1304 = vadd.f32 %v594, %v1303
      %v1305 = vpop.f32.mrb[0].mxu0
      %1306 = vmatprep.mubr.f32.mxu0 %v420
      %1307 = vmatmul.mubr.f32.gmra.mrb[0].mxu0 %v419
      %v1308 = vpop.f32.mrb[0].mxu0
      %v1309 = vadd.f32 %v594, %v1308
      %v1310 = vpop.f32.mrb[0].mxu0
      %1311 = vmatprep.mubr.f32.mxu0 %v423
      %1312 = vmatmul.mubr.f32.gmra.mrb[0].mxu0 %v422
      %v1313 = vpop.f32.mrb[0].mxu0
      %v1314 = vadd.f32 %v594, %v1313
      %v1315 = vpop.f32.mrb[0].mxu0
      %1316 = vmatprep.mubr.f32.mxu0 %v426
      %1317 = vmatmul.mubr.f32.gmra.mrb[0].mxu0 %v425
      %v1318 = vpop.f32.mrb[0].mxu0
      %v1319 = vadd.f32 %v594, %v1318
      %v1320 = vpop.f32.mrb[0].mxu0
      %1321 = vmatprep.mubr.f32.mxu0 %v429
      %1322 = vmatmul.mubr.f32.gmra.mrb[0].mxu0 %v428
      %v1323 = vpop.f32.mrb[0].mxu0
      %v1324 = vadd.f32 %v594, %v1323
      %v1325 = vpop.f32.mrb[0].mxu0
      %1326 = vmatprep.mubr.f32.mxu0 %v432
      %1327 = vmatmul.mubr.f32.gmra.mrb[0].mxu0 %v431
      %v1328 = vpop.f32.mrb[0].mxu0
      %v1329 = vadd.f32 %v594, %v1328
      %v1330 = vpop.f32.mrb[0].mxu0
      %1331 = vmatprep.mubr.f32.mxu0 %v435
      %1332 = vmatmul.mubr.f32.gmra.mrb[0].mxu0 %v434
      %v1333 = vpop.f32.mrb[0].mxu0
      %v1334 = vadd.f32 %v594, %v1333
      %v1335 = vpop.f32.mrb[0].mxu0
      %1336 = vdwg.mxu0
      %1337 = vmatprep.subr.mxu0 0.0
      %1338 = vmatpush1.msra.mxu0 %v535
      %1339 = vmatprep.subr.mxu0 0.0
      %1340 = vmatpush1.msra.mxu0 %v538
      %1341 = vmatprep.subr.mxu0 0.0
      %1342 = vmatpush1.msra.mxu0 %v541
      %1343 = vmatprep.subr.mxu0 0.0
      %1344 = vmatpush1.msra.mxu0 %v544
      %1345 = vmatprep.subr.mxu0 0.0
      %1346 = vmatpush1.msra.mxu0 %v547
      %1347 = vmatprep.subr.mxu0 0.0
      %1348 = vmatpush1.msra.mxu0 %v550
      %1349 = vmatprep.subr.mxu0 0.0
      %1350 = vmatpush1.msra.mxu0 %v553
      %1351 = vmatprep.subr.mxu0 0.0
      %1352 = vmatpush1.msra.mxu0 %v556
      %1353 = vmatprep.subr.mxu0 0.0
      %1354 = vmatpush1.msra.mxu0 %v559
      %1355 = vmatprep.subr.mxu0 0.0
      %1356 = vmatpush1.msra.mxu0 %v562
      %1357 = vmatprep.subr.mxu0 0.0
      %1358 = vmatpush1.msra.mxu0 %v565
      %1359 = vmatprep.subr.mxu0 0.0
      %1360 = vmatpush1.msra.mxu0 %v568
      %1361 = vmatprep.subr.mxu0 0.0
      %1362 = vmatpush1.msra.mxu0 %v571
      %1363 = vmatprep.subr.mxu0 0.0
      %1364 = vmatpush1.msra.mxu0 %v574
      %1365 = vmatprep.subr.mxu0 0.0
      %1366 = vmatpush1.msra.mxu0 %v577
      %1367 = vmatprep.subr.mxu0 0.0
      %1368 = vmatpush1.msra.mxu0 %v580
      %1369 = vmatprep.subr.mxu0 0.0
      %1370 = vmatpush1.msra.mxu0 0.0
      %1371 = vmatprep.subr.mxu0 0.0
      %1372 = vmatpush1.msra.mxu0 0.0
      %1373 = vmatprep.subr.mxu0 0.0
      %1374 = vmatpush1.msra.mxu0 0.0
      %1375 = vmatprep.subr.mxu0 0.0
      %1376 = vmatpush1.msra.mxu0 0.0
      %1377 = vmatprep.subr.mxu0 0.0
      %1378 = vmatpush1.msra.mxu0 0.0
      %1379 = vmatprep.subr.mxu0 0.0
      %1380 = vmatpush1.msra.mxu0 0.0
      %1381 = vmatprep.subr.mxu0 0.0
      %1382 = vmatpush1.msra.mxu0 0.0
      %1383 = vmatprep.subr.mxu0 0.0
      %1384 = vmatpush1.msra.mxu0 0.0
      %1385 = vmatprep.subr.mxu0 0.0
      %1386 = vmatpush1.msra.mxu0 0.0
      %1387 = vmatprep.subr.mxu0 0.0
      %1388 = vmatpush1.msra.mxu0 0.0
      %1389 = vmatprep.subr.mxu0 0.0
      %1390 = vmatpush1.msra.mxu0 0.0
      %1391 = vmatprep.subr.mxu0 0.0
      %1392 = vmatpush1.msra.mxu0 0.0
      %1393 = vmatprep.subr.mxu0 0.0
      %1394 = vmatpush1.msra.mxu0 0.0
      %1395 = vmatprep.subr.mxu0 0.0
      %1396 = vmatpush1.msra.mxu0 0.0
      %1397 = vmatprep.subr.mxu0 0.0
      %1398 = vmatpush1.msra.mxu0 0.0
      %1399 = vmatprep.subr.mxu0 0.0
      %1400 = vmatpush1.msra.mxu0 0.0
      %1401 = vmatprep.mubr.f32.mxu0 0.0
      %1402 = vmatmul.mubr.f32.gmra.mrb[0].mxu0 %v343
      %v1403 = vpop.f32.mrb[0].mxu0
      %v1404 = vadd.f32 %v1179, %v1403
      %v1405 = vpop.f32.mrb[0].mxu0
      %1406 = vmatprep.mubr.f32.mxu0 0.0
      %1407 = vmatmul.mubr.f32.gmra.mrb[0].mxu0 %v346
      %v1408 = vpop.f32.mrb[0].mxu0
      %v1409 = vadd.f32 %v1184, %v1408
      %v1410 = vpop.f32.mrb[0].mxu0
      %1411 = vmatprep.mubr.f32.mxu0 0.0
      %1412 = vmatmul.mubr.f32.gmra.mrb[0].mxu0 %v349
      %v1413 = vpop.f32.mrb[0].mxu0
      %v1414 = vadd.f32 %v1189, %v1413
      %v1415 = vpop.f32.mrb[0].mxu0
      %1416 = vmatprep.mubr.f32.mxu0 0.0
      %1417 = vmatmul.mubr.f32.gmra.mrb[0].mxu0 %v352
      %v1418 = vpop.f32.mrb[0].mxu0
      %v1419 = vadd.f32 %v1194, %v1418
      %v1420 = vpop.f32.mrb[0].mxu0
      %1421 = vmatprep.mubr.f32.mxu0 0.0
      %1422 = vmatmul.mubr.f32.gmra.mrb[0].mxu0 %v355
      %v1423 = vpop.f32.mrb[0].mxu0
      %v1424 = vadd.f32 %v1199, %v1423
      %v1425 = vpop.f32.mrb[0].mxu0
      %1426 = vmatprep.mubr.f32.mxu0 0.0
      %1427 = vmatmul.mubr.f32.gmra.mrb[0].mxu0 %v358
      %v1428 = vpop.f32.mrb[0].mxu0
      %v1429 = vadd.f32 %v1204, %v1428
      %v1430 = vpop.f32.mrb[0].mxu0
      %1431 = vmatprep.mubr.f32.mxu0 0.0
      %1432 = vmatmul.mubr.f32.gmra.mrb[0].mxu0 %v361
      %v1433 = vpop.f32.mrb[0].mxu0
      %v1434 = vadd.f32 %v1209, %v1433
      %v1435 = vpop.f32.mrb[0].mxu0
      %1436 = vmatprep.mubr.f32.mxu0 0.0
      %1437 = vmatmul.mubr.f32.gmra.mrb[0].mxu0 %v364
      %v1438 = vpop.f32.mrb[0].mxu0
      %v1439 = vadd.f32 %v1214, %v1438
      %v1440 = vpop.f32.mrb[0].mxu0
      %1441 = vmatprep.mubr.f32.mxu0 0.0
      %1442 = vmatmul.mubr.f32.gmra.mrb[0].mxu0 %v367
      %v1443 = vpop.f32.mrb[0].mxu0
      %v1444 = vadd.f32 %v1219, %v1443
      %v1445 = vpop.f32.mrb[0].mxu0
      %1446 = vmatprep.mubr.f32.mxu0 0.0
      %1447 = vmatmul.mubr.f32.gmra.mrb[0].mxu0 %v370
      %v1448 = vpop.f32.mrb[0].mxu0
      %v1449 = vadd.f32 %v1224, %v1448
      %v1450 = vpop.f32.mrb[0].mxu0
      %1451 = vmatprep.mubr.f32.mxu0 0.0
      %1452 = vmatmul.mubr.f32.gmra.mrb[0].mxu0 %v373
      %v1453 = vpop.f32.mrb[0].mxu0
      %v1454 = vadd.f32 %v1229, %v1453
      %v1455 = vpop.f32.mrb[0].mxu0
      %1456 = vmatprep.mubr.f32.mxu0 0.0
      %1457 = vmatmul.mubr.f32.gmra.mrb[0].mxu0 %v376
      %v1458 = vpop.f32.mrb[0].mxu0
      %v1459 = vadd.f32 %v1234, %v1458
      %v1460 = vpop.f32.mrb[0].mxu0
      %1461 = vmatprep.mubr.f32.mxu0 0.0
      %1462 = vmatmul.mubr.f32.gmra.mrb[0].mxu0 %v379
      %v1463 = vpop.f32.mrb[0].mxu0
      %v1464 = vadd.f32 %v1239, %v1463
      %v1465 = vpop.f32.mrb[0].mxu0
      %1466 = vmatprep.mubr.f32.mxu0 0.0
      %1467 = vmatmul.mubr.f32.gmra.mrb[0].mxu0 %v382
      %v1468 = vpop.f32.mrb[0].mxu0
      %v1469 = vadd.f32 %v1244, %v1468
      %v1470 = vpop.f32.mrb[0].mxu0
      %1471 = vmatprep.mubr.f32.mxu0 0.0
      %1472 = vmatmul.mubr.f32.gmra.mrb[0].mxu0 %v385
      %v1473 = vpop.f32.mrb[0].mxu0
      %v1474 = vadd.f32 %v1249, %v1473
      %v1475 = vpop.f32.mrb[0].mxu0
      %1476 = vmatprep.mubr.f32.mxu0 0.0
      %1477 = vmatmul.mubr.f32.gmra.mrb[0].mxu0 %v388
      %v1478 = vpop.f32.mrb[0].mxu0
      %v1479 = vadd.f32 %v1254, %v1478
      %v1480 = vpop.f32.mrb[0].mxu0
      %1481 = vmatprep.mubr.f32.mxu0 0.0
      %1482 = vmatmul.mubr.f32.gmra.mrb[0].mxu0 %v391
      %v1483 = vpop.f32.mrb[0].mxu0
      %v1484 = vadd.f32 %v1259, %v1483
      %v1485 = vpop.f32.mrb[0].mxu0
      %1486 = vmatprep.mubr.f32.mxu0 0.0
      %1487 = vmatmul.mubr.f32.gmra.mrb[0].mxu0 %v394
      %v1488 = vpop.f32.mrb[0].mxu0
      %v1489 = vadd.f32 %v1264, %v1488
      %v1490 = vpop.f32.mrb[0].mxu0
      %1491 = vmatprep.mubr.f32.mxu0 0.0
      %1492 = vmatmul.mubr.f32.gmra.mrb[0].mxu0 %v397
      %v1493 = vpop.f32.mrb[0].mxu0
      %v1494 = vadd.f32 %v1269, %v1493
      %v1495 = vpop.f32.mrb[0].mxu0
      %1496 = vmatprep.mubr.f32.mxu0 0.0
      %1497 = vmatmul.mubr.f32.gmra.mrb[0].mxu0 %v400
      %v1498 = vpop.f32.mrb[0].mxu0
      %v1499 = vadd.f32 %v1274, %v1498
      %v1500 = vpop.f32.mrb[0].mxu0
      %1501 = vmatprep.mubr.f32.mxu0 0.0
      %1502 = vmatmul.mubr.f32.gmra.mrb[0].mxu0 %v403
      %v1503 = vpop.f32.mrb[0].mxu0
      %v1504 = vadd.f32 %v1279, %v1503
      %v1505 = vpop.f32.mrb[0].mxu0
      %1506 = vmatprep.mubr.f32.mxu0 0.0
      %1507 = vmatmul.mubr.f32.gmra.mrb[0].mxu0 %v406
      %v1508 = vpop.f32.mrb[0].mxu0
      %v1509 = vadd.f32 %v1284, %v1508
      %v1510 = vpop.f32.mrb[0].mxu0
      %1511 = vmatprep.mubr.f32.mxu0 0.0
      %1512 = vmatmul.mubr.f32.gmra.mrb[0].mxu0 %v409
      %v1513 = vpop.f32.mrb[0].mxu0
      %v1514 = vadd.f32 %v1289, %v1513
      %v1515 = vpop.f32.mrb[0].mxu0
      %1516 = vmatprep.mubr.f32.mxu0 0.0
      %1517 = vmatmul.mubr.f32.gmra.mrb[0].mxu0 %v412
      %v1518 = vpop.f32.mrb[0].mxu0
      %v1519 = vadd.f32 %v1294, %v1518
      %v1520 = vpop.f32.mrb[0].mxu0
      %1521 = vmatprep.mubr.f32.mxu0 0.0
      %1522 = vmatmul.mubr.f32.gmra.mrb[0].mxu0 %v415
      %v1523 = vpop.f32.mrb[0].mxu0
      %v1524 = vadd.f32 %v1299, %v1523
      %v1525 = vpop.f32.mrb[0].mxu0
      %1526 = vmatprep.mubr.f32.mxu0 0.0
      %1527 = vmatmul.mubr.f32.gmra.mrb[0].mxu0 %v418
      %v1528 = vpop.f32.mrb[0].mxu0
      %v1529 = vadd.f32 %v1304, %v1528
      %v1530 = vpop.f32.mrb[0].mxu0
      %1531 = vmatprep.mubr.f32.mxu0 0.0
      %1532 = vmatmul.mubr.f32.gmra.mrb[0].mxu0 %v421
      %v1533 = vpop.f32.mrb[0].mxu0
      %v1534 = vadd.f32 %v1309, %v1533
      %v1535 = vpop.f32.mrb[0].mxu0
      %1536 = vmatprep.mubr.f32.mxu0 0.0
      %1537 = vmatmul.mubr.f32.gmra.mrb[0].mxu0 %v424
      %v1538 = vpop.f32.mrb[0].mxu0
      %v1539 = vadd.f32 %v1314, %v1538
      %v1540 = vpop.f32.mrb[0].mxu0
      %1541 = vmatprep.mubr.f32.mxu0 0.0
      %1542 = vmatmul.mubr.f32.gmra.mrb[0].mxu0 %v427
      %v1543 = vpop.f32.mrb[0].mxu0
      %v1544 = vadd.f32 %v1319, %v1543
      %v1545 = vpop.f32.mrb[0].mxu0
      %1546 = vmatprep.mubr.f32.mxu0 0.0
      %1547 = vmatmul.mubr.f32.gmra.mrb[0].mxu0 %v430
      %v1548 = vpop.f32.mrb[0].mxu0
      %v1549 = vadd.f32 %v1324, %v1548
      %v1550 = vpop.f32.mrb[0].mxu0
      %1551 = vmatprep.mubr.f32.mxu0 0.0
      %1552 = vmatmul.mubr.f32.gmra.mrb[0].mxu0 %v433
      %v1553 = vpop.f32.mrb[0].mxu0
      %v1554 = vadd.f32 %v1329, %v1553
      %v1555 = vpop.f32.mrb[0].mxu0
      %1556 = vmatprep.mubr.f32.mxu0 0.0
      %1557 = vmatmul.mubr.f32.gmra.mrb[0].mxu0 %v436
      %v1558 = vpop.f32.mrb[0].mxu0
      %v1559 = vadd.f32 %v1334, %v1558
      %v1560 = vpop.f32.mrb[0].mxu0
      %1561 = vdwg.mxu0
      %v1562 = vmax.f32 %v922, 0.0
      %v1563 = vmax.f32 %v924, 0.0
      %v1564 = vmax.f32 %v1404, 0.0
      %v1565 = vmax.f32 %v928, 0.0
      %v1566 = vmax.f32 %v930, 0.0
      %v1567 = vmax.f32 %v1409, 0.0
      %v1568 = vmax.f32 %v934, 0.0
      %v1569 = vmax.f32 %v936, 0.0
      %v1570 = vmax.f32 %v1414, 0.0
      %v1571 = vmax.f32 %v940, 0.0
      %v1572 = vmax.f32 %v942, 0.0
      %v1573 = vmax.f32 %v1419, 0.0
      %v1574 = vmax.f32 %v946, 0.0
      %v1575 = vmax.f32 %v948, 0.0
      %v1576 = vmax.f32 %v1424, 0.0
      %v1577 = vmax.f32 %v952, 0.0
      %v1578 = vmax.f32 %v954, 0.0
      %v1579 = vmax.f32 %v1429, 0.0
      %v1580 = vmax.f32 %v958, 0.0
      %v1581 = vmax.f32 %v960, 0.0
      %v1582 = vmax.f32 %v1434, 0.0
      %v1583 = vmax.f32 %v964, 0.0
      %v1584 = vmax.f32 %v966, 0.0
      %v1585 = vmax.f32 %v1439, 0.0
      %v1586 = vmax.f32 %v970, 0.0
      %v1587 = vmax.f32 %v972, 0.0
      %v1588 = vmax.f32 %v1444, 0.0
      %v1589 = vmax.f32 %v976, 0.0
      %v1590 = vmax.f32 %v978, 0.0
      %v1591 = vmax.f32 %v1449, 0.0
      %v1592 = vmax.f32 %v982, 0.0
      %v1593 = vmax.f32 %v984, 0.0
      %v1594 = vmax.f32 %v1454, 0.0
      %v1595 = vmax.f32 %v988, 0.0
      %v1596 = vmax.f32 %v990, 0.0
      %v1597 = vmax.f32 %v1459, 0.0
      %v1598 = vmax.f32 %v994, 0.0
      %v1599 = vmax.f32 %v996, 0.0
      %v1600 = vmax.f32 %v1464, 0.0
      %v1601 = vmax.f32 %v1000, 0.0
      %v1602 = vmax.f32 %v1002, 0.0
      %v1603 = vmax.f32 %v1469, 0.0
      %v1604 = vmax.f32 %v1006, 0.0
      %v1605 = vmax.f32 %v1008, 0.0
      %v1606 = vmax.f32 %v1474, 0.0
      %v1607 = vmax.f32 %v1012, 0.0
      %v1608 = vmax.f32 %v1014, 0.0
      %v1609 = vmax.f32 %v1479, 0.0
      %v1610 = vmax.f32 %v1018, 0.0
      %v1611 = vmax.f32 %v1020, 0.0
      %v1612 = vmax.f32 %v1484, 0.0
      %v1613 = vmax.f32 %v1024, 0.0
      %v1614 = vmax.f32 %v1026, 0.0
      %v1615 = vmax.f32 %v1489, 0.0
      %v1616 = vmax.f32 %v1030, 0.0
      %v1617 = vmax.f32 %v1032, 0.0
      %v1618 = vmax.f32 %v1494, 0.0
      %v1619 = vmax.f32 %v1036, 0.0
      %v1620 = vmax.f32 %v1038, 0.0
      %v1621 = vmax.f32 %v1499, 0.0
      %v1622 = vmax.f32 %v1042, 0.0
      %v1623 = vmax.f32 %v1044, 0.0
      %v1624 = vmax.f32 %v1504, 0.0
      %v1625 = vmax.f32 %v1048, 0.0
      %v1626 = vmax.f32 %v1050, 0.0
      %v1627 = vmax.f32 %v1509, 0.0
      %v1628 = vmax.f32 %v1054, 0.0
      %v1629 = vmax.f32 %v1056, 0.0
      %v1630 = vmax.f32 %v1514, 0.0
      %v1631 = vmax.f32 %v1060, 0.0
      %v1632 = vmax.f32 %v1062, 0.0
      %v1633 = vmax.f32 %v1519, 0.0
      %v1634 = vmax.f32 %v1066, 0.0
      %v1635 = vmax.f32 %v1068, 0.0
      %v1636 = vmax.f32 %v1524, 0.0
      %v1637 = vmax.f32 %v1072, 0.0
      %v1638 = vmax.f32 %v1074, 0.0
      %v1639 = vmax.f32 %v1529, 0.0
      %v1640 = vmax.f32 %v1078, 0.0
      %v1641 = vmax.f32 %v1080, 0.0
      %v1642 = vmax.f32 %v1534, 0.0
      %v1643 = vmax.f32 %v1084, 0.0
      %v1644 = vmax.f32 %v1086, 0.0
      %v1645 = vmax.f32 %v1539, 0.0
      %v1646 = vmax.f32 %v1090, 0.0
      %v1647 = vmax.f32 %v1092, 0.0
      %v1648 = vmax.f32 %v1544, 0.0
      %v1649 = vmax.f32 %v1096, 0.0
      %v1650 = vmax.f32 %v1098, 0.0
      %v1651 = vmax.f32 %v1549, 0.0
      %v1652 = vmax.f32 %v1102, 0.0
      %v1653 = vmax.f32 %v1104, 0.0
      %v1654 = vmax.f32 %v1554, 0.0
      %v1655 = vmax.f32 %v1108, 0.0
      %v1656 = vmax.f32 %v1110, 0.0
      %v1657 = vmax.f32 %v1559, 0.0
      %v1658 = vld [vmem:[%s3] sm:$0xff]
      %v1659 = vld [vmem:[%s3 + $0x8] sm:$0xff]
      %v1660 = vld [vmem:[%s3 + $0x10] sm:$0xff]
      %v1661 = vld [vmem:[%s3 + $0x18] sm:$0xff]
      %v1662 = vld [vmem:[%s3 + $0x20] sm:$0xff]
      %v1663 = vld [vmem:[%s3 + $0x28] sm:$0xff]
      %v1664 = vld [vmem:[%s3 + $0x30] sm:$0xff]
      %v1665 = vld [vmem:[%s3 + $0x38] sm:$0xff]
      %v1666 = vld [vmem:[%s3 + $0x40] sm:$0xff]
      %v1667 = vld [vmem:[%s3 + $0x48] sm:$0xff]
      %v1668 = vld [vmem:[%s3 + $0x50] sm:$0xff]
      %v1669 = vld [vmem:[%s3 + $0x58] sm:$0xff]
      %v1670 = vld [vmem:[%s3 + $0x60] sm:$0xff]
      %v1671 = vld [vmem:[%s3 + $0x68] sm:$0xff]
      %v1672 = vld [vmem:[%s3 + $0x70] sm:$0xff]
      %v1673 = vld [vmem:[%s3 + $0x78] sm:$0xff]
      %v1674 = vld [vmem:[%s3 + $0x80] sm:$0xff]
      %v1675 = vld [vmem:[%s3 + $0x88] sm:$0xff]
      %v1676 = vld [vmem:[%s3 + $0x90] sm:$0xff]
      %v1677 = vld [vmem:[%s3 + $0x98] sm:$0xff]
      %v1678 = vld [vmem:[%s3 + $0xa0] sm:$0xff]
      %v1679 = vld [vmem:[%s3 + $0xa8] sm:$0xff]
      %v1680 = vld [vmem:[%s3 + $0xb0] sm:$0xff]
      %v1681 = vld [vmem:[%s3 + $0xb8] sm:$0xff]
      %v1682 = vld [vmem:[%s3 + $0xc0] sm:$0xff]
      %v1683 = vld [vmem:[%s3 + $0xc8] sm:$0xff]
      %v1684 = vld [vmem:[%s3 + $0xd0] sm:$0xff]
      %v1685 = vld [vmem:[%s3 + $0xd8] sm:$0xff]
      %v1686 = vld [vmem:[%s3 + $0xe0] sm:$0xff]
      %v1687 = vld [vmem:[%s3 + $0xe8] sm:$0xff]
      %v1688 = vld [vmem:[%s3 + $0xf0] sm:$0xff]
      %v1689 = vld [vmem:[%s3 + $0xf8] sm:$0xff]
      %v1690 = vld [vmem:[%s3 + $0x100] sm:$0xff]
      %v1691 = vld [vmem:[%s3 + $0x108] sm:$0xff]
      %v1692 = vld [vmem:[%s3 + $0x110] sm:$0xff]
      %v1693 = vld [vmem:[%s3 + $0x118] sm:$0xff]
      %v1694 = vld [vmem:[%s3 + $0x120] sm:$0xff]
      %v1695 = vld [vmem:[%s3 + $0x128] sm:$0xff]
      %v1696 = vld [vmem:[%s3 + $0x130] sm:$0xff]
      %v1697 = vld [vmem:[%s3 + $0x138] sm:$0xff]
      %v1698 = vld [vmem:[%s3 + $0x140] sm:$0xff]
      %v1699 = vld [vmem:[%s3 + $0x148] sm:$0xff]
      %v1700 = vld [vmem:[%s3 + $0x150] sm:$0xff]
      %v1701 = vld [vmem:[%s3 + $0x158] sm:$0xff]
      %v1702 = vld [vmem:[%s3 + $0x160] sm:$0xff]
      %v1703 = vld [vmem:[%s3 + $0x168] sm:$0xff]
      %v1704 = vld [vmem:[%s3 + $0x170] sm:$0xff]
      %v1705 = vld [vmem:[%s3 + $0x178] sm:$0xff]
      %v1706 = vld [vmem:[%s4] sm:$0x1]
      %v1708 = vlaneseq
      %v1709 = vshrl.u32 %v1708, 7
      %v1710 = vsub.s32 0, %v1709
      %v1711 = vrot.slane %v1706, %v1710
      %1713 = vmatprep.subr.mxu0 0.0
      %1714 = vmatpush1.msra.mxu0 %v1658
      %1715 = vmatprep.subr.mxu0 0.0
      %1716 = vmatpush1.msra.mxu0 %v1659
      %1717 = vmatprep.subr.mxu0 0.0
      %1718 = vmatpush1.msra.mxu0 %v1660
      %1719 = vmatprep.subr.mxu0 0.0
      %1720 = vmatpush1.msra.mxu0 %v1661
      %1721 = vmatprep.subr.mxu0 0.0
      %1722 = vmatpush1.msra.mxu0 %v1662
      %1723 = vmatprep.subr.mxu0 0.0
      %1724 = vmatpush1.msra.mxu0 %v1663
      %1725 = vmatprep.subr.mxu0 0.0
      %1726 = vmatpush1.msra.mxu0 %v1664
      %1727 = vmatprep.subr.mxu0 0.0
      %1728 = vmatpush1.msra.mxu0 %v1665
      %1729 = vmatprep.subr.mxu0 0.0
      %1730 = vmatpush1.msra.mxu0 %v1666
      %1731 = vmatprep.subr.mxu0 0.0
      %1732 = vmatpush1.msra.mxu0 %v1667
      %1733 = vmatprep.subr.mxu0 0.0
      %1734 = vmatpush1.msra.mxu0 %v1668
      %1735 = vmatprep.subr.mxu0 0.0
      %1736 = vmatpush1.msra.mxu0 %v1669
      %1737 = vmatprep.subr.mxu0 0.0
      %1738 = vmatpush1.msra.mxu0 %v1670
      %1739 = vmatprep.subr.mxu0 0.0
      %1740 = vmatpush1.msra.mxu0 %v1671
      %1741 = vmatprep.subr.mxu0 0.0
      %1742 = vmatpush1.msra.mxu0 %v1672
      %1743 = vmatprep.subr.mxu0 0.0
      %1744 = vmatpush1.msra.mxu0 %v1673
      %1745 = vmatprep.subr.mxu0 0.0
      %1746 = vmatpush1.msra.mxu0 %v1674
      %1747 = vmatprep.subr.mxu0 0.0
      %1748 = vmatpush1.msra.mxu0 %v1675
      %1749 = vmatprep.subr.mxu0 0.0
      %1750 = vmatpush1.msra.mxu0 %v1676
      %1751 = vmatprep.subr.mxu0 0.0
      %1752 = vmatpush1.msra.mxu0 %v1677
      %1753 = vmatprep.subr.mxu0 0.0
      %1754 = vmatpush1.msra.mxu0 %v1678
      %1755 = vmatprep.subr.mxu0 0.0
      %1756 = vmatpush1.msra.mxu0 %v1679
      %1757 = vmatprep.subr.mxu0 0.0
      %1758 = vmatpush1.msra.mxu0 %v1680
      %1759 = vmatprep.subr.mxu0 0.0
      %1760 = vmatpush1.msra.mxu0 %v1681
      %1761 = vmatprep.subr.mxu0 0.0
      %1762 = vmatpush1.msra.mxu0 %v1682
      %1763 = vmatprep.subr.mxu0 0.0
      %1764 = vmatpush1.msra.mxu0 %v1683
      %1765 = vmatprep.subr.mxu0 0.0
      %1766 = vmatpush1.msra.mxu0 %v1684
      %1767 = vmatprep.subr.mxu0 0.0
      %1768 = vmatpush1.msra.mxu0 %v1685
      %1769 = vmatprep.subr.mxu0 0.0
      %1770 = vmatpush1.msra.mxu0 %v1686
      %1771 = vmatprep.subr.mxu0 0.0
      %1772 = vmatpush1.msra.mxu0 %v1687
      %1773 = vmatprep.subr.mxu0 0.0
      %1774 = vmatpush1.msra.mxu0 %v1688
      %1775 = vmatprep.subr.mxu0 0.0
      %1776 = vmatpush1.msra.mxu0 %v1689
      %1777 = vmatprep.mubr.f32.mxu0 %v1563
      %1778 = vmatmul.mubr.f32.gmra.mrb[0].mxu0 %v1562
      %v1779 = vpop.f32.mrb[0].mxu0
      %v1780 = vadd.f32 %v1711, %v1779
      %v1781 = vpop.f32.mrb[0].mxu0
      %1782 = vmatprep.mubr.f32.mxu0 %v1566
      %1783 = vmatmul.mubr.f32.gmra.mrb[0].mxu0 %v1565
      %v1784 = vpop.f32.mrb[0].mxu0
      %v1785 = vadd.f32 %v1711, %v1784
      %v1786 = vpop.f32.mrb[0].mxu0
      %1787 = vmatprep.mubr.f32.mxu0 %v1569
      %1788 = vmatmul.mubr.f32.gmra.mrb[0].mxu0 %v1568
      %v1789 = vpop.f32.mrb[0].mxu0
      %v1790 = vadd.f32 %v1711, %v1789
      %v1791 = vpop.f32.mrb[0].mxu0
      %1792 = vmatprep.mubr.f32.mxu0 %v1572
      %1793 = vmatmul.mubr.f32.gmra.mrb[0].mxu0 %v1571
      %v1794 = vpop.f32.mrb[0].mxu0
      %v1795 = vadd.f32 %v1711, %v1794
      %v1796 = vpop.f32.mrb[0].mxu0
      %1797 = vmatprep.mubr.f32.mxu0 %v1575
      %1798 = vmatmul.mubr.f32.gmra.mrb[0].mxu0 %v1574
      %v1799 = vpop.f32.mrb[0].mxu0
      %v1800 = vadd.f32 %v1711, %v1799
      %v1801 = vpop.f32.mrb[0].mxu0
      %1802 = vmatprep.mubr.f32.mxu0 %v1578
      %1803 = vmatmul.mubr.f32.gmra.mrb[0].mxu0 %v1577
      %v1804 = vpop.f32.mrb[0].mxu0
      %v1805 = vadd.f32 %v1711, %v1804
      %v1806 = vpop.f32.mrb[0].mxu0
      %1807 = vmatprep.mubr.f32.mxu0 %v1581
      %1808 = vmatmul.mubr.f32.gmra.mrb[0].mxu0 %v1580
      %v1809 = vpop.f32.mrb[0].mxu0
      %v1810 = vadd.f32 %v1711, %v1809
      %v1811 = vpop.f32.mrb[0].mxu0
      %1812 = vmatprep.mubr.f32.mxu0 %v1584
      %1813 = vmatmul.mubr.f32.gmra.mrb[0].mxu0 %v1583
      %v1814 = vpop.f32.mrb[0].mxu0
      %v1815 = vadd.f32 %v1711, %v1814
      %v1816 = vpop.f32.mrb[0].mxu0
      %1817 = vmatprep.mubr.f32.mxu0 %v1587
      %1818 = vmatmul.mubr.f32.gmra.mrb[0].mxu0 %v1586
      %v1819 = vpop.f32.mrb[0].mxu0
      %v1820 = vadd.f32 %v1711, %v1819
      %v1821 = vpop.f32.mrb[0].mxu0
      %1822 = vmatprep.mubr.f32.mxu0 %v1590
      %1823 = vmatmul.mubr.f32.gmra.mrb[0].mxu0 %v1589
      %v1824 = vpop.f32.mrb[0].mxu0
      %v1825 = vadd.f32 %v1711, %v1824
      %v1826 = vpop.f32.mrb[0].mxu0
      %1827 = vmatprep.mubr.f32.mxu0 %v1593
      %1828 = vmatmul.mubr.f32.gmra.mrb[0].mxu0 %v1592
      %v1829 = vpop.f32.mrb[0].mxu0
      %v1830 = vadd.f32 %v1711, %v1829
      %v1831 = vpop.f32.mrb[0].mxu0
      %1832 = vmatprep.mubr.f32.mxu0 %v1596
      %1833 = vmatmul.mubr.f32.gmra.mrb[0].mxu0 %v1595
      %v1834 = vpop.f32.mrb[0].mxu0
      %v1835 = vadd.f32 %v1711, %v1834
      %v1836 = vpop.f32.mrb[0].mxu0
      %1837 = vmatprep.mubr.f32.mxu0 %v1599
      %1838 = vmatmul.mubr.f32.gmra.mrb[0].mxu0 %v1598
      %v1839 = vpop.f32.mrb[0].mxu0
      %v1840 = vadd.f32 %v1711, %v1839
      %v1841 = vpop.f32.mrb[0].mxu0
      %1842 = vmatprep.mubr.f32.mxu0 %v1602
      %1843 = vmatmul.mubr.f32.gmra.mrb[0].mxu0 %v1601
      %v1844 = vpop.f32.mrb[0].mxu0
      %v1845 = vadd.f32 %v1711, %v1844
      %v1846 = vpop.f32.mrb[0].mxu0
      %1847 = vmatprep.mubr.f32.mxu0 %v1605
      %1848 = vmatmul.mubr.f32.gmra.mrb[0].mxu0 %v1604
      %v1849 = vpop.f32.mrb[0].mxu0
      %v1850 = vadd.f32 %v1711, %v1849
      %v1851 = vpop.f32.mrb[0].mxu0
      %1852 = vmatprep.mubr.f32.mxu0 %v1608
      %1853 = vmatmul.mubr.f32.gmra.mrb[0].mxu0 %v1607
      %v1854 = vpop.f32.mrb[0].mxu0
      %v1855 = vadd.f32 %v1711, %v1854
      %v1856 = vpop.f32.mrb[0].mxu0
      %1857 = vmatprep.mubr.f32.mxu0 %v1611
      %1858 = vmatmul.mubr.f32.gmra.mrb[0].mxu0 %v1610
      %v1859 = vpop.f32.mrb[0].mxu0
      %v1860 = vadd.f32 %v1711, %v1859
      %v1861 = vpop.f32.mrb[0].mxu0
      %1862 = vmatprep.mubr.f32.mxu0 %v1614
      %1863 = vmatmul.mubr.f32.gmra.mrb[0].mxu0 %v1613
      %v1864 = vpop.f32.mrb[0].mxu0
      %v1865 = vadd.f32 %v1711, %v1864
      %v1866 = vpop.f32.mrb[0].mxu0
      %1867 = vmatprep.mubr.f32.mxu0 %v1617
      %1868 = vmatmul.mubr.f32.gmra.mrb[0].mxu0 %v1616
      %v1869 = vpop.f32.mrb[0].mxu0
      %v1870 = vadd.f32 %v1711, %v1869
      %v1871 = vpop.f32.mrb[0].mxu0
      %1872 = vmatprep.mubr.f32.mxu0 %v1620
      %1873 = vmatmul.mubr.f32.gmra.mrb[0].mxu0 %v1619
      %v1874 = vpop.f32.mrb[0].mxu0
      %v1875 = vadd.f32 %v1711, %v1874
      %v1876 = vpop.f32.mrb[0].mxu0
      %1877 = vmatprep.mubr.f32.mxu0 %v1623
      %1878 = vmatmul.mubr.f32.gmra.mrb[0].mxu0 %v1622
      %v1879 = vpop.f32.mrb[0].mxu0
      %v1880 = vadd.f32 %v1711, %v1879
      %v1881 = vpop.f32.mrb[0].mxu0
      %1882 = vmatprep.mubr.f32.mxu0 %v1626
      %1883 = vmatmul.mubr.f32.gmra.mrb[0].mxu0 %v1625
      %v1884 = vpop.f32.mrb[0].mxu0
      %v1885 = vadd.f32 %v1711, %v1884
      %v1886 = vpop.f32.mrb[0].mxu0
      %1887 = vmatprep.mubr.f32.mxu0 %v1629
      %1888 = vmatmul.mubr.f32.gmra.mrb[0].mxu0 %v1628
      %v1889 = vpop.f32.mrb[0].mxu0
      %v1890 = vadd.f32 %v1711, %v1889
      %v1891 = vpop.f32.mrb[0].mxu0
      %1892 = vmatprep.mubr.f32.mxu0 %v1632
      %1893 = vmatmul.mubr.f32.gmra.mrb[0].mxu0 %v1631
      %v1894 = vpop.f32.mrb[0].mxu0
      %v1895 = vadd.f32 %v1711, %v1894
      %v1896 = vpop.f32.mrb[0].mxu0
      %1897 = vmatprep.mubr.f32.mxu0 %v1635
      %1898 = vmatmul.mubr.f32.gmra.mrb[0].mxu0 %v1634
      %v1899 = vpop.f32.mrb[0].mxu0
      %v1900 = vadd.f32 %v1711, %v1899
      %v1901 = vpop.f32.mrb[0].mxu0
      %1902 = vmatprep.mubr.f32.mxu0 %v1638
      %1903 = vmatmul.mubr.f32.gmra.mrb[0].mxu0 %v1637
      %v1904 = vpop.f32.mrb[0].mxu0
      %v1905 = vadd.f32 %v1711, %v1904
      %v1906 = vpop.f32.mrb[0].mxu0
      %1907 = vmatprep.mubr.f32.mxu0 %v1641
      %1908 = vmatmul.mubr.f32.gmra.mrb[0].mxu0 %v1640
      %v1909 = vpop.f32.mrb[0].mxu0
      %v1910 = vadd.f32 %v1711, %v1909
      %v1911 = vpop.f32.mrb[0].mxu0
      %1912 = vmatprep.mubr.f32.mxu0 %v1644
      %1913 = vmatmul.mubr.f32.gmra.mrb[0].mxu0 %v1643
      %v1914 = vpop.f32.mrb[0].mxu0
      %v1915 = vadd.f32 %v1711, %v1914
      %v1916 = vpop.f32.mrb[0].mxu0
      %1917 = vmatprep.mubr.f32.mxu0 %v1647
      %1918 = vmatmul.mubr.f32.gmra.mrb[0].mxu0 %v1646
      %v1919 = vpop.f32.mrb[0].mxu0
      %v1920 = vadd.f32 %v1711, %v1919
      %v1921 = vpop.f32.mrb[0].mxu0
      %1922 = vmatprep.mubr.f32.mxu0 %v1650
      %1923 = vmatmul.mubr.f32.gmra.mrb[0].mxu0 %v1649
      %v1924 = vpop.f32.mrb[0].mxu0
      %v1925 = vadd.f32 %v1711, %v1924
      %v1926 = vpop.f32.mrb[0].mxu0
      %1927 = vmatprep.mubr.f32.mxu0 %v1653
      %1928 = vmatmul.mubr.f32.gmra.mrb[0].mxu0 %v1652
      %v1929 = vpop.f32.mrb[0].mxu0
      %v1930 = vadd.f32 %v1711, %v1929
      %v1931 = vpop.f32.mrb[0].mxu0
      %1932 = vmatprep.mubr.f32.mxu0 %v1656
      %1933 = vmatmul.mubr.f32.gmra.mrb[0].mxu0 %v1655
      %v1934 = vpop.f32.mrb[0].mxu0
      %v1935 = vadd.f32 %v1711, %v1934
      %v1936 = vpop.f32.mrb[0].mxu0
      %1937 = vdwg.mxu0
      %1938 = vmatprep.subr.mxu0 0.0
      %1939 = vmatpush1.msra.mxu0 %v1690
      %1940 = vmatprep.subr.mxu0 0.0
      %1941 = vmatpush1.msra.mxu0 %v1691
      %1942 = vmatprep.subr.mxu0 0.0
      %1943 = vmatpush1.msra.mxu0 %v1692
      %1944 = vmatprep.subr.mxu0 0.0
      %1945 = vmatpush1.msra.mxu0 %v1693
      %1946 = vmatprep.subr.mxu0 0.0
      %1947 = vmatpush1.msra.mxu0 %v1694
      %1948 = vmatprep.subr.mxu0 0.0
      %1949 = vmatpush1.msra.mxu0 %v1695
      %1950 = vmatprep.subr.mxu0 0.0
      %1951 = vmatpush1.msra.mxu0 %v1696
      %1952 = vmatprep.subr.mxu0 0.0
      %1953 = vmatpush1.msra.mxu0 %v1697
      %1954 = vmatprep.subr.mxu0 0.0
      %1955 = vmatpush1.msra.mxu0 %v1698
      %1956 = vmatprep.subr.mxu0 0.0
      %1957 = vmatpush1.msra.mxu0 %v1699
      %1958 = vmatprep.subr.mxu0 0.0
      %1959 = vmatpush1.msra.mxu0 %v1700
      %1960 = vmatprep.subr.mxu0 0.0
      %1961 = vmatpush1.msra.mxu0 %v1701
      %1962 = vmatprep.subr.mxu0 0.0
      %1963 = vmatpush1.msra.mxu0 %v1702
      %1964 = vmatprep.subr.mxu0 0.0
      %1965 = vmatpush1.msra.mxu0 %v1703
      %1966 = vmatprep.subr.mxu0 0.0
      %1967 = vmatpush1.msra.mxu0 %v1704
      %1968 = vmatprep.subr.mxu0 0.0
      %1969 = vmatpush1.msra.mxu0 %v1705
      %1970 = vmatprep.subr.mxu0 0.0
      %1971 = vmatpush1.msra.mxu0 0.0
      %1972 = vmatprep.subr.mxu0 0.0
      %1973 = vmatpush1.msra.mxu0 0.0
      %1974 = vmatprep.subr.mxu0 0.0
      %1975 = vmatpush1.msra.mxu0 0.0
      %1976 = vmatprep.subr.mxu0 0.0
      %1977 = vmatpush1.msra.mxu0 0.0
      %1978 = vmatprep.subr.mxu0 0.0
      %1979 = vmatpush1.msra.mxu0 0.0
      %1980 = vmatprep.subr.mxu0 0.0
      %1981 = vmatpush1.msra.mxu0 0.0
      %1982 = vmatprep.subr.mxu0 0.0
      %1983 = vmatpush1.msra.mxu0 0.0
      %1984 = vmatprep.subr.mxu0 0.0
      %1985 = vmatpush1.msra.mxu0 0.0
      %1986 = vmatprep.subr.mxu0 0.0
      %1987 = vmatpush1.msra.mxu0 0.0
      %1988 = vmatprep.subr.mxu0 0.0
      %1989 = vmatpush1.msra.mxu0 0.0
      %1990 = vmatprep.subr.mxu0 0.0
      %1991 = vmatpush1.msra.mxu0 0.0
      %1992 = vmatprep.subr.mxu0 0.0
      %1993 = vmatpush1.msra.mxu0 0.0
      %1994 = vmatprep.subr.mxu0 0.0
      %1995 = vmatpush1.msra.mxu0 0.0
      %1996 = vmatprep.subr.mxu0 0.0
      %1997 = vmatpush1.msra.mxu0 0.0
      %1998 = vmatprep.subr.mxu0 0.0
      %1999 = vmatpush1.msra.mxu0 0.0
      %2000 = vmatprep.subr.mxu0 0.0
      %2001 = vmatpush1.msra.mxu0 0.0
      %2002 = vmatprep.mubr.f32.mxu0 0.0
      %2003 = vmatmul.mubr.f32.gmra.mrb[0].mxu0 %v1564
      %v2004 = vpop.f32.mrb[0].mxu0
      %v2005 = vadd.f32 %v1780, %v2004
      %v2006 = vpop.f32.mrb[0].mxu0
      %2007 = vmatprep.mubr.f32.mxu0 0.0
      %2008 = vmatmul.mubr.f32.gmra.mrb[0].mxu0 %v1567
      %v2009 = vpop.f32.mrb[0].mxu0
      %v2010 = vadd.f32 %v1785, %v2009
      %v2011 = vpop.f32.mrb[0].mxu0
      %2012 = vmatprep.mubr.f32.mxu0 0.0
      %2013 = vmatmul.mubr.f32.gmra.mrb[0].mxu0 %v1570
      %v2014 = vpop.f32.mrb[0].mxu0
      %v2015 = vadd.f32 %v1790, %v2014
      %v2016 = vpop.f32.mrb[0].mxu0
      %2017 = vmatprep.mubr.f32.mxu0 0.0
      %2018 = vmatmul.mubr.f32.gmra.mrb[0].mxu0 %v1573
      %v2019 = vpop.f32.mrb[0].mxu0
      %v2020 = vadd.f32 %v1795, %v2019
      %v2021 = vpop.f32.mrb[0].mxu0
      %2022 = vmatprep.mubr.f32.mxu0 0.0
      %2023 = vmatmul.mubr.f32.gmra.mrb[0].mxu0 %v1576
      %v2024 = vpop.f32.mrb[0].mxu0
      %v2025 = vadd.f32 %v1800, %v2024
      %v2026 = vpop.f32.mrb[0].mxu0
      %2027 = vmatprep.mubr.f32.mxu0 0.0
      %2028 = vmatmul.mubr.f32.gmra.mrb[0].mxu0 %v1579
      %v2029 = vpop.f32.mrb[0].mxu0
      %v2030 = vadd.f32 %v1805, %v2029
      %v2031 = vpop.f32.mrb[0].mxu0
      %2032 = vmatprep.mubr.f32.mxu0 0.0
      %2033 = vmatmul.mubr.f32.gmra.mrb[0].mxu0 %v1582
      %v2034 = vpop.f32.mrb[0].mxu0
      %v2035 = vadd.f32 %v1810, %v2034
      %v2036 = vpop.f32.mrb[0].mxu0
      %2037 = vmatprep.mubr.f32.mxu0 0.0
      %2038 = vmatmul.mubr.f32.gmra.mrb[0].mxu0 %v1585
      %v2039 = vpop.f32.mrb[0].mxu0
      %v2040 = vadd.f32 %v1815, %v2039
      %v2041 = vpop.f32.mrb[0].mxu0
      %2042 = vmatprep.mubr.f32.mxu0 0.0
      %2043 = vmatmul.mubr.f32.gmra.mrb[0].mxu0 %v1588
      %v2044 = vpop.f32.mrb[0].mxu0
      %v2045 = vadd.f32 %v1820, %v2044
      %v2046 = vpop.f32.mrb[0].mxu0
      %2047 = vmatprep.mubr.f32.mxu0 0.0
      %2048 = vmatmul.mubr.f32.gmra.mrb[0].mxu0 %v1591
      %v2049 = vpop.f32.mrb[0].mxu0
      %v2050 = vadd.f32 %v1825, %v2049
      %v2051 = vpop.f32.mrb[0].mxu0
      %2052 = vmatprep.mubr.f32.mxu0 0.0
      %2053 = vmatmul.mubr.f32.gmra.mrb[0].mxu0 %v1594
      %v2054 = vpop.f32.mrb[0].mxu0
      %v2055 = vadd.f32 %v1830, %v2054
      %v2056 = vpop.f32.mrb[0].mxu0
      %2057 = vmatprep.mubr.f32.mxu0 0.0
      %2058 = vmatmul.mubr.f32.gmra.mrb[0].mxu0 %v1597
      %v2059 = vpop.f32.mrb[0].mxu0
      %v2060 = vadd.f32 %v1835, %v2059
      %v2061 = vpop.f32.mrb[0].mxu0
      %2062 = vmatprep.mubr.f32.mxu0 0.0
      %2063 = vmatmul.mubr.f32.gmra.mrb[0].mxu0 %v1600
      %v2064 = vpop.f32.mrb[0].mxu0
      %v2065 = vadd.f32 %v1840, %v2064
      %v2066 = vpop.f32.mrb[0].mxu0
      %2067 = vmatprep.mubr.f32.mxu0 0.0
      %2068 = vmatmul.mubr.f32.gmra.mrb[0].mxu0 %v1603
      %v2069 = vpop.f32.mrb[0].mxu0
      %v2070 = vadd.f32 %v1845, %v2069
      %v2071 = vpop.f32.mrb[0].mxu0
      %2072 = vmatprep.mubr.f32.mxu0 0.0
      %2073 = vmatmul.mubr.f32.gmra.mrb[0].mxu0 %v1606
      %v2074 = vpop.f32.mrb[0].mxu0
      %v2075 = vadd.f32 %v1850, %v2074
      %v2076 = vpop.f32.mrb[0].mxu0
      %2077 = vmatprep.mubr.f32.mxu0 0.0
      %2078 = vmatmul.mubr.f32.gmra.mrb[0].mxu0 %v1609
      %v2079 = vpop.f32.mrb[0].mxu0
      %v2080 = vadd.f32 %v1855, %v2079
      %v2081 = vpop.f32.mrb[0].mxu0
      %2082 = vmatprep.mubr.f32.mxu0 0.0
      %2083 = vmatmul.mubr.f32.gmra.mrb[0].mxu0 %v1612
      %v2084 = vpop.f32.mrb[0].mxu0
      %v2085 = vadd.f32 %v1860, %v2084
      %v2086 = vpop.f32.mrb[0].mxu0
      %2087 = vmatprep.mubr.f32.mxu0 0.0
      %2088 = vmatmul.mubr.f32.gmra.mrb[0].mxu0 %v1615
      %v2089 = vpop.f32.mrb[0].mxu0
      %v2090 = vadd.f32 %v1865, %v2089
      %v2091 = vpop.f32.mrb[0].mxu0
      %2092 = vmatprep.mubr.f32.mxu0 0.0
      %2093 = vmatmul.mubr.f32.gmra.mrb[0].mxu0 %v1618
      %v2094 = vpop.f32.mrb[0].mxu0
      %v2095 = vadd.f32 %v1870, %v2094
      %v2096 = vpop.f32.mrb[0].mxu0
      %2097 = vmatprep.mubr.f32.mxu0 0.0
      %2098 = vmatmul.mubr.f32.gmra.mrb[0].mxu0 %v1621
      %v2099 = vpop.f32.mrb[0].mxu0
      %v2100 = vadd.f32 %v1875, %v2099
      %v2101 = vpop.f32.mrb[0].mxu0
      %2102 = vmatprep.mubr.f32.mxu0 0.0
      %2103 = vmatmul.mubr.f32.gmra.mrb[0].mxu0 %v1624
      %v2104 = vpop.f32.mrb[0].mxu0
      %v2105 = vadd.f32 %v1880, %v2104
      %v2106 = vpop.f32.mrb[0].mxu0
      %2107 = vmatprep.mubr.f32.mxu0 0.0
      %2108 = vmatmul.mubr.f32.gmra.mrb[0].mxu0 %v1627
      %v2109 = vpop.f32.mrb[0].mxu0
      %v2110 = vadd.f32 %v1885, %v2109
      %v2111 = vpop.f32.mrb[0].mxu0
      %2112 = vmatprep.mubr.f32.mxu0 0.0
      %2113 = vmatmul.mubr.f32.gmra.mrb[0].mxu0 %v1630
      %v2114 = vpop.f32.mrb[0].mxu0
      %v2115 = vadd.f32 %v1890, %v2114
      %v2116 = vpop.f32.mrb[0].mxu0
      %2117 = vmatprep.mubr.f32.mxu0 0.0
      %2118 = vmatmul.mubr.f32.gmra.mrb[0].mxu0 %v1633
      %v2119 = vpop.f32.mrb[0].mxu0
      %v2120 = vadd.f32 %v1895, %v2119
      %v2121 = vpop.f32.mrb[0].mxu0
      %2122 = vmatprep.mubr.f32.mxu0 0.0
      %2123 = vmatmul.mubr.f32.gmra.mrb[0].mxu0 %v1636
      %v2124 = vpop.f32.mrb[0].mxu0
      %v2125 = vadd.f32 %v1900, %v2124
      %v2126 = vpop.f32.mrb[0].mxu0
      %2127 = vmatprep.mubr.f32.mxu0 0.0
      %2128 = vmatmul.mubr.f32.gmra.mrb[0].mxu0 %v1639
      %v2129 = vpop.f32.mrb[0].mxu0
      %v2130 = vadd.f32 %v1905, %v2129
      %v2131 = vpop.f32.mrb[0].mxu0
      %2132 = vmatprep.mubr.f32.mxu0 0.0
      %2133 = vmatmul.mubr.f32.gmra.mrb[0].mxu0 %v1642
      %v2134 = vpop.f32.mrb[0].mxu0
      %v2135 = vadd.f32 %v1910, %v2134
      %v2136 = vpop.f32.mrb[0].mxu0
      %2137 = vmatprep.mubr.f32.mxu0 0.0
      %2138 = vmatmul.mubr.f32.gmra.mrb[0].mxu0 %v1645
      %v2139 = vpop.f32.mrb[0].mxu0
      %v2140 = vadd.f32 %v1915, %v2139
      %v2141 = vpop.f32.mrb[0].mxu0
      %2142 = vmatprep.mubr.f32.mxu0 0.0
      %2143 = vmatmul.mubr.f32.gmra.mrb[0].mxu0 %v1648
      %v2144 = vpop.f32.mrb[0].mxu0
      %v2145 = vadd.f32 %v1920, %v2144
      %v2146 = vpop.f32.mrb[0].mxu0
      %2147 = vmatprep.mubr.f32.mxu0 0.0
      %2148 = vmatmul.mubr.f32.gmra.mrb[0].mxu0 %v1651
      %v2149 = vpop.f32.mrb[0].mxu0
      %v2150 = vadd.f32 %v1925, %v2149
      %v2151 = vpop.f32.mrb[0].mxu0
      %2152 = vmatprep.mubr.f32.mxu0 0.0
      %2153 = vmatmul.mubr.f32.gmra.mrb[0].mxu0 %v1654
      %v2154 = vpop.f32.mrb[0].mxu0
      %v2155 = vadd.f32 %v1930, %v2154
      %v2156 = vpop.f32.mrb[0].mxu0
      %2157 = vmatprep.mubr.f32.mxu0 0.0
      %2158 = vmatmul.mubr.f32.gmra.mrb[0].mxu0 %v1657
      %v2159 = vpop.f32.mrb[0].mxu0
      %v2160 = vadd.f32 %v1935, %v2159
      %v2161 = vpop.f32.mrb[0].mxu0
      %2162 = vdwg.mxu0
      %v2163 = vmax.f32 %v2005, 0.0
      %v2164 = vmax.f32 %v2010, 0.0
      %v2165 = vmax.f32 %v2015, 0.0
      %v2166 = vmax.f32 %v2020, 0.0
      %v2167 = vmax.f32 %v2025, 0.0
      %v2168 = vmax.f32 %v2030, 0.0
      %v2169 = vmax.f32 %v2035, 0.0
      %v2170 = vmax.f32 %v2040, 0.0
      %v2171 = vmax.f32 %v2045, 0.0
      %v2172 = vmax.f32 %v2050, 0.0
      %v2173 = vmax.f32 %v2055, 0.0
      %v2174 = vmax.f32 %v2060, 0.0
      %v2175 = vmax.f32 %v2065, 0.0
      %v2176 = vmax.f32 %v2070, 0.0
      %v2177 = vmax.f32 %v2075, 0.0
      %v2178 = vmax.f32 %v2080, 0.0
      %v2179 = vmax.f32 %v2085, 0.0
      %v2180 = vmax.f32 %v2090, 0.0
      %v2181 = vmax.f32 %v2095, 0.0
      %v2182 = vmax.f32 %v2100, 0.0
      %v2183 = vmax.f32 %v2105, 0.0
      %v2184 = vmax.f32 %v2110, 0.0
      %v2185 = vmax.f32 %v2115, 0.0
      %v2186 = vmax.f32 %v2120, 0.0
      %v2187 = vmax.f32 %v2125, 0.0
      %v2188 = vmax.f32 %v2130, 0.0
      %v2189 = vmax.f32 %v2135, 0.0
      %v2190 = vmax.f32 %v2140, 0.0
      %v2191 = vmax.f32 %v2145, 0.0
      %v2192 = vmax.f32 %v2150, 0.0
      %v2193 = vmax.f32 %v2155, 0.0
      %v2194 = vmax.f32 %v2160, 0.0
      %v2195 = vld [vmem:[%s5] sm:$0xff]
      %v2196 = vld [vmem:[%s5 + $0x8] sm:$0xff]
      %v2197 = vld [vmem:[%s5 + $0x10] sm:$0xff]
      %v2198 = vld [vmem:[%s5 + $0x18] sm:$0xff]
      %v2199 = vld [vmem:[%s5 + $0x20] sm:$0xff]
      %v2200 = vld [vmem:[%s5 + $0x28] sm:$0xff]
      %v2201 = vld [vmem:[%s5 + $0x30] sm:$0xff]
      %v2202 = vld [vmem:[%s5 + $0x38] sm:$0xff]
      %v2203 = vld [vmem:[%s5 + $0x40] sm:$0xff]
      %v2204 = vld [vmem:[%s5 + $0x48] sm:$0xff]
      %v2205 = vld [vmem:[%s5 + $0x50] sm:$0xff]
      %v2206 = vld [vmem:[%s5 + $0x58] sm:$0xff]
      %v2207 = vld [vmem:[%s5 + $0x60] sm:$0xff]
      %v2208 = vld [vmem:[%s5 + $0x68] sm:$0xff]
      %v2209 = vld [vmem:[%s5 + $0x70] sm:$0xff]
      %v2210 = vld [vmem:[%s5 + $0x78] sm:$0xff]
      %v2211 = vld [vmem:[%s6] sm:$0x1]
      %v2213 = vlaneseq
      %v2214 = vshrl.u32 %v2213, 7
      %v2215 = vsub.s32 0, %v2214
      %v2216 = vrot.slane %v2211, %v2215
      %2218 = vmatprep.subr.mxu0 0.0
      %2219 = vmatpush1.msra.mxu0 %v2195
      %2220 = vmatprep.subr.mxu0 0.0
      %2221 = vmatpush1.msra.mxu0 %v2196
      %2222 = vmatprep.subr.mxu0 0.0
      %2223 = vmatpush1.msra.mxu0 %v2197
      %2224 = vmatprep.subr.mxu0 0.0
      %2225 = vmatpush1.msra.mxu0 %v2198
      %2226 = vmatprep.subr.mxu0 0.0
      %2227 = vmatpush1.msra.mxu0 %v2199
      %2228 = vmatprep.subr.mxu0 0.0
      %2229 = vmatpush1.msra.mxu0 %v2200
      %2230 = vmatprep.subr.mxu0 0.0
      %2231 = vmatpush1.msra.mxu0 %v2201
      %2232 = vmatprep.subr.mxu0 0.0
      %2233 = vmatpush1.msra.mxu0 %v2202
      %2234 = vmatprep.subr.mxu0 0.0
      %2235 = vmatpush1.msra.mxu0 %v2203
      %2236 = vmatprep.subr.mxu0 0.0
      %2237 = vmatpush1.msra.mxu0 %v2204
      %2238 = vmatprep.subr.mxu0 0.0
      %2239 = vmatpush1.msra.mxu0 %v2205
      %2240 = vmatprep.subr.mxu0 0.0
      %2241 = vmatpush1.msra.mxu0 %v2206
      %2242 = vmatprep.subr.mxu0 0.0
      %2243 = vmatpush1.msra.mxu0 %v2207
      %2244 = vmatprep.subr.mxu0 0.0
      %2245 = vmatpush1.msra.mxu0 %v2208
      %2246 = vmatprep.subr.mxu0 0.0
      %2247 = vmatpush1.msra.mxu0 %v2209
      %2248 = vmatprep.subr.mxu0 0.0
      %2249 = vmatpush1.msra.mxu0 %v2210
      %2250 = vmatprep.subr.mxu0 0.0
      %2251 = vmatpush1.msra.mxu0 0.0
      %2252 = vmatprep.subr.mxu0 0.0
      %2253 = vmatpush1.msra.mxu0 0.0
      %2254 = vmatprep.subr.mxu0 0.0
      %2255 = vmatpush1.msra.mxu0 0.0
      %2256 = vmatprep.subr.mxu0 0.0
      %2257 = vmatpush1.msra.mxu0 0.0
      %2258 = vmatprep.subr.mxu0 0.0
      %2259 = vmatpush1.msra.mxu0 0.0
      %2260 = vmatprep.subr.mxu0 0.0
      %2261 = vmatpush1.msra.mxu0 0.0
      %2262 = vmatprep.subr.mxu0 0.0
      %2263 = vmatpush1.msra.mxu0 0.0
      %2264 = vmatprep.subr.mxu0 0.0
      %2265 = vmatpush1.msra.mxu0 0.0
      %2266 = vmatprep.subr.mxu0 0.0
      %2267 = vmatpush1.msra.mxu0 0.0
      %2268 = vmatprep.subr.mxu0 0.0
      %2269 = vmatpush1.msra.mxu0 0.0
      %2270 = vmatprep.subr.mxu0 0.0
      %2271 = vmatpush1.msra.mxu0 0.0
      %2272 = vmatprep.subr.mxu0 0.0
      %2273 = vmatpush1.msra.mxu0 0.0
      %2274 = vmatprep.subr.mxu0 0.0
      %2275 = vmatpush1.msra.mxu0 0.0
      %2276 = vmatprep.subr.mxu0 0.0
      %2277 = vmatpush1.msra.mxu0 0.0
      %2278 = vmatprep.subr.mxu0 0.0
      %2279 = vmatpush1.msra.mxu0 0.0
      %2280 = vmatprep.subr.mxu0 0.0
      %2281 = vmatpush1.msra.mxu0 0.0
      %2282 = vmatprep.mubr.f32.mxu0 0.0
      %2283 = vmatmul.mubr.f32.gmra.mrb[0].mxu0 %v2163
      %v2284 = vpop.f32.mrb[0].mxu0
      %v2285 = vadd.f32 %v2216, %v2284
      %v2286 = vpop.f32.mrb[0].mxu0
      %2287 = vmatprep.mubr.f32.mxu0 0.0
      %2288 = vmatmul.mubr.f32.gmra.mrb[0].mxu0 %v2164
      %v2289 = vpop.f32.mrb[0].mxu0
      %v2290 = vadd.f32 %v2216, %v2289
      %v2291 = vpop.f32.mrb[0].mxu0
      %2292 = vmatprep.mubr.f32.mxu0 0.0
      %2293 = vmatmul.mubr.f32.gmra.mrb[0].mxu0 %v2165
      %v2294 = vpop.f32.mrb[0].mxu0
      %v2295 = vadd.f32 %v2216, %v2294
      %v2296 = vpop.f32.mrb[0].mxu0
      %2297 = vmatprep.mubr.f32.mxu0 0.0
      %2298 = vmatmul.mubr.f32.gmra.mrb[0].mxu0 %v2166
      %v2299 = vpop.f32.mrb[0].mxu0
      %v2300 = vadd.f32 %v2216, %v2299
      %v2301 = vpop.f32.mrb[0].mxu0
      %2302 = vmatprep.mubr.f32.mxu0 0.0
      %2303 = vmatmul.mubr.f32.gmra.mrb[0].mxu0 %v2167
      %v2304 = vpop.f32.mrb[0].mxu0
      %v2305 = vadd.f32 %v2216, %v2304
      %v2306 = vpop.f32.mrb[0].mxu0
      %2307 = vmatprep.mubr.f32.mxu0 0.0
      %2308 = vmatmul.mubr.f32.gmra.mrb[0].mxu0 %v2168
      %v2309 = vpop.f32.mrb[0].mxu0
      %v2310 = vadd.f32 %v2216, %v2309
      %v2311 = vpop.f32.mrb[0].mxu0
      %2312 = vmatprep.mubr.f32.mxu0 0.0
      %2313 = vmatmul.mubr.f32.gmra.mrb[0].mxu0 %v2169
      %v2314 = vpop.f32.mrb[0].mxu0
      %v2315 = vadd.f32 %v2216, %v2314
      %v2316 = vpop.f32.mrb[0].mxu0
      %2317 = vmatprep.mubr.f32.mxu0 0.0
      %2318 = vmatmul.mubr.f32.gmra.mrb[0].mxu0 %v2170
      %v2319 = vpop.f32.mrb[0].mxu0
      %v2320 = vadd.f32 %v2216, %v2319
      %v2321 = vpop.f32.mrb[0].mxu0
      %2322 = vmatprep.mubr.f32.mxu0 0.0
      %2323 = vmatmul.mubr.f32.gmra.mrb[0].mxu0 %v2171
      %v2324 = vpop.f32.mrb[0].mxu0
      %v2325 = vadd.f32 %v2216, %v2324
      %v2326 = vpop.f32.mrb[0].mxu0
      %2327 = vmatprep.mubr.f32.mxu0 0.0
      %2328 = vmatmul.mubr.f32.gmra.mrb[0].mxu0 %v2172
      %v2329 = vpop.f32.mrb[0].mxu0
      %v2330 = vadd.f32 %v2216, %v2329
      %v2331 = vpop.f32.mrb[0].mxu0
      %2332 = vmatprep.mubr.f32.mxu0 0.0
      %2333 = vmatmul.mubr.f32.gmra.mrb[0].mxu0 %v2173
      %v2334 = vpop.f32.mrb[0].mxu0
      %v2335 = vadd.f32 %v2216, %v2334
      %v2336 = vpop.f32.mrb[0].mxu0
      %2337 = vmatprep.mubr.f32.mxu0 0.0
      %2338 = vmatmul.mubr.f32.gmra.mrb[0].mxu0 %v2174
      %v2339 = vpop.f32.mrb[0].mxu0
      %v2340 = vadd.f32 %v2216, %v2339
      %v2341 = vpop.f32.mrb[0].mxu0
      %2342 = vmatprep.mubr.f32.mxu0 0.0
      %2343 = vmatmul.mubr.f32.gmra.mrb[0].mxu0 %v2175
      %v2344 = vpop.f32.mrb[0].mxu0
      %v2345 = vadd.f32 %v2216, %v2344
      %v2346 = vpop.f32.mrb[0].mxu0
      %2347 = vmatprep.mubr.f32.mxu0 0.0
      %2348 = vmatmul.mubr.f32.gmra.mrb[0].mxu0 %v2176
      %v2349 = vpop.f32.mrb[0].mxu0
      %v2350 = vadd.f32 %v2216, %v2349
      %v2351 = vpop.f32.mrb[0].mxu0
      %2352 = vmatprep.mubr.f32.mxu0 0.0
      %2353 = vmatmul.mubr.f32.gmra.mrb[0].mxu0 %v2177
      %v2354 = vpop.f32.mrb[0].mxu0
      %v2355 = vadd.f32 %v2216, %v2354
      %v2356 = vpop.f32.mrb[0].mxu0
      %2357 = vmatprep.mubr.f32.mxu0 0.0
      %2358 = vmatmul.mubr.f32.gmra.mrb[0].mxu0 %v2178
      %v2359 = vpop.f32.mrb[0].mxu0
      %v2360 = vadd.f32 %v2216, %v2359
      %v2361 = vpop.f32.mrb[0].mxu0
      %2362 = vmatprep.mubr.f32.mxu0 0.0
      %2363 = vmatmul.mubr.f32.gmra.mrb[0].mxu0 %v2179
      %v2364 = vpop.f32.mrb[0].mxu0
      %v2365 = vadd.f32 %v2216, %v2364
      %v2366 = vpop.f32.mrb[0].mxu0
      %2367 = vmatprep.mubr.f32.mxu0 0.0
      %2368 = vmatmul.mubr.f32.gmra.mrb[0].mxu0 %v2180
      %v2369 = vpop.f32.mrb[0].mxu0
      %v2370 = vadd.f32 %v2216, %v2369
      %v2371 = vpop.f32.mrb[0].mxu0
      %2372 = vmatprep.mubr.f32.mxu0 0.0
      %2373 = vmatmul.mubr.f32.gmra.mrb[0].mxu0 %v2181
      %v2374 = vpop.f32.mrb[0].mxu0
      %v2375 = vadd.f32 %v2216, %v2374
      %v2376 = vpop.f32.mrb[0].mxu0
      %2377 = vmatprep.mubr.f32.mxu0 0.0
      %2378 = vmatmul.mubr.f32.gmra.mrb[0].mxu0 %v2182
      %v2379 = vpop.f32.mrb[0].mxu0
      %v2380 = vadd.f32 %v2216, %v2379
      %v2381 = vpop.f32.mrb[0].mxu0
      %2382 = vmatprep.mubr.f32.mxu0 0.0
      %2383 = vmatmul.mubr.f32.gmra.mrb[0].mxu0 %v2183
      %v2384 = vpop.f32.mrb[0].mxu0
      %v2385 = vadd.f32 %v2216, %v2384
      %v2386 = vpop.f32.mrb[0].mxu0
      %2387 = vmatprep.mubr.f32.mxu0 0.0
      %2388 = vmatmul.mubr.f32.gmra.mrb[0].mxu0 %v2184
      %v2389 = vpop.f32.mrb[0].mxu0
      %v2390 = vadd.f32 %v2216, %v2389
      %v2391 = vpop.f32.mrb[0].mxu0
      %2392 = vmatprep.mubr.f32.mxu0 0.0
      %2393 = vmatmul.mubr.f32.gmra.mrb[0].mxu0 %v2185
      %v2394 = vpop.f32.mrb[0].mxu0
      %v2395 = vadd.f32 %v2216, %v2394
      %v2396 = vpop.f32.mrb[0].mxu0
      %2397 = vmatprep.mubr.f32.mxu0 0.0
      %2398 = vmatmul.mubr.f32.gmra.mrb[0].mxu0 %v2186
      %v2399 = vpop.f32.mrb[0].mxu0
      %v2400 = vadd.f32 %v2216, %v2399
      %v2401 = vpop.f32.mrb[0].mxu0
      %2402 = vmatprep.mubr.f32.mxu0 0.0
      %2403 = vmatmul.mubr.f32.gmra.mrb[0].mxu0 %v2187
      %v2404 = vpop.f32.mrb[0].mxu0
      %v2405 = vadd.f32 %v2216, %v2404
      %v2406 = vpop.f32.mrb[0].mxu0
      %2407 = vmatprep.mubr.f32.mxu0 0.0
      %2408 = vmatmul.mubr.f32.gmra.mrb[0].mxu0 %v2188
      %v2409 = vpop.f32.mrb[0].mxu0
      %v2410 = vadd.f32 %v2216, %v2409
      %v2411 = vpop.f32.mrb[0].mxu0
      %2412 = vmatprep.mubr.f32.mxu0 0.0
      %2413 = vmatmul.mubr.f32.gmra.mrb[0].mxu0 %v2189
      %v2414 = vpop.f32.mrb[0].mxu0
      %v2415 = vadd.f32 %v2216, %v2414
      %v2416 = vpop.f32.mrb[0].mxu0
      %2417 = vmatprep.mubr.f32.mxu0 0.0
      %2418 = vmatmul.mubr.f32.gmra.mrb[0].mxu0 %v2190
      %v2419 = vpop.f32.mrb[0].mxu0
      %v2420 = vadd.f32 %v2216, %v2419
      %v2421 = vpop.f32.mrb[0].mxu0
      %2422 = vmatprep.mubr.f32.mxu0 0.0
      %2423 = vmatmul.mubr.f32.gmra.mrb[0].mxu0 %v2191
      %v2424 = vpop.f32.mrb[0].mxu0
      %v2425 = vadd.f32 %v2216, %v2424
      %v2426 = vpop.f32.mrb[0].mxu0
      %2427 = vmatprep.mubr.f32.mxu0 0.0
      %2428 = vmatmul.mubr.f32.gmra.mrb[0].mxu0 %v2192
      %v2429 = vpop.f32.mrb[0].mxu0
      %v2430 = vadd.f32 %v2216, %v2429
      %v2431 = vpop.f32.mrb[0].mxu0
      %2432 = vmatprep.mubr.f32.mxu0 0.0
      %2433 = vmatmul.mubr.f32.gmra.mrb[0].mxu0 %v2193
      %v2434 = vpop.f32.mrb[0].mxu0
      %v2435 = vadd.f32 %v2216, %v2434
      %v2436 = vpop.f32.mrb[0].mxu0
      %2437 = vmatprep.mubr.f32.mxu0 0.0
      %2438 = vmatmul.mubr.f32.gmra.mrb[0].mxu0 %v2194
      %v2439 = vpop.f32.mrb[0].mxu0
      %v2440 = vadd.f32 %v2216, %v2439
      %v2441 = vpop.f32.mrb[0].mxu0
      %2442 = vdwg.mxu0
      %v2443 = vmax.f32 %v2285, 0.0
      %v2444 = vmax.f32 %v2290, 0.0
      %v2445 = vmax.f32 %v2295, 0.0
      %v2446 = vmax.f32 %v2300, 0.0
      %v2447 = vmax.f32 %v2305, 0.0
      %v2448 = vmax.f32 %v2310, 0.0
      %v2449 = vmax.f32 %v2315, 0.0
      %v2450 = vmax.f32 %v2320, 0.0
      %v2451 = vmax.f32 %v2325, 0.0
      %v2452 = vmax.f32 %v2330, 0.0
      %v2453 = vmax.f32 %v2335, 0.0
      %v2454 = vmax.f32 %v2340, 0.0
      %v2455 = vmax.f32 %v2345, 0.0
      %v2456 = vmax.f32 %v2350, 0.0
      %v2457 = vmax.f32 %v2355, 0.0
      %v2458 = vmax.f32 %v2360, 0.0
      %v2459 = vmax.f32 %v2365, 0.0
      %v2460 = vmax.f32 %v2370, 0.0
      %v2461 = vmax.f32 %v2375, 0.0
      %v2462 = vmax.f32 %v2380, 0.0
      %v2463 = vmax.f32 %v2385, 0.0
      %v2464 = vmax.f32 %v2390, 0.0
      %v2465 = vmax.f32 %v2395, 0.0
      %v2466 = vmax.f32 %v2400, 0.0
      %v2467 = vmax.f32 %v2405, 0.0
      %v2468 = vmax.f32 %v2410, 0.0
      %v2469 = vmax.f32 %v2415, 0.0
      %v2470 = vmax.f32 %v2420, 0.0
      %v2471 = vmax.f32 %v2425, 0.0
      %v2472 = vmax.f32 %v2430, 0.0
      %v2473 = vmax.f32 %v2435, 0.0
      %v2474 = vmax.f32 %v2440, 0.0
      %v2475 = vld [vmem:[%s7] sm:$0x1]
      %v2477 = vlaneseq
      %v2478 = vshrl.u32 %v2477, 7
      %v2479 = vsub.s32 0, %v2478
      %v2480 = vrot.slane %v2475, %v2479
      %v2482 = vmul.f32 %v2443, %v2480
      %v2483 = vmul.f32 %v2444, %v2480
      %v2484 = vmul.f32 %v2445, %v2480
      %v2485 = vmul.f32 %v2446, %v2480
      %v2486 = vmul.f32 %v2447, %v2480
      %v2487 = vmul.f32 %v2448, %v2480
      %v2488 = vmul.f32 %v2449, %v2480
      %v2489 = vmul.f32 %v2450, %v2480
      %v2490 = vmul.f32 %v2451, %v2480
      %v2491 = vmul.f32 %v2452, %v2480
      %v2492 = vmul.f32 %v2453, %v2480
      %v2493 = vmul.f32 %v2454, %v2480
      %v2494 = vmul.f32 %v2455, %v2480
      %v2495 = vmul.f32 %v2456, %v2480
      %v2496 = vmul.f32 %v2457, %v2480
      %v2497 = vmul.f32 %v2458, %v2480
      %v2498 = vmul.f32 %v2459, %v2480
      %v2499 = vmul.f32 %v2460, %v2480
      %v2500 = vmul.f32 %v2461, %v2480
      %v2501 = vmul.f32 %v2462, %v2480
      %v2502 = vmul.f32 %v2463, %v2480
      %v2503 = vmul.f32 %v2464, %v2480
      %v2504 = vmul.f32 %v2465, %v2480
      %v2505 = vmul.f32 %v2466, %v2480
      %v2506 = vmul.f32 %v2467, %v2480
      %v2507 = vmul.f32 %v2468, %v2480
      %v2508 = vmul.f32 %v2469, %v2480
      %v2509 = vmul.f32 %v2470, %v2480
      %v2510 = vmul.f32 %v2471, %v2480
      %v2511 = vmul.f32 %v2472, %v2480
      %v2512 = vmul.f32 %v2473, %v2480
      %v2513 = vmul.f32 %v2474, %v2480
      %2514 = vadd.xlane.f32.xlu0 %v2482
      %v2515 = vpop.xlane.xlu0 %2514
      %2516 = vadd.xlane.f32.xlu0 %v2483
      %v2517 = vpop.xlane.xlu0 %2516
      %2518 = vadd.xlane.f32.xlu0 %v2484
      %v2519 = vpop.xlane.xlu0 %2518
      %2520 = vadd.xlane.f32.xlu0 %v2485
      %v2521 = vpop.xlane.xlu0 %2520
      %2522 = vadd.xlane.f32.xlu0 %v2486
      %v2523 = vpop.xlane.xlu0 %2522
      %2524 = vadd.xlane.f32.xlu0 %v2487
      %v2525 = vpop.xlane.xlu0 %2524
      %2526 = vadd.xlane.f32.xlu0 %v2488
      %v2527 = vpop.xlane.xlu0 %2526
      %2528 = vadd.xlane.f32.xlu0 %v2489
      %v2529 = vpop.xlane.xlu0 %2528
      %2530 = vadd.xlane.f32.xlu0 %v2490
      %v2531 = vpop.xlane.xlu0 %2530
      %2532 = vadd.xlane.f32.xlu0 %v2491
      %v2533 = vpop.xlane.xlu0 %2532
      %2534 = vadd.xlane.f32.xlu0 %v2492
      %v2535 = vpop.xlane.xlu0 %2534
      %2536 = vadd.xlane.f32.xlu0 %v2493
      %v2537 = vpop.xlane.xlu0 %2536
      %2538 = vadd.xlane.f32.xlu0 %v2494
      %v2539 = vpop.xlane.xlu0 %2538
      %2540 = vadd.xlane.f32.xlu0 %v2495
      %v2541 = vpop.xlane.xlu0 %2540
      %2542 = vadd.xlane.f32.xlu0 %v2496
      %v2543 = vpop.xlane.xlu0 %2542
      %2544 = vadd.xlane.f32.xlu0 %v2497
      %v2545 = vpop.xlane.xlu0 %2544
      %2546 = vadd.xlane.f32.xlu0 %v2498
      %v2547 = vpop.xlane.xlu0 %2546
      %2548 = vadd.xlane.f32.xlu0 %v2499
      %v2549 = vpop.xlane.xlu0 %2548
      %2550 = vadd.xlane.f32.xlu0 %v2500
      %v2551 = vpop.xlane.xlu0 %2550
      %2552 = vadd.xlane.f32.xlu0 %v2501
      %v2553 = vpop.xlane.xlu0 %2552
      %2554 = vadd.xlane.f32.xlu0 %v2502
      %v2555 = vpop.xlane.xlu0 %2554
      %2556 = vadd.xlane.f32.xlu0 %v2503
      %v2557 = vpop.xlane.xlu0 %2556
      %2558 = vadd.xlane.f32.xlu0 %v2504
      %v2559 = vpop.xlane.xlu0 %2558
      %2560 = vadd.xlane.f32.xlu0 %v2505
      %v2561 = vpop.xlane.xlu0 %2560
      %2562 = vadd.xlane.f32.xlu0 %v2506
      %v2563 = vpop.xlane.xlu0 %2562
      %2564 = vadd.xlane.f32.xlu0 %v2507
      %v2565 = vpop.xlane.xlu0 %2564
      %2566 = vadd.xlane.f32.xlu0 %v2508
      %v2567 = vpop.xlane.xlu0 %2566
      %2568 = vadd.xlane.f32.xlu0 %v2509
      %v2569 = vpop.xlane.xlu0 %2568
      %2570 = vadd.xlane.f32.xlu0 %v2510
      %v2571 = vpop.xlane.xlu0 %2570
      %2572 = vadd.xlane.f32.xlu0 %v2511
      %v2573 = vpop.xlane.xlu0 %2572
      %2574 = vadd.xlane.f32.xlu0 %v2512
      %v2575 = vpop.xlane.xlu0 %2574
      %2576 = vadd.xlane.f32.xlu0 %v2513
      %v2577 = vpop.xlane.xlu0 %2576
      %v2578 = vld [vmem:[#allocation2] sm:$0x1]
      %v2580 = vlaneseq
      %v2581 = vshrl.u32 %v2580, 7
      %v2582 = vsub.s32 0, %v2581
      %v2583 = vrot.slane %v2578, %v2582
      %v2585 = vadd.f32 %v2515, %v2583
      %v2586 = vadd.f32 %v2517, %v2583
      %v2587 = vadd.f32 %v2519, %v2583
      %v2588 = vadd.f32 %v2521, %v2583
      %v2589 = vadd.f32 %v2523, %v2583
      %v2590 = vadd.f32 %v2525, %v2583
      %v2591 = vadd.f32 %v2527, %v2583
      %v2592 = vadd.f32 %v2529, %v2583
      %v2593 = vadd.f32 %v2531, %v2583
      %v2594 = vadd.f32 %v2533, %v2583
      %v2595 = vadd.f32 %v2535, %v2583
      %v2596 = vadd.f32 %v2537, %v2583
      %v2597 = vadd.f32 %v2539, %v2583
      %v2598 = vadd.f32 %v2541, %v2583
      %v2599 = vadd.f32 %v2543, %v2583
      %v2600 = vadd.f32 %v2545, %v2583
      %v2601 = vadd.f32 %v2547, %v2583
      %v2602 = vadd.f32 %v2549, %v2583
      %v2603 = vadd.f32 %v2551, %v2583
      %v2604 = vadd.f32 %v2553, %v2583
      %v2605 = vadd.f32 %v2555, %v2583
      %v2606 = vadd.f32 %v2557, %v2583
      %v2607 = vadd.f32 %v2559, %v2583
      %v2608 = vadd.f32 %v2561, %v2583
      %v2609 = vadd.f32 %v2563, %v2583
      %v2610 = vadd.f32 %v2565, %v2583
      %v2611 = vadd.f32 %v2567, %v2583
      %v2612 = vadd.f32 %v2569, %v2583
      %v2613 = vadd.f32 %v2571, %v2583
      %v2614 = vadd.f32 %v2573, %v2583
      %v2615 = vadd.f32 %v2575, %v2583
      %v2616 = vadd.f32 %v2577, %v2583
      %v2617 = vand.u32 2147483647, %v2585
      %v2618 = vand.u32 2147483647, %v2586
      %v2619 = vand.u32 2147483647, %v2587
      %v2620 = vand.u32 2147483647, %v2588
      %v2621 = vand.u32 2147483647, %v2589
      %v2622 = vand.u32 2147483647, %v2590
      %v2623 = vand.u32 2147483647, %v2591
      %v2624 = vand.u32 2147483647, %v2592
      %v2625 = vand.u32 2147483647, %v2593
      %v2626 = vand.u32 2147483647, %v2594
      %v2627 = vand.u32 2147483647, %v2595
      %v2628 = vand.u32 2147483647, %v2596
      %v2629 = vand.u32 2147483647, %v2597
      %v2630 = vand.u32 2147483647, %v2598
      %v2631 = vand.u32 2147483647, %v2599
      %v2632 = vand.u32 2147483647, %v2600
      %v2633 = vand.u32 2147483647, %v2601
      %v2634 = vand.u32 2147483647, %v2602
      %v2635 = vand.u32 2147483647, %v2603
      %v2636 = vand.u32 2147483647, %v2604
      %v2637 = vand.u32 2147483647, %v2605
      %v2638 = vand.u32 2147483647, %v2606
      %v2639 = vand.u32 2147483647, %v2607
      %v2640 = vand.u32 2147483647, %v2608
      %v2641 = vand.u32 2147483647, %v2609
      %v2642 = vand.u32 2147483647, %v2610
      %v2643 = vand.u32 2147483647, %v2611
      %v2644 = vand.u32 2147483647, %v2612
      %v2645 = vand.u32 2147483647, %v2613
      %v2646 = vand.u32 2147483647, %v2614
      %v2647 = vand.u32 2147483647, %v2615
      %v2648 = vand.u32 2147483647, %v2616
      %v2649 = vsub.f32 0.0, %v2617
      %v2650 = vsub.f32 0.0, %v2618
      %v2651 = vsub.f32 0.0, %v2619
      %v2652 = vsub.f32 0.0, %v2620
      %v2653 = vsub.f32 0.0, %v2621
      %v2654 = vsub.f32 0.0, %v2622
      %v2655 = vsub.f32 0.0, %v2623
      %v2656 = vsub.f32 0.0, %v2624
      %v2657 = vsub.f32 0.0, %v2625
      %v2658 = vsub.f32 0.0, %v2626
      %v2659 = vsub.f32 0.0, %v2627
      %v2660 = vsub.f32 0.0, %v2628
      %v2661 = vsub.f32 0.0, %v2629
      %v2662 = vsub.f32 0.0, %v2630
      %v2663 = vsub.f32 0.0, %v2631
      %v2664 = vsub.f32 0.0, %v2632
      %v2665 = vsub.f32 0.0, %v2633
      %v2666 = vsub.f32 0.0, %v2634
      %v2667 = vsub.f32 0.0, %v2635
      %v2668 = vsub.f32 0.0, %v2636
      %v2669 = vsub.f32 0.0, %v2637
      %v2670 = vsub.f32 0.0, %v2638
      %v2671 = vsub.f32 0.0, %v2639
      %v2672 = vsub.f32 0.0, %v2640
      %v2673 = vsub.f32 0.0, %v2641
      %v2674 = vsub.f32 0.0, %v2642
      %v2675 = vsub.f32 0.0, %v2643
      %v2676 = vsub.f32 0.0, %v2644
      %v2677 = vsub.f32 0.0, %v2645
      %v2678 = vsub.f32 0.0, %v2646
      %v2679 = vsub.f32 0.0, %v2647
      %v2680 = vsub.f32 0.0, %v2648
      %v2681 = vmul.f32 %v2649, 1.442695
      %v2682 = vpow.pop %v2681
      %v2683 = vmul.f32 %v2650, 1.442695
      %v2684 = vpow.pop %v2683
      %v2685 = vmul.f32 %v2651, 1.442695
      %v2686 = vpow.pop %v2685
      %v2687 = vmul.f32 %v2652, 1.442695
      %v2688 = vpow.pop %v2687
      %v2689 = vmul.f32 %v2653, 1.442695
      %v2690 = vpow.pop %v2689
      %v2691 = vmul.f32 %v2654, 1.442695
      %v2692 = vpow.pop %v2691
      %v2693 = vmul.f32 %v2655, 1.442695
      %v2694 = vpow.pop %v2693
      %v2695 = vmul.f32 %v2656, 1.442695
      %v2696 = vpow.pop %v2695
      %v2697 = vmul.f32 %v2657, 1.442695
      %v2698 = vpow.pop %v2697
      %v2699 = vmul.f32 %v2658, 1.442695
      %v2700 = vpow.pop %v2699
      %v2701 = vmul.f32 %v2659, 1.442695
      %v2702 = vpow.pop %v2701
      %v2703 = vmul.f32 %v2660, 1.442695
      %v2704 = vpow.pop %v2703
      %v2705 = vmul.f32 %v2661, 1.442695
      %v2706 = vpow.pop %v2705
      %v2707 = vmul.f32 %v2662, 1.442695
      %v2708 = vpow.pop %v2707
      %v2709 = vmul.f32 %v2663, 1.442695
      %v2710 = vpow.pop %v2709
      %v2711 = vmul.f32 %v2664, 1.442695
      %v2712 = vpow.pop %v2711
      %v2713 = vmul.f32 %v2665, 1.442695
      %v2714 = vpow.pop %v2713
      %v2715 = vmul.f32 %v2666, 1.442695
      %v2716 = vpow.pop %v2715
      %v2717 = vmul.f32 %v2667, 1.442695
      %v2718 = vpow.pop %v2717
      %v2719 = vmul.f32 %v2668, 1.442695
      %v2720 = vpow.pop %v2719
      %v2721 = vmul.f32 %v2669, 1.442695
      %v2722 = vpow.pop %v2721
      %v2723 = vmul.f32 %v2670, 1.442695
      %v2724 = vpow.pop %v2723
      %v2725 = vmul.f32 %v2671, 1.442695
      %v2726 = vpow.pop %v2725
      %v2727 = vmul.f32 %v2672, 1.442695
      %v2728 = vpow.pop %v2727
      %v2729 = vmul.f32 %v2673, 1.442695
      %v2730 = vpow.pop %v2729
      %v2731 = vmul.f32 %v2674, 1.442695
      %v2732 = vpow.pop %v2731
      %v2733 = vmul.f32 %v2675, 1.442695
      %v2734 = vpow.pop %v2733
      %v2735 = vmul.f32 %v2676, 1.442695
      %v2736 = vpow.pop %v2735
      %v2737 = vmul.f32 %v2677, 1.442695
      %v2738 = vpow.pop %v2737
      %v2739 = vmul.f32 %v2678, 1.442695
      %v2740 = vpow.pop %v2739
      %v2741 = vmul.f32 %v2679, 1.442695
      %v2742 = vpow.pop %v2741
      %v2743 = vmul.f32 %v2680, 1.442695
      %v2744 = vpow.pop %v2743
      %vm2745 = vcmp.ge.f32.partialorder %v2585, 0.0
      %vm2746 = vcmp.ge.f32.partialorder %v2586, 0.0
      %vm2747 = vcmp.ge.f32.partialorder %v2587, 0.0
      %vm2748 = vcmp.ge.f32.partialorder %v2588, 0.0
      %vm2749 = vcmp.ge.f32.partialorder %v2589, 0.0
      %vm2750 = vcmp.ge.f32.partialorder %v2590, 0.0
      %vm2751 = vcmp.ge.f32.partialorder %v2591, 0.0
      %vm2752 = vcmp.ge.f32.partialorder %v2592, 0.0
      %vm2753 = vcmp.ge.f32.partialorder %v2593, 0.0
      %vm2754 = vcmp.ge.f32.partialorder %v2594, 0.0
      %vm2755 = vcmp.ge.f32.partialorder %v2595, 0.0
      %vm2756 = vcmp.ge.f32.partialorder %v2596, 0.0
      %vm2757 = vcmp.ge.f32.partialorder %v2597, 0.0
      %vm2758 = vcmp.ge.f32.partialorder %v2598, 0.0
      %vm2759 = vcmp.ge.f32.partialorder %v2599, 0.0
      %vm2760 = vcmp.ge.f32.partialorder %v2600, 0.0
      %vm2761 = vcmp.ge.f32.partialorder %v2601, 0.0
      %vm2762 = vcmp.ge.f32.partialorder %v2602, 0.0
      %vm2763 = vcmp.ge.f32.partialorder %v2603, 0.0
      %vm2764 = vcmp.ge.f32.partialorder %v2604, 0.0
      %vm2765 = vcmp.ge.f32.partialorder %v2605, 0.0
      %vm2766 = vcmp.ge.f32.partialorder %v2606, 0.0
      %vm2767 = vcmp.ge.f32.partialorder %v2607, 0.0
      %vm2768 = vcmp.ge.f32.partialorder %v2608, 0.0
      %vm2769 = vcmp.ge.f32.partialorder %v2609, 0.0
      %vm2770 = vcmp.ge.f32.partialorder %v2610, 0.0
      %vm2771 = vcmp.ge.f32.partialorder %v2611, 0.0
      %vm2772 = vcmp.ge.f32.partialorder %v2612, 0.0
      %vm2773 = vcmp.ge.f32.partialorder %v2613, 0.0
      %vm2774 = vcmp.ge.f32.partialorder %v2614, 0.0
      %vm2775 = vcmp.ge.f32.partialorder %v2615, 0.0
      %vm2776 = vcmp.ge.f32.partialorder %v2616, 0.0
      %v2777 = vadd.f32 %v2682, 1.0
      %v2778 = vadd.f32 %v2684, 1.0
      %v2779 = vadd.f32 %v2686, 1.0
      %v2780 = vadd.f32 %v2688, 1.0
      %v2781 = vadd.f32 %v2690, 1.0
      %v2782 = vadd.f32 %v2692, 1.0
      %v2783 = vadd.f32 %v2694, 1.0
      %v2784 = vadd.f32 %v2696, 1.0
      %v2785 = vadd.f32 %v2698, 1.0
      %v2786 = vadd.f32 %v2700, 1.0
      %v2787 = vadd.f32 %v2702, 1.0
      %v2788 = vadd.f32 %v2704, 1.0
      %v2789 = vadd.f32 %v2706, 1.0
      %v2790 = vadd.f32 %v2708, 1.0
      %v2791 = vadd.f32 %v2710, 1.0
      %v2792 = vadd.f32 %v2712, 1.0
      %v2793 = vadd.f32 %v2714, 1.0
      %v2794 = vadd.f32 %v2716, 1.0
      %v2795 = vadd.f32 %v2718, 1.0
      %v2796 = vadd.f32 %v2720, 1.0
      %v2797 = vadd.f32 %v2722, 1.0
      %v2798 = vadd.f32 %v2724, 1.0
      %v2799 = vadd.f32 %v2726, 1.0
      %v2800 = vadd.f32 %v2728, 1.0
      %v2801 = vadd.f32 %v2730, 1.0
      %v2802 = vadd.f32 %v2732, 1.0
      %v2803 = vadd.f32 %v2734, 1.0
      %v2804 = vadd.f32 %v2736, 1.0
      %v2805 = vadd.f32 %v2738, 1.0
      %v2806 = vadd.f32 %v2740, 1.0
      %v2807 = vadd.f32 %v2742, 1.0
      %v2808 = vadd.f32 %v2744, 1.0
      %v2809 = vrcp.pop %v2777
      %v2810 = vmul.f32 1.0, %v2809
      %v2811 = vrcp.pop %v2778
      %v2812 = vmul.f32 1.0, %v2811
      %v2813 = vrcp.pop %v2779
      %v2814 = vmul.f32 1.0, %v2813
      %v2815 = vrcp.pop %v2780
      %v2816 = vmul.f32 1.0, %v2815
      %v2817 = vrcp.pop %v2781
      %v2818 = vmul.f32 1.0, %v2817
      %v2819 = vrcp.pop %v2782
      %v2820 = vmul.f32 1.0, %v2819
      %v2821 = vrcp.pop %v2783
      %v2822 = vmul.f32 1.0, %v2821
      %v2823 = vrcp.pop %v2784
      %v2824 = vmul.f32 1.0, %v2823
      %v2825 = vrcp.pop %v2785
      %v2826 = vmul.f32 1.0, %v2825
      %v2827 = vrcp.pop %v2786
      %v2828 = vmul.f32 1.0, %v2827
      %v2829 = vrcp.pop %v2787
      %v2830 = vmul.f32 1.0, %v2829
      %v2831 = vrcp.pop %v2788
      %v2832 = vmul.f32 1.0, %v2831
      %v2833 = vrcp.pop %v2789
      %v2834 = vmul.f32 1.0, %v2833
      %v2835 = vrcp.pop %v2790
      %v2836 = vmul.f32 1.0, %v2835
      %v2837 = vrcp.pop %v2791
      %v2838 = vmul.f32 1.0, %v2837
      %v2839 = vrcp.pop %v2792
      %v2840 = vmul.f32 1.0, %v2839
      %v2841 = vrcp.pop %v2793
      %v2842 = vmul.f32 1.0, %v2841
      %v2843 = vrcp.pop %v2794
      %v2844 = vmul.f32 1.0, %v2843
      %v2845 = vrcp.pop %v2795
      %v2846 = vmul.f32 1.0, %v2845
      %v2847 = vrcp.pop %v2796
      %v2848 = vmul.f32 1.0, %v2847
      %v2849 = vrcp.pop %v2797
      %v2850 = vmul.f32 1.0, %v2849
      %v2851 = vrcp.pop %v2798
      %v2852 = vmul.f32 1.0, %v2851
      %v2853 = vrcp.pop %v2799
      %v2854 = vmul.f32 1.0, %v2853
      %v2855 = vrcp.pop %v2800
      %v2856 = vmul.f32 1.0, %v2855
      %v2857 = vrcp.pop %v2801
      %v2858 = vmul.f32 1.0, %v2857
      %v2859 = vrcp.pop %v2802
      %v2860 = vmul.f32 1.0, %v2859
      %v2861 = vrcp.pop %v2803
      %v2862 = vmul.f32 1.0, %v2861
      %v2863 = vrcp.pop %v2804
      %v2864 = vmul.f32 1.0, %v2863
      %v2865 = vrcp.pop %v2805
      %v2866 = vmul.f32 1.0, %v2865
      %v2867 = vrcp.pop %v2806
      %v2868 = vmul.f32 1.0, %v2867
      %v2869 = vrcp.pop %v2807
      %v2870 = vmul.f32 1.0, %v2869
      %v2871 = vrcp.pop %v2808
      %v2872 = vmul.f32 1.0, %v2871
      %v2873 = vmul.f32 %v2682, %v2809
      %v2874 = vmul.f32 %v2684, %v2811
      %v2875 = vmul.f32 %v2686, %v2813
      %v2876 = vmul.f32 %v2688, %v2815
      %v2877 = vmul.f32 %v2690, %v2817
      %v2878 = vmul.f32 %v2692, %v2819
      %v2879 = vmul.f32 %v2694, %v2821
      %v2880 = vmul.f32 %v2696, %v2823
      %v2881 = vmul.f32 %v2698, %v2825
      %v2882 = vmul.f32 %v2700, %v2827
      %v2883 = vmul.f32 %v2702, %v2829
      %v2884 = vmul.f32 %v2704, %v2831
      %v2885 = vmul.f32 %v2706, %v2833
      %v2886 = vmul.f32 %v2708, %v2835
      %v2887 = vmul.f32 %v2710, %v2837
      %v2888 = vmul.f32 %v2712, %v2839
      %v2889 = vmul.f32 %v2714, %v2841
      %v2890 = vmul.f32 %v2716, %v2843
      %v2891 = vmul.f32 %v2718, %v2845
      %v2892 = vmul.f32 %v2720, %v2847
      %v2893 = vmul.f32 %v2722, %v2849
      %v2894 = vmul.f32 %v2724, %v2851
      %v2895 = vmul.f32 %v2726, %v2853
      %v2896 = vmul.f32 %v2728, %v2855
      %v2897 = vmul.f32 %v2730, %v2857
      %v2898 = vmul.f32 %v2732, %v2859
      %v2899 = vmul.f32 %v2734, %v2861
      %v2900 = vmul.f32 %v2736, %v2863
      %v2901 = vmul.f32 %v2738, %v2865
      %v2902 = vmul.f32 %v2740, %v2867
      %v2903 = vmul.f32 %v2742, %v2869
      %v2904 = vmul.f32 %v2744, %v2871
      %v2905 = vsel %vm2745, %v2810, %v2873
      %v2906 = vsel %vm2746, %v2812, %v2874
      %v2907 = vsel %vm2747, %v2814, %v2875
      %v2908 = vsel %vm2748, %v2816, %v2876
      %v2909 = vsel %vm2749, %v2818, %v2877
      %v2910 = vsel %vm2750, %v2820, %v2878
      %v2911 = vsel %vm2751, %v2822, %v2879
      %v2912 = vsel %vm2752, %v2824, %v2880
      %v2913 = vsel %vm2753, %v2826, %v2881
      %v2914 = vsel %vm2754, %v2828, %v2882
      %v2915 = vsel %vm2755, %v2830, %v2883
      %v2916 = vsel %vm2756, %v2832, %v2884
      %v2917 = vsel %vm2757, %v2834, %v2885
      %v2918 = vsel %vm2758, %v2836, %v2886
      %v2919 = vsel %vm2759, %v2838, %v2887
      %v2920 = vsel %vm2760, %v2840, %v2888
      %v2921 = vsel %vm2761, %v2842, %v2889
      %v2922 = vsel %vm2762, %v2844, %v2890
      %v2923 = vsel %vm2763, %v2846, %v2891
      %v2924 = vsel %vm2764, %v2848, %v2892
      %v2925 = vsel %vm2765, %v2850, %v2893
      %v2926 = vsel %vm2766, %v2852, %v2894
      %v2927 = vsel %vm2767, %v2854, %v2895
      %v2928 = vsel %vm2768, %v2856, %v2896
      %v2929 = vsel %vm2769, %v2858, %v2897
      %v2930 = vsel %vm2770, %v2860, %v2898
      %v2931 = vsel %vm2771, %v2862, %v2899
      %v2932 = vsel %vm2772, %v2864, %v2900
      %v2933 = vsel %vm2773, %v2866, %v2901
      %v2934 = vsel %vm2774, %v2868, %v2902
      %v2935 = vsel %vm2775, %v2870, %v2903
      %v2936 = vsel %vm2776, %v2872, %v2904
      %vm2937 = vcmask 7168
      %2938 = vst.msk [vmem:[%s339] sm:$0xff] %vm2937, %v2905
      %2939 = vst.msk [vmem:[%s339 + $0x8] sm:$0xff] %vm2937, %v2906
      %2940 = vst.msk [vmem:[%s339 + $0x10] sm:$0xff] %vm2937, %v2907
      %2941 = vst.msk [vmem:[%s339 + $0x18] sm:$0xff] %vm2937, %v2908
      %2942 = vst.msk [vmem:[%s339 + $0x20] sm:$0xff] %vm2937, %v2909
      %2943 = vst.msk [vmem:[%s339 + $0x28] sm:$0xff] %vm2937, %v2910
      %2944 = vst.msk [vmem:[%s339 + $0x30] sm:$0xff] %vm2937, %v2911
      %2945 = vst.msk [vmem:[%s339 + $0x38] sm:$0xff] %vm2937, %v2912
      %2946 = vst.msk [vmem:[%s339 + $0x40] sm:$0xff] %vm2937, %v2913
      %2947 = vst.msk [vmem:[%s339 + $0x48] sm:$0xff] %vm2937, %v2914
      %2948 = vst.msk [vmem:[%s339 + $0x50] sm:$0xff] %vm2937, %v2915
      %2949 = vst.msk [vmem:[%s339 + $0x58] sm:$0xff] %vm2937, %v2916
      %2950 = vst.msk [vmem:[%s339 + $0x60] sm:$0xff] %vm2937, %v2917
      %2951 = vst.msk [vmem:[%s339 + $0x68] sm:$0xff] %vm2937, %v2918
      %2952 = vst.msk [vmem:[%s339 + $0x70] sm:$0xff] %vm2937, %v2919
      %2953 = vst.msk [vmem:[%s339 + $0x78] sm:$0xff] %vm2937, %v2920
      %2954 = vst.msk [vmem:[%s339 + $0x80] sm:$0xff] %vm2937, %v2921
      %2955 = vst.msk [vmem:[%s339 + $0x88] sm:$0xff] %vm2937, %v2922
      %2956 = vst.msk [vmem:[%s339 + $0x90] sm:$0xff] %vm2937, %v2923
      %2957 = vst.msk [vmem:[%s339 + $0x98] sm:$0xff] %vm2937, %v2924
      %2958 = vst.msk [vmem:[%s339 + $0xa0] sm:$0xff] %vm2937, %v2925
      %2959 = vst.msk [vmem:[%s339 + $0xa8] sm:$0xff] %vm2937, %v2926
      %2960 = vst.msk [vmem:[%s339 + $0xb0] sm:$0xff] %vm2937, %v2927
      %2961 = vst.msk [vmem:[%s339 + $0xb8] sm:$0xff] %vm2937, %v2928
      %2962 = vst.msk [vmem:[%s339 + $0xc0] sm:$0xff] %vm2937, %v2929
      %2963 = vst.msk [vmem:[%s339 + $0xc8] sm:$0xff] %vm2937, %v2930
      %2964 = vst.msk [vmem:[%s339 + $0xd0] sm:$0xff] %vm2937, %v2931
      %2965 = vst.msk [vmem:[%s339 + $0xd8] sm:$0xff] %vm2937, %v2932
      %2966 = vst.msk [vmem:[%s339 + $0xe0] sm:$0xff] %vm2937, %v2933
      %2967 = vst.msk [vmem:[%s339 + $0xe8] sm:$0xff] %vm2937, %v2934
      %2968 = vst.msk [vmem:[%s339 + $0xf0] sm:$0xff] %vm2937, %v2935
      %2969 = vst.msk [vmem:[%s339 + $0xf8] sm:$0xff] %vm2937, %v2936
      %s2970 = smul.u32 32, %s22
      %p2971 = scmp.lt.s32.totalorder %s2970, 63
      %s2972 = scalar_select %p2971, %s2970, 63
      %s2973 = smul.addr %s2972, 8
      %s2974 = scalar_lea.vmem %s9, %s2973
      // Predicated region
      $region57: #{net2_forward_batched.1} parent=55 // pred_check
        %p2975 = pneg %p234
      $region58: #{net2_forward_batched.1} parent=55 // pred_check_branch
        %2977 = sbr.rel (%p2975) target = $region60
      $region59: #{net2_forward_batched.1} parent=55 // pred_region
        %s2978 = smul.u32 32, %s22
      $region60: #{net2_forward_batched.1} parent=55 // pred_fallthru
        _
    $region56: #{net2_forward_batched.1} parent=5 // pred_fallthru
      _
    %p2979 = scmp.le.s32.totalorder 2, %s17
    // Predicated region
    $region61: #{net2_forward_batched.1} parent=5 // pred_check
      %p2980 = pneg %p2979
    $region62: #{net2_forward_batched.1} parent=5 // pred_check_branch
      %2982 = sbr.rel (%p2980) target = $region64
    $region63: #{net2_forward_batched.1} parent=5 // pred_region
      %s2983 = ssub.s32 %s17, 2
      // Predicated region
      $region65: #{net2_forward_batched.1} parent=63 // pred_check
        %p2984 = pneg %p240
      $region66: #{net2_forward_batched.1} parent=63 // pred_check_branch
        %2986 = sbr.rel (%p2984) target = $region68
      $region67: #{net2_forward_batched.1} parent=63 // pred_region
        %s2987 = smul.u32 32, %s23
        %p2988 = scmp.lt.s32.totalorder %s2987, 63
        %s2989 = scalar_select %p2988, %s2987, 63
        %s2990 = smul.addr %s2989, 8
        %s2991 = scalar_lea.vmem %s9, %s2990
      $region68: #{net2_forward_batched.1} parent=63 // pred_fallthru
        _
    $region64: #{net2_forward_batched.1} parent=5 // pred_fallthru
      _
  $region6: #{net2_forward_batched.1} parent=0 // loop_footer
    %s21 = sadd.s32 1, %s17
  $region7: #{net2_forward_batched.1} parent=0 // loop_footer_branch
    %16 = sbr.rel target = $region3
  $region8: #{net2_forward_batched.1} parent=0 // loop_exit
    _

</llo_original>
